<compile_context>
chip_gen: v7x
topology: tpu7x:2x2x1
jax: 0.10.0
libtpu: 0.0.40
codegen_flags: <defaults>
</compile_context>

<pallas_src>
import jax
import jax.numpy as jnp
from jax.experimental import pallas as pl
from jax.experimental.pallas import tpu as pltpu

FEATURE_COUNT = 27


# ----------------------------------------------------------------------------
# Pallas kernel: full forward pass (LSTM recurrence + attention + heads)
# ----------------------------------------------------------------------------
def _make_kernel(T, B, H):
    H4 = 4 * H

    def kernel(x_ref,
               wx0_ref, wh0_ref, b0_ref,
               wx1_ref, wh1_ref, b1_ref,
               aw1_ref, ab1_ref, aw2_ref, ab2_ref,
               f1w_ref, f1b_ref, f2w_ref, f2b_ref,
               fvw_ref, fvb_ref,
               ow1_ref, ob1_ref, ow2_ref, ob2_ref,
               out_ref,
               seq_ref):
        # ---- hoisted layer-0 input projection: one big matmul, bias folded ----
        xg0 = (jnp.dot(x_ref[...], wx0_ref[...],
                       preferred_element_type=jnp.float32) + b0_ref[...])   # (T*B, 4H)

        # Hoist loop-invariant weight loads out of the recurrence.
        wh0 = wh0_ref[...]
        wx1 = wx1_ref[...]
        wh1 = wh1_ref[...]
        b1 = b1_ref[...]

        def activate(g_all, c):
            # Fused gates, order (i, f, o, g): sigmoid on one contiguous 3H slab,
            # tanh on the trailing H slab.
            sig = jax.nn.sigmoid(g_all[:, :3 * H])
            i = sig[:, :H]
            f = sig[:, H:2 * H]
            o = sig[:, 2 * H:3 * H]
            g_ = jnp.tanh(g_all[:, 3 * H:])
            c_new = f * c + i * g_
            h_new = o * jnp.tanh(c_new)
            return h_new, c_new

        h0 = jnp.zeros((B, H), jnp.float32)
        c0 = jnp.zeros((B, H), jnp.float32)
        h1 = jnp.zeros((B, H), jnp.float32)
        c1 = jnp.zeros((B, H), jnp.float32)

        # T is static and small: fully unrolled Python loop -> every index is
        # static; only the recurrent matmuls remain on the serial critical path.
        for t in range(T):
            g0 = xg0[t * B:(t + 1) * B, :] + jnp.dot(
                h0, wh0, preferred_element_type=jnp.float32)
            h0, c0 = activate(g0, c0)
            # inter-layer dropout is identity in eval mode
            g1 = (jnp.dot(h0, wx1, preferred_element_type=jnp.float32)
                  + jnp.dot(h1, wh1, preferred_element_type=jnp.float32)
                  + b1)
            h1, c1 = activate(g1, c1)
            seq_ref[pl.ds(t * B, B), :] = h1                 # top-layer output

        # ---- attention scores, hoisted out of the loop as one matmul ----
        seq_all = seq_ref[...]                               # (T*B, H)
        a_h = jnp.tanh(
            jnp.dot(seq_all, aw1_ref[...], preferred_element_type=jnp.float32)
            + ab1_ref[...])
        scores = (jnp.dot(a_h, aw2_ref[...], preferred_element_type=jnp.float32)
                  + ab2_ref[...])                            # (T*B, 1)

        # per-batch softmax over time + weighted sum, via static stride-B slices
        s_t = [scores[t * B:(t + 1) * B, :] for t in range(T)]   # T x (B, 1)
        m = s_t[0]
        for t in range(1, T):
            m = jnp.maximum(m, s_t[t])
        e_t = [jnp.exp(s - m) for s in s_t]
        denom = e_t[0]
        for t in range(1, T):
            denom = denom + e_t[t]
        inv = pl.reciprocal(denom, approx=True)              # (B, 1), EUP slot

        ctx = e_t[0] * seq_all[0:B, :]
        for t in range(1, T):
            ctx = ctx + e_t[t] * seq_all[t * B:(t + 1) * B, :]
        context = ctx * inv                                   # (B, H)
        # dropout(context) is identity in eval mode

        # base_pred = fc2(relu(fc1(context)))
        h_fc = jnp.maximum(
            jnp.dot(context, f1w_ref[...], preferred_element_type=jnp.float32)
            + f1b_ref[...], 0.0)
        base_pred = (jnp.dot(h_fc, f2w_ref[...],
                             preferred_element_type=jnp.float32)
                     + f2b_ref[...])                          # (B, 1)

        # pred_variance = exp(fc_variance(context))
        pred_var = jnp.exp(
            jnp.dot(context, fvw_ref[...], preferred_element_type=jnp.float32)
            + fvb_ref[...])                                   # (B, 1)

        # output_transform: Linear(2,16) -> ReLU -> Linear(16,1).
        # concat([base, var], axis=1) @ W is expanded into two rank-1 broadcast
        # multiplies to avoid a lane-dim concat of 1-wide tiles.
        ow1 = ow1_ref[...]                                    # (2, 16)
        oh = jnp.maximum(base_pred * ow1[0:1, :] + pred_var * ow1[1:2, :]
                         + ob1_ref[...], 0.0)                 # (B, 16)
        out_ref[...] = (jnp.dot(oh, ow2_ref[...],
                                preferred_element_type=jnp.float32)
                        + ob2_ref[...])                       # (B, 1)

    return kernel


# ----------------------------------------------------------------------------
# Wrapper: parameter re-layout + pallas_call
# ----------------------------------------------------------------------------
def lstm_model_forward(x, params):
    B, T, D = x.shape
    H = params["lstm.weight_hh_l0"].shape[1]
    # PyTorch gate order (i, f, g, o) -> kernel order (i, f, o, g)
    perm = jnp.array([0, 1, 3, 2])

    def fuse_lstm_weights(w_ih, w_hh, b_ih, b_hh, in_dim):
        # (4H, in) -> (in, 4H) fused-gate layout, gates reordered.
        wx = (w_ih.reshape(4, H, in_dim)[perm]
              .transpose(2, 0, 1).reshape(in_dim, 4 * H))
        wh = (w_hh.reshape(4, H, H)[perm]
              .transpose(2, 0, 1).reshape(H, 4 * H))
        b = (b_ih + b_hh).reshape(4, H)[perm].reshape(1, 4 * H)
        return wx, wh, b

    wx0, wh0, b0 = fuse_lstm_weights(params["lstm.weight_ih_l0"],
                                     params["lstm.weight_hh_l0"],
                                     params["lstm.bias_ih_l0"],
                                     params["lstm.bias_hh_l0"], D)
    wx1, wh1, b1 = fuse_lstm_weights(params["lstm.weight_ih_l1"],
                                     params["lstm.weight_hh_l1"],
                                     params["lstm.bias_ih_l1"],
                                     params["lstm.bias_hh_l1"], H)

    aw1 = params["attn0_w"].T
    ab1 = params["attn0_b"].reshape(1, -1)
    aw2 = params["attn2_w"].T
    ab2 = params["attn2_b"].reshape(1, 1)
    f1w = params["fc1_w"].T
    f1b = params["fc1_b"].reshape(1, -1)
    f2w = params["fc2_w"].T
    f2b = params["fc2_b"].reshape(1, 1)
    fvw = params["fc_variance_w"].T
    fvb = params["fc_variance_b"].reshape(1, 1)
    ow1 = params["out0_w"].T
    ob1 = params["out0_b"].reshape(1, -1)
    ow2 = params["out2_w"].T
    ob2 = params["out2_b"].reshape(1, 1)

    # time-major + flattened: row t*B + b  <->  (t, b).  Done in XLA (cheap).
    x_flat = jnp.transpose(x, (1, 0, 2)).reshape(T * B, D).astype(jnp.float32)

    # TODO(synk): for large B on v7x, add a batch grid (dimension_semantics=
    # ("parallel",)) with weight index_maps returning block 0; at B=2 the call
    # is latency-bound and gridless is optimal.
    n_inputs = 21
    vmem_spec = pl.BlockSpec(memory_space=pltpu.MemorySpace.VMEM)
    return pl.pallas_call(
        _make_kernel(T, B, H),
        out_shape=jax.ShapeDtypeStruct((B, 1), jnp.float32),
        in_specs=[vmem_spec] * n_inputs,
        out_specs=vmem_spec,
        scratch_shapes=[
            pltpu.VMEM((T * B, H), jnp.float32),   # top-layer hidden states
        ],
    )(x_flat, wx0, wh0, b0, wx1, wh1, b1,
      aw1, ab1, aw2, ab2,
      f1w, f1b, f2w, f2b, fvw, fvb,
      ow1, ob1, ow2, ob2)


# ----------------------------------------------------------------------------
# Pure-JAX reference (same math as the PyTorch forward, eval mode)
# ----------------------------------------------------------------------------
def _reference_forward(x, params):
    B, T, _ = x.shape
    H = params["lstm.weight_hh_l0"].shape[1]

    def layer(inp, w_ih, w_hh, b_ih, b_hh):
        h = jnp.zeros((B, H), jnp.float32)
        c = jnp.zeros((B, H), jnp.float32)
        outs = []
        for t in range(T):
            gates = inp[:, t, :] @ w_ih.T + h @ w_hh.T + b_ih + b_hh
            i, f, g, o = jnp.split(gates, 4, axis=1)
            i = jax.nn.sigmoid(i)
            f = jax.nn.sigmoid(f)
            g = jnp.tanh(g)
            o = jax.nn.sigmoid(o)
            c = f * c + i * g
            h = o * jnp.tanh(c)
            outs.append(h)
        return jnp.stack(outs, axis=1)

    out = layer(x, params["lstm.weight_ih_l0"], params["lstm.weight_hh_l0"],
                params["lstm.bias_ih_l0"], params["lstm.bias_hh_l0"])
    out = layer(out, params["lstm.weight_ih_l1"], params["lstm.weight_hh_l1"],
                params["lstm.bias_ih_l1"], params["lstm.bias_hh_l1"])

    attn_h = jnp.tanh(out @ params["attn0_w"].T + params["attn0_b"])
    scores = (attn_h @ params["attn2_w"].T + params["attn2_b"])[..., 0]   # (B, T)
    w = jax.nn.softmax(scores, axis=1)
    context = jnp.einsum("bt,bth->bh", w, out)

    base = (jnp.maximum(context @ params["fc1_w"].T + params["fc1_b"], 0.0)
            @ params["fc2_w"].T + params["fc2_b"])
    var = jnp.exp(context @ params["fc_variance_w"].T + params["fc_variance_b"])
    comb = jnp.concatenate([base, var], axis=1)
    oh = jnp.maximum(comb @ params["out0_w"].T + params["out0_b"], 0.0)
    return oh @ params["out2_w"].T + params["out2_b"]


# ----------------------------------------------------------------------------
# Deterministic parameter init (PyTorch shapes)
# ----------------------------------------------------------------------------
def init_params(key, input_size, hidden_size):
    H, Hh = hidden_size, hidden_size // 2

    def u(k, shape, fan_in):
        bound = 1.0 / (fan_in ** 0.5)
        return jax.random.uniform(k, shape, jnp.float32, -bound, bound)

    keys = iter(jax.random.split(key, 32))
    p = {}
    # LSTM layer 0 and 1
    p["lstm.weight_ih_l0"] = u(next(keys), (4 * H, input_size), H)
    p["lstm.weight_hh_l0"] = u(next(keys), (4 * H, H), H)
    p["lstm.bias_ih_l0"] = u(next(keys), (4 * H,), H)
    p["lstm.bias_hh_l0"] = u(next(keys), (4 * H,), H)
    p["lstm.weight_ih_l1"] = u(next(keys), (4 * H, H), H)
    p["lstm.weight_hh_l1"] = u(next(keys), (4 * H, H), H)
    p["lstm.bias_ih_l1"] = u(next(keys), (4 * H,), H)
    p["lstm.bias_hh_l1"] = u(next(keys), (4 * H,), H)
    # attention MLP
    p["attn0_w"] = u(next(keys), (Hh, H), H)
    p["attn0_b"] = u(next(keys), (Hh,), H)
    p["attn2_w"] = u(next(keys), (1, Hh), Hh)
    p["attn2_b"] = u(next(keys), (1,), Hh)
    # fc_variance, fc1, fc2
    p["fc_variance_w"] = u(next(keys), (1, H), H)
    p["fc_variance_b"] = u(next(keys), (1,), H)
    p["fc1_w"] = u(next(keys), (Hh, H), H)
    p["fc1_b"] = u(next(keys), (Hh,), H)
    p["fc2_w"] = u(next(keys), (1, Hh), Hh)
    p["fc2_b"] = u(next(keys), (1,), Hh)
    # output_transform
    p["out0_w"] = u(next(keys), (16, 2), 2)
    p["out0_b"] = u(next(keys), (16,), 2)
    p["out2_w"] = u(next(keys), (1, 16), 16)
    p["out2_b"] = u(next(keys), (1,), 16)
    return p


if __name__ == "__main__":
    # Small shapes; H=128 keeps every gate slice lane-aligned, H//2 = 64.
    B, T, D, H = 2, 8, FEATURE_COUNT, 128

    root = jax.random.PRNGKey(0)
    k_x, k_p = jax.random.split(root)
    x = jax.random.normal(k_x, (B, T, D), jnp.float32)
    params = init_params(k_p, D, H)

    out = lstm_model_forward(x, params)
    out = jax.block_until_ready(out)

    ref = _reference_forward(x, params)
    assert out.shape == (B, 1), out.shape
    if not jnp.allclose(out, ref, rtol=1e-2, atol=2e-3):
        raise AssertionError(f"mismatch: kernel={out} ref={ref}")

    print("KERNEL_OK")
</pallas_src>

<mosaic_0001>
module attributes {stable_mosaic.version = 11 : i64} {
  func.func @kernel(%arg0: memref<16x27xf32, #tpu.memory_space<vmem>>, %arg1: memref<27x512xf32, #tpu.memory_space<vmem>>, %arg2: memref<128x512xf32, #tpu.memory_space<vmem>>, %arg3: memref<1x512xf32, #tpu.memory_space<vmem>>, %arg4: memref<128x512xf32, #tpu.memory_space<vmem>>, %arg5: memref<128x512xf32, #tpu.memory_space<vmem>>, %arg6: memref<1x512xf32, #tpu.memory_space<vmem>>, %arg7: memref<128x64xf32, #tpu.memory_space<vmem>>, %arg8: memref<1x64xf32, #tpu.memory_space<vmem>>, %arg9: memref<64x1xf32, #tpu.memory_space<vmem>>, %arg10: memref<1x1xf32, #tpu.memory_space<vmem>>, %arg11: memref<128x64xf32, #tpu.memory_space<vmem>>, %arg12: memref<1x64xf32, #tpu.memory_space<vmem>>, %arg13: memref<64x1xf32, #tpu.memory_space<vmem>>, %arg14: memref<1x1xf32, #tpu.memory_space<vmem>>, %arg15: memref<128x1xf32, #tpu.memory_space<vmem>>, %arg16: memref<1x1xf32, #tpu.memory_space<vmem>>, %arg17: memref<2x16xf32, #tpu.memory_space<vmem>>, %arg18: memref<1x16xf32, #tpu.memory_space<vmem>>, %arg19: memref<16x1xf32, #tpu.memory_space<vmem>>, %arg20: memref<1x1xf32, #tpu.memory_space<vmem>>, %arg21: memref<2x1xf32, #tpu.memory_space<vmem>>, %arg22: memref<16x128xf32, #tpu.memory_space<vmem>>) attributes {dimension_semantics = [], scalar_prefetch = 0 : i64, scratch_operands = 1 : i64, tpu.core_type = #tpu.core_type<tc>} {
    %c0 = arith.constant 0 : index
    %c0_0 = arith.constant 0 : index
    %0 = vector.load %arg0[%c0, %c0_0] : memref<16x27xf32, #tpu.memory_space<vmem>>, vector<16x27xf32>
    %c0_1 = arith.constant 0 : index
    %c0_2 = arith.constant 0 : index
    %1 = vector.load %arg1[%c0_1, %c0_2] : memref<27x512xf32, #tpu.memory_space<vmem>>, vector<27x512xf32>
    %cst = arith.constant dense<0.000000e+00> : vector<16x512xf32>
    %2 = tpu.matmul %0, %1, %cst {dimension_numbers = #tpu.dot_dimension_numbers<[1], [0], [0], [1], [0, 0, 1, 1], [], []>} : vector<16x27xf32>, vector<27x512xf32>, vector<16x512xf32> -> vector<16x512xf32>
    %c0_3 = arith.constant 0 : index
    %c0_4 = arith.constant 0 : index
    %3 = vector.load %arg3[%c0_3, %c0_4] : memref<1x512xf32, #tpu.memory_space<vmem>>, vector<1x512xf32>
    %4 = vector.broadcast %3 : vector<1x512xf32> to vector<16x512xf32>
    %5 = arith.addf %2, %4 : vector<16x512xf32>
    %c0_5 = arith.constant 0 : index
    %c0_6 = arith.constant 0 : index
    %6 = vector.load %arg2[%c0_5, %c0_6] : memref<128x512xf32, #tpu.memory_space<vmem>>, vector<128x512xf32>
    %c0_7 = arith.constant 0 : index
    %c0_8 = arith.constant 0 : index
    %7 = vector.load %arg4[%c0_7, %c0_8] : memref<128x512xf32, #tpu.memory_space<vmem>>, vector<128x512xf32>
    %c0_9 = arith.constant 0 : index
    %c0_10 = arith.constant 0 : index
    %8 = vector.load %arg5[%c0_9, %c0_10] : memref<128x512xf32, #tpu.memory_space<vmem>>, vector<128x512xf32>
    %c0_11 = arith.constant 0 : index
    %c0_12 = arith.constant 0 : index
    %9 = vector.load %arg6[%c0_11, %c0_12] : memref<1x512xf32, #tpu.memory_space<vmem>>, vector<1x512xf32>
    %cst_13 = arith.constant 0.000000e+00 : f32
    %10 = vector.broadcast %cst_13 : f32 to vector<2x128xf32>
    %cst_14 = arith.constant 0.000000e+00 : f32
    %11 = vector.broadcast %cst_14 : f32 to vector<2x128xf32>
    %cst_15 = arith.constant 0.000000e+00 : f32
    %12 = vector.broadcast %cst_15 : f32 to vector<2x128xf32>
    %cst_16 = arith.constant 0.000000e+00 : f32
    %13 = vector.broadcast %cst_16 : f32 to vector<2x128xf32>
    %14 = vector.extract_strided_slice %5 {offsets = [0, 0], sizes = [2, 512], strides = [1, 1]} : vector<16x512xf32> to vector<2x512xf32>
    %cst_17 = arith.constant dense<0.000000e+00> : vector<2x512xf32>
    %15 = tpu.matmul %10, %6, %cst_17 {dimension_numbers = #tpu.dot_dimension_numbers<[1], [0], [0], [1], [0, 0, 1, 1], [], []>} : vector<2x128xf32>, vector<128x512xf32>, vector<2x512xf32> -> vector<2x512xf32>
    %16 = arith.addf %14, %15 : vector<2x512xf32>
    %17 = vector.extract_strided_slice %16 {offsets = [0, 0], sizes = [2, 384], strides = [1, 1]} : vector<2x512xf32> to vector<2x384xf32>
    %18 = arith.negf %17 : vector<2x384xf32>
    %19 = math.exp %18 : vector<2x384xf32>
    %cst_18 = arith.constant 1.000000e+00 : f32
    %20 = vector.broadcast %cst_18 : f32 to vector<2x384xf32>
    %21 = arith.addf %20, %19 : vector<2x384xf32>
    %22 = arith.divf %20, %21 : vector<2x384xf32>
    %23 = vector.extract_strided_slice %22 {offsets = [0, 0], sizes = [2, 128], strides = [1, 1]} : vector<2x384xf32> to vector<2x128xf32>
    %24 = vector.extract_strided_slice %22 {offsets = [0, 128], sizes = [2, 128], strides = [1, 1]} : vector<2x384xf32> to vector<2x128xf32>
    %25 = vector.extract_strided_slice %22 {offsets = [0, 256], sizes = [2, 128], strides = [1, 1]} : vector<2x384xf32> to vector<2x128xf32>
    %26 = vector.extract_strided_slice %16 {offsets = [0, 384], sizes = [2, 128], strides = [1, 1]} : vector<2x512xf32> to vector<2x128xf32>
    %27 = math.tanh %26 : vector<2x128xf32>
    %28 = arith.mulf %24, %11 : vector<2x128xf32>
    %29 = arith.mulf %23, %27 : vector<2x128xf32>
    %30 = arith.addf %28, %29 : vector<2x128xf32>
    %31 = math.tanh %30 : vector<2x128xf32>
    %32 = arith.mulf %25, %31 : vector<2x128xf32>
    %cst_19 = arith.constant dense<0.000000e+00> : vector<2x512xf32>
    %33 = tpu.matmul %32, %7, %cst_19 {dimension_numbers = #tpu.dot_dimension_numbers<[1], [0], [0], [1], [0, 0, 1, 1], [], []>} : vector<2x128xf32>, vector<128x512xf32>, vector<2x512xf32> -> vector<2x512xf32>
    %cst_20 = arith.constant dense<0.000000e+00> : vector<2x512xf32>
    %34 = tpu.matmul %12, %8, %cst_20 {dimension_numbers = #tpu.dot_dimension_numbers<[1], [0], [0], [1], [0, 0, 1, 1], [], []>} : vector<2x128xf32>, vector<128x512xf32>, vector<2x512xf32> -> vector<2x512xf32>
    %35 = arith.addf %33, %34 : vector<2x512xf32>
    %36 = vector.broadcast %9 : vector<1x512xf32> to vector<2x512xf32>
    %37 = arith.addf %35, %36 : vector<2x512xf32>
    %38 = vector.extract_strided_slice %37 {offsets = [0, 0], sizes = [2, 384], strides = [1, 1]} : vector<2x512xf32> to vector<2x384xf32>
    %39 = arith.negf %38 : vector<2x384xf32>
    %40 = math.exp %39 : vector<2x384xf32>
    %cst_21 = arith.constant 1.000000e+00 : f32
    %41 = vector.broadcast %cst_21 : f32 to vector<2x384xf32>
    %42 = arith.addf %41, %40 : vector<2x384xf32>
    %43 = arith.divf %41, %42 : vector<2x384xf32>
    %44 = vector.extract_strided_slice %43 {offsets = [0, 0], sizes = [2, 128], strides = [1, 1]} : vector<2x384xf32> to vector<2x128xf32>
    %45 = vector.extract_strided_slice %43 {offsets = [0, 128], sizes = [2, 128], strides = [1, 1]} : vector<2x384xf32> to vector<2x128xf32>
    %46 = vector.extract_strided_slice %43 {offsets = [0, 256], sizes = [2, 128], strides = [1, 1]} : vector<2x384xf32> to vector<2x128xf32>
    %47 = vector.extract_strided_slice %37 {offsets = [0, 384], sizes = [2, 128], strides = [1, 1]} : vector<2x512xf32> to vector<2x128xf32>
    %48 = math.tanh %47 : vector<2x128xf32>
    %49 = arith.mulf %45, %13 : vector<2x128xf32>
    %50 = arith.mulf %44, %48 : vector<2x128xf32>
    %51 = arith.addf %49, %50 : vector<2x128xf32>
    %52 = math.tanh %51 : vector<2x128xf32>
    %53 = arith.mulf %46, %52 : vector<2x128xf32>
    %c0_22 = arith.constant 0 : index
    %c0_23 = arith.constant 0 : index
    %54 = vector.load %arg22[%c0_22, %c0_23] : memref<16x128xf32, #tpu.memory_space<vmem>>, vector<2x128xf32>
    tpu.vector_store %arg22[%c0_22, %c0_23], %53 {strides = array<i32>} : memref<16x128xf32, #tpu.memory_space<vmem>>, vector<2x128xf32>,
    %55 = vector.extract_strided_slice %5 {offsets = [2, 0], sizes = [2, 512], strides = [1, 1]} : vector<16x512xf32> to vector<2x512xf32>
    %cst_24 = arith.constant dense<0.000000e+00> : vector<2x512xf32>
    %56 = tpu.matmul %32, %6, %cst_24 {dimension_numbers = #tpu.dot_dimension_numbers<[1], [0], [0], [1], [0, 0, 1, 1], [], []>} : vector<2x128xf32>, vector<128x512xf32>, vector<2x512xf32> -> vector<2x512xf32>
    %57 = arith.addf %55, %56 : vector<2x512xf32>
    %58 = vector.extract_strided_slice %57 {offsets = [0, 0], sizes = [2, 384], strides = [1, 1]} : vector<2x512xf32> to vector<2x384xf32>
    %59 = arith.negf %58 : vector<2x384xf32>
    %60 = math.exp %59 : vector<2x384xf32>
    %cst_25 = arith.constant 1.000000e+00 : f32
    %61 = vector.broadcast %cst_25 : f32 to vector<2x384xf32>
    %62 = arith.addf %61, %60 : vector<2x384xf32>
    %63 = arith.divf %61, %62 : vector<2x384xf32>
    %64 = vector.extract_strided_slice %63 {offsets = [0, 0], sizes = [2, 128], strides = [1, 1]} : vector<2x384xf32> to vector<2x128xf32>
    %65 = vector.extract_strided_slice %63 {offsets = [0, 128], sizes = [2, 128], strides = [1, 1]} : vector<2x384xf32> to vector<2x128xf32>
    %66 = vector.extract_strided_slice %63 {offsets = [0, 256], sizes = [2, 128], strides = [1, 1]} : vector<2x384xf32> to vector<2x128xf32>
    %67 = vector.extract_strided_slice %57 {offsets = [0, 384], sizes = [2, 128], strides = [1, 1]} : vector<2x512xf32> to vector<2x128xf32>
    %68 = math.tanh %67 : vector<2x128xf32>
    %69 = arith.mulf %65, %30 : vector<2x128xf32>
    %70 = arith.mulf %64, %68 : vector<2x128xf32>
    %71 = arith.addf %69, %70 : vector<2x128xf32>
    %72 = math.tanh %71 : vector<2x128xf32>
    %73 = arith.mulf %66, %72 : vector<2x128xf32>
    %cst_26 = arith.constant dense<0.000000e+00> : vector<2x512xf32>
    %74 = tpu.matmul %73, %7, %cst_26 {dimension_numbers = #tpu.dot_dimension_numbers<[1], [0], [0], [1], [0, 0, 1, 1], [], []>} : vector<2x128xf32>, vector<128x512xf32>, vector<2x512xf32> -> vector<2x512xf32>
    %cst_27 = arith.constant dense<0.000000e+00> : vector<2x512xf32>
    %75 = tpu.matmul %53, %8, %cst_27 {dimension_numbers = #tpu.dot_dimension_numbers<[1], [0], [0], [1], [0, 0, 1, 1], [], []>} : vector<2x128xf32>, vector<128x512xf32>, vector<2x512xf32> -> vector<2x512xf32>
    %76 = arith.addf %74, %75 : vector<2x512xf32>
    %77 = vector.broadcast %9 : vector<1x512xf32> to vector<2x512xf32>
    %78 = arith.addf %76, %77 : vector<2x512xf32>
    %79 = vector.extract_strided_slice %78 {offsets = [0, 0], sizes = [2, 384], strides = [1, 1]} : vector<2x512xf32> to vector<2x384xf32>
    %80 = arith.negf %79 : vector<2x384xf32>
    %81 = math.exp %80 : vector<2x384xf32>
    %cst_28 = arith.constant 1.000000e+00 : f32
    %82 = vector.broadcast %cst_28 : f32 to vector<2x384xf32>
    %83 = arith.addf %82, %81 : vector<2x384xf32>
    %84 = arith.divf %82, %83 : vector<2x384xf32>
    %85 = vector.extract_strided_slice %84 {offsets = [0, 0], sizes = [2, 128], strides = [1, 1]} : vector<2x384xf32> to vector<2x128xf32>
    %86 = vector.extract_strided_slice %84 {offsets = [0, 128], sizes = [2, 128], strides = [1, 1]} : vector<2x384xf32> to vector<2x128xf32>
    %87 = vector.extract_strided_slice %84 {offsets = [0, 256], sizes = [2, 128], strides = [1, 1]} : vector<2x384xf32> to vector<2x128xf32>
    %88 = vector.extract_strided_slice %78 {offsets = [0, 384], sizes = [2, 128], strides = [1, 1]} : vector<2x512xf32> to vector<2x128xf32>
    %89 = math.tanh %88 : vector<2x128xf32>
    %90 = arith.mulf %86, %51 : vector<2x128xf32>
    %91 = arith.mulf %85, %89 : vector<2x128xf32>
    %92 = arith.addf %90, %91 : vector<2x128xf32>
    %93 = math.tanh %92 : vector<2x128xf32>
    %94 = arith.mulf %87, %93 : vector<2x128xf32>
    %c2 = arith.constant 2 : index
    %c0_29 = arith.constant 0 : index
    %95 = vector.load %arg22[%c2, %c0_29] : memref<16x128xf32, #tpu.memory_space<vmem>>, vector<2x128xf32>
    tpu.vector_store %arg22[%c2, %c0_29], %94 {strides = array<i32>} : memref<16x128xf32, #tpu.memory_space<vmem>>, vector<2x128xf32>,
    %96 = vector.extract_strided_slice %5 {offsets = [4, 0], sizes = [2, 512], strides = [1, 1]} : vector<16x512xf32> to vector<2x512xf32>
    %cst_30 = arith.constant dense<0.000000e+00> : vector<2x512xf32>
    %97 = tpu.matmul %73, %6, %cst_30 {dimension_numbers = #tpu.dot_dimension_numbers<[1], [0], [0], [1], [0, 0, 1, 1], [], []>} : vector<2x128xf32>, vector<128x512xf32>, vector<2x512xf32> -> vector<2x512xf32>
    %98 = arith.addf %96, %97 : vector<2x512xf32>
    %99 = vector.extract_strided_slice %98 {offsets = [0, 0], sizes = [2, 384], strides = [1, 1]} : vector<2x512xf32> to vector<2x384xf32>
    %100 = arith.negf %99 : vector<2x384xf32>
    %101 = math.exp %100 : vector<2x384xf32>
    %cst_31 = arith.constant 1.000000e+00 : f32
    %102 = vector.broadcast %cst_31 : f32 to vector<2x384xf32>
    %103 = arith.addf %102, %101 : vector<2x384xf32>
    %104 = arith.divf %102, %103 : vector<2x384xf32>
    %105 = vector.extract_strided_slice %104 {offsets = [0, 0], sizes = [2, 128], strides = [1, 1]} : vector<2x384xf32> to vector<2x128xf32>
    %106 = vector.extract_strided_slice %104 {offsets = [0, 128], sizes = [2, 128], strides = [1, 1]} : vector<2x384xf32> to vector<2x128xf32>
    %107 = vector.extract_strided_slice %104 {offsets = [0, 256], sizes = [2, 128], strides = [1, 1]} : vector<2x384xf32> to vector<2x128xf32>
    %108 = vector.extract_strided_slice %98 {offsets = [0, 384], sizes = [2, 128], strides = [1, 1]} : vector<2x512xf32> to vector<2x128xf32>
    %109 = math.tanh %108 : vector<2x128xf32>
    %110 = arith.mulf %106, %71 : vector<2x128xf32>
    %111 = arith.mulf %105, %109 : vector<2x128xf32>
    %112 = arith.addf %110, %111 : vector<2x128xf32>
    %113 = math.tanh %112 : vector<2x128xf32>
    %114 = arith.mulf %107, %113 : vector<2x128xf32>
    %cst_32 = arith.constant dense<0.000000e+00> : vector<2x512xf32>
    %115 = tpu.matmul %114, %7, %cst_32 {dimension_numbers = #tpu.dot_dimension_numbers<[1], [0], [0], [1], [0, 0, 1, 1], [], []>} : vector<2x128xf32>, vector<128x512xf32>, vector<2x512xf32> -> vector<2x512xf32>
    %cst_33 = arith.constant dense<0.000000e+00> : vector<2x512xf32>
    %116 = tpu.matmul %94, %8, %cst_33 {dimension_numbers = #tpu.dot_dimension_numbers<[1], [0], [0], [1], [0, 0, 1, 1], [], []>} : vector<2x128xf32>, vector<128x512xf32>, vector<2x512xf32> -> vector<2x512xf32>
    %117 = arith.addf %115, %116 : vector<2x512xf32>
    %118 = vector.broadcast %9 : vector<1x512xf32> to vector<2x512xf32>
    %119 = arith.addf %117, %118 : vector<2x512xf32>
    %120 = vector.extract_strided_slice %119 {offsets = [0, 0], sizes = [2, 384], strides = [1, 1]} : vector<2x512xf32> to vector<2x384xf32>
    %121 = arith.negf %120 : vector<2x384xf32>
    %122 = math.exp %121 : vector<2x384xf32>
    %cst_34 = arith.constant 1.000000e+00 : f32
    %123 = vector.broadcast %cst_34 : f32 to vector<2x384xf32>
    %124 = arith.addf %123, %122 : vector<2x384xf32>
    %125 = arith.divf %123, %124 : vector<2x384xf32>
    %126 = vector.extract_strided_slice %125 {offsets = [0, 0], sizes = [2, 128], strides = [1, 1]} : vector<2x384xf32> to vector<2x128xf32>
    %127 = vector.extract_strided_slice %125 {offsets = [0, 128], sizes = [2, 128], strides = [1, 1]} : vector<2x384xf32> to vector<2x128xf32>
    %128 = vector.extract_strided_slice %125 {offsets = [0, 256], sizes = [2, 128], strides = [1, 1]} : vector<2x384xf32> to vector<2x128xf32>
    %129 = vector.extract_strided_slice %119 {offsets = [0, 384], sizes = [2, 128], strides = [1, 1]} : vector<2x512xf32> to vector<2x128xf32>
    %130 = math.tanh %129 : vector<2x128xf32>
    %131 = arith.mulf %127, %92 : vector<2x128xf32>
    %132 = arith.mulf %126, %130 : vector<2x128xf32>
    %133 = arith.addf %131, %132 : vector<2x128xf32>
    %134 = math.tanh %133 : vector<2x128xf32>
    %135 = arith.mulf %128, %134 : vector<2x128xf32>
    %c4 = arith.constant 4 : index
    %c0_35 = arith.constant 0 : index
    %136 = vector.load %arg22[%c4, %c0_35] : memref<16x128xf32, #tpu.memory_space<vmem>>, vector<2x128xf32>
    tpu.vector_store %arg22[%c4, %c0_35], %135 {strides = array<i32>} : memref<16x128xf32, #tpu.memory_space<vmem>>, vector<2x128xf32>,
    %137 = vector.extract_strided_slice %5 {offsets = [6, 0], sizes = [2, 512], strides = [1, 1]} : vector<16x512xf32> to vector<2x512xf32>
    %cst_36 = arith.constant dense<0.000000e+00> : vector<2x512xf32>
    %138 = tpu.matmul %114, %6, %cst_36 {dimension_numbers = #tpu.dot_dimension_numbers<[1], [0], [0], [1], [0, 0, 1, 1], [], []>} : vector<2x128xf32>, vector<128x512xf32>, vector<2x512xf32> -> vector<2x512xf32>
    %139 = arith.addf %137, %138 : vector<2x512xf32>
    %140 = vector.extract_strided_slice %139 {offsets = [0, 0], sizes = [2, 384], strides = [1, 1]} : vector<2x512xf32> to vector<2x384xf32>
    %141 = arith.negf %140 : vector<2x384xf32>
    %142 = math.exp %141 : vector<2x384xf32>
    %cst_37 = arith.constant 1.000000e+00 : f32
    %143 = vector.broadcast %cst_37 : f32 to vector<2x384xf32>
    %144 = arith.addf %143, %142 : vector<2x384xf32>
    %145 = arith.divf %143, %144 : vector<2x384xf32>
    %146 = vector.extract_strided_slice %145 {offsets = [0, 0], sizes = [2, 128], strides = [1, 1]} : vector<2x384xf32> to vector<2x128xf32>
    %147 = vector.extract_strided_slice %145 {offsets = [0, 128], sizes = [2, 128], strides = [1, 1]} : vector<2x384xf32> to vector<2x128xf32>
    %148 = vector.extract_strided_slice %145 {offsets = [0, 256], sizes = [2, 128], strides = [1, 1]} : vector<2x384xf32> to vector<2x128xf32>
    %149 = vector.extract_strided_slice %139 {offsets = [0, 384], sizes = [2, 128], strides = [1, 1]} : vector<2x512xf32> to vector<2x128xf32>
    %150 = math.tanh %149 : vector<2x128xf32>
    %151 = arith.mulf %147, %112 : vector<2x128xf32>
    %152 = arith.mulf %146, %150 : vector<2x128xf32>
    %153 = arith.addf %151, %152 : vector<2x128xf32>
    %154 = math.tanh %153 : vector<2x128xf32>
    %155 = arith.mulf %148, %154 : vector<2x128xf32>
    %cst_38 = arith.constant dense<0.000000e+00> : vector<2x512xf32>
    %156 = tpu.matmul %155, %7, %cst_38 {dimension_numbers = #tpu.dot_dimension_numbers<[1], [0], [0], [1], [0, 0, 1, 1], [], []>} : vector<2x128xf32>, vector<128x512xf32>, vector<2x512xf32> -> vector<2x512xf32>
    %cst_39 = arith.constant dense<0.000000e+00> : vector<2x512xf32>
    %157 = tpu.matmul %135, %8, %cst_39 {dimension_numbers = #tpu.dot_dimension_numbers<[1], [0], [0], [1], [0, 0, 1, 1], [], []>} : vector<2x128xf32>, vector<128x512xf32>, vector<2x512xf32> -> vector<2x512xf32>
    %158 = arith.addf %156, %157 : vector<2x512xf32>
    %159 = vector.broadcast %9 : vector<1x512xf32> to vector<2x512xf32>
    %160 = arith.addf %158, %159 : vector<2x512xf32>
    %161 = vector.extract_strided_slice %160 {offsets = [0, 0], sizes = [2, 384], strides = [1, 1]} : vector<2x512xf32> to vector<2x384xf32>
    %162 = arith.negf %161 : vector<2x384xf32>
    %163 = math.exp %162 : vector<2x384xf32>
    %cst_40 = arith.constant 1.000000e+00 : f32
    %164 = vector.broadcast %cst_40 : f32 to vector<2x384xf32>
    %165 = arith.addf %164, %163 : vector<2x384xf32>
    %166 = arith.divf %164, %165 : vector<2x384xf32>
    %167 = vector.extract_strided_slice %166 {offsets = [0, 0], sizes = [2, 128], strides = [1, 1]} : vector<2x384xf32> to vector<2x128xf32>
    %168 = vector.extract_strided_slice %166 {offsets = [0, 128], sizes = [2, 128], strides = [1, 1]} : vector<2x384xf32> to vector<2x128xf32>
    %169 = vector.extract_strided_slice %166 {offsets = [0, 256], sizes = [2, 128], strides = [1, 1]} : vector<2x384xf32> to vector<2x128xf32>
    %170 = vector.extract_strided_slice %160 {offsets = [0, 384], sizes = [2, 128], strides = [1, 1]} : vector<2x512xf32> to vector<2x128xf32>
    %171 = math.tanh %170 : vector<2x128xf32>
    %172 = arith.mulf %168, %133 : vector<2x128xf32>
    %173 = arith.mulf %167, %171 : vector<2x128xf32>
    %174 = arith.addf %172, %173 : vector<2x128xf32>
    %175 = math.tanh %174 : vector<2x128xf32>
    %176 = arith.mulf %169, %175 : vector<2x128xf32>
    %c6 = arith.constant 6 : index
    %c0_41 = arith.constant 0 : index
    %177 = vector.load %arg22[%c6, %c0_41] : memref<16x128xf32, #tpu.memory_space<vmem>>, vector<2x128xf32>
    tpu.vector_store %arg22[%c6, %c0_41], %176 {strides = array<i32>} : memref<16x128xf32, #tpu.memory_space<vmem>>, vector<2x128xf32>,
    %178 = vector.extract_strided_slice %5 {offsets = [8, 0], sizes = [2, 512], strides = [1, 1]} : vector<16x512xf32> to vector<2x512xf32>
    %cst_42 = arith.constant dense<0.000000e+00> : vector<2x512xf32>
    %179 = tpu.matmul %155, %6, %cst_42 {dimension_numbers = #tpu.dot_dimension_numbers<[1], [0], [0], [1], [0, 0, 1, 1], [], []>} : vector<2x128xf32>, vector<128x512xf32>, vector<2x512xf32> -> vector<2x512xf32>
    %180 = arith.addf %178, %179 : vector<2x512xf32>
    %181 = vector.extract_strided_slice %180 {offsets = [0, 0], sizes = [2, 384], strides = [1, 1]} : vector<2x512xf32> to vector<2x384xf32>
    %182 = arith.negf %181 : vector<2x384xf32>
    %183 = math.exp %182 : vector<2x384xf32>
    %cst_43 = arith.constant 1.000000e+00 : f32
    %184 = vector.broadcast %cst_43 : f32 to vector<2x384xf32>
    %185 = arith.addf %184, %183 : vector<2x384xf32>
    %186 = arith.divf %184, %185 : vector<2x384xf32>
    %187 = vector.extract_strided_slice %186 {offsets = [0, 0], sizes = [2, 128], strides = [1, 1]} : vector<2x384xf32> to vector<2x128xf32>
    %188 = vector.extract_strided_slice %186 {offsets = [0, 128], sizes = [2, 128], strides = [1, 1]} : vector<2x384xf32> to vector<2x128xf32>
    %189 = vector.extract_strided_slice %186 {offsets = [0, 256], sizes = [2, 128], strides = [1, 1]} : vector<2x384xf32> to vector<2x128xf32>
    %190 = vector.extract_strided_slice %180 {offsets = [0, 384], sizes = [2, 128], strides = [1, 1]} : vector<2x512xf32> to vector<2x128xf32>
    %191 = math.tanh %190 : vector<2x128xf32>
    %192 = arith.mulf %188, %153 : vector<2x128xf32>
    %193 = arith.mulf %187, %191 : vector<2x128xf32>
    %194 = arith.addf %192, %193 : vector<2x128xf32>
    %195 = math.tanh %194 : vector<2x128xf32>
    %196 = arith.mulf %189, %195 : vector<2x128xf32>
    %cst_44 = arith.constant dense<0.000000e+00> : vector<2x512xf32>
    %197 = tpu.matmul %196, %7, %cst_44 {dimension_numbers = #tpu.dot_dimension_numbers<[1], [0], [0], [1], [0, 0, 1, 1], [], []>} : vector<2x128xf32>, vector<128x512xf32>, vector<2x512xf32> -> vector<2x512xf32>
    %cst_45 = arith.constant dense<0.000000e+00> : vector<2x512xf32>
    %198 = tpu.matmul %176, %8, %cst_45 {dimension_numbers = #tpu.dot_dimension_numbers<[1], [0], [0], [1], [0, 0, 1, 1], [], []>} : vector<2x128xf32>, vector<128x512xf32>, vector<2x512xf32> -> vector<2x512xf32>
    %199 = arith.addf %197, %198 : vector<2x512xf32>
    %200 = vector.broadcast %9 : vector<1x512xf32> to vector<2x512xf32>
    %201 = arith.addf %199, %200 : vector<2x512xf32>
    %202 = vector.extract_strided_slice %201 {offsets = [0, 0], sizes = [2, 384], strides = [1, 1]} : vector<2x512xf32> to vector<2x384xf32>
    %203 = arith.negf %202 : vector<2x384xf32>
    %204 = math.exp %203 : vector<2x384xf32>
    %cst_46 = arith.constant 1.000000e+00 : f32
    %205 = vector.broadcast %cst_46 : f32 to vector<2x384xf32>
    %206 = arith.addf %205, %204 : vector<2x384xf32>
    %207 = arith.divf %205, %206 : vector<2x384xf32>
    %208 = vector.extract_strided_slice %207 {offsets = [0, 0], sizes = [2, 128], strides = [1, 1]} : vector<2x384xf32> to vector<2x128xf32>
    %209 = vector.extract_strided_slice %207 {offsets = [0, 128], sizes = [2, 128], strides = [1, 1]} : vector<2x384xf32> to vector<2x128xf32>
    %210 = vector.extract_strided_slice %207 {offsets = [0, 256], sizes = [2, 128], strides = [1, 1]} : vector<2x384xf32> to vector<2x128xf32>
    %211 = vector.extract_strided_slice %201 {offsets = [0, 384], sizes = [2, 128], strides = [1, 1]} : vector<2x512xf32> to vector<2x128xf32>
    %212 = math.tanh %211 : vector<2x128xf32>
    %213 = arith.mulf %209, %174 : vector<2x128xf32>
    %214 = arith.mulf %208, %212 : vector<2x128xf32>
    %215 = arith.addf %213, %214 : vector<2x128xf32>
    %216 = math.tanh %215 : vector<2x128xf32>
    %217 = arith.mulf %210, %216 : vector<2x128xf32>
    %c8 = arith.constant 8 : index
    %c0_47 = arith.constant 0 : index
    %218 = vector.load %arg22[%c8, %c0_47] : memref<16x128xf32, #tpu.memory_space<vmem>>, vector<2x128xf32>
    tpu.vector_store %arg22[%c8, %c0_47], %217 {strides = array<i32>} : memref<16x128xf32, #tpu.memory_space<vmem>>, vector<2x128xf32>,
    %219 = vector.extract_strided_slice %5 {offsets = [10, 0], sizes = [2, 512], strides = [1, 1]} : vector<16x512xf32> to vector<2x512xf32>
    %cst_48 = arith.constant dense<0.000000e+00> : vector<2x512xf32>
    %220 = tpu.matmul %196, %6, %cst_48 {dimension_numbers = #tpu.dot_dimension_numbers<[1], [0], [0], [1], [0, 0, 1, 1], [], []>} : vector<2x128xf32>, vector<128x512xf32>, vector<2x512xf32> -> vector<2x512xf32>
    %221 = arith.addf %219, %220 : vector<2x512xf32>
    %222 = vector.extract_strided_slice %221 {offsets = [0, 0], sizes = [2, 384], strides = [1, 1]} : vector<2x512xf32> to vector<2x384xf32>
    %223 = arith.negf %222 : vector<2x384xf32>
    %224 = math.exp %223 : vector<2x384xf32>
    %cst_49 = arith.constant 1.000000e+00 : f32
    %225 = vector.broadcast %cst_49 : f32 to vector<2x384xf32>
    %226 = arith.addf %225, %224 : vector<2x384xf32>
    %227 = arith.divf %225, %226 : vector<2x384xf32>
    %228 = vector.extract_strided_slice %227 {offsets = [0, 0], sizes = [2, 128], strides = [1, 1]} : vector<2x384xf32> to vector<2x128xf32>
    %229 = vector.extract_strided_slice %227 {offsets = [0, 128], sizes = [2, 128], strides = [1, 1]} : vector<2x384xf32> to vector<2x128xf32>
    %230 = vector.extract_strided_slice %227 {offsets = [0, 256], sizes = [2, 128], strides = [1, 1]} : vector<2x384xf32> to vector<2x128xf32>
    %231 = vector.extract_strided_slice %221 {offsets = [0, 384], sizes = [2, 128], strides = [1, 1]} : vector<2x512xf32> to vector<2x128xf32>
    %232 = math.tanh %231 : vector<2x128xf32>
    %233 = arith.mulf %229, %194 : vector<2x128xf32>
    %234 = arith.mulf %228, %232 : vector<2x128xf32>
    %235 = arith.addf %233, %234 : vector<2x128xf32>
    %236 = math.tanh %235 : vector<2x128xf32>
    %237 = arith.mulf %230, %236 : vector<2x128xf32>
    %cst_50 = arith.constant dense<0.000000e+00> : vector<2x512xf32>
    %238 = tpu.matmul %237, %7, %cst_50 {dimension_numbers = #tpu.dot_dimension_numbers<[1], [0], [0], [1], [0, 0, 1, 1], [], []>} : vector<2x128xf32>, vector<128x512xf32>, vector<2x512xf32> -> vector<2x512xf32>
    %cst_51 = arith.constant dense<0.000000e+00> : vector<2x512xf32>
    %239 = tpu.matmul %217, %8, %cst_51 {dimension_numbers = #tpu.dot_dimension_numbers<[1], [0], [0], [1], [0, 0, 1, 1], [], []>} : vector<2x128xf32>, vector<128x512xf32>, vector<2x512xf32> -> vector<2x512xf32>
    %240 = arith.addf %238, %239 : vector<2x512xf32>
    %241 = vector.broadcast %9 : vector<1x512xf32> to vector<2x512xf32>
    %242 = arith.addf %240, %241 : vector<2x512xf32>
    %243 = vector.extract_strided_slice %242 {offsets = [0, 0], sizes = [2, 384], strides = [1, 1]} : vector<2x512xf32> to vector<2x384xf32>
    %244 = arith.negf %243 : vector<2x384xf32>
    %245 = math.exp %244 : vector<2x384xf32>
    %cst_52 = arith.constant 1.000000e+00 : f32
    %246 = vector.broadcast %cst_52 : f32 to vector<2x384xf32>
    %247 = arith.addf %246, %245 : vector<2x384xf32>
    %248 = arith.divf %246, %247 : vector<2x384xf32>
    %249 = vector.extract_strided_slice %248 {offsets = [0, 0], sizes = [2, 128], strides = [1, 1]} : vector<2x384xf32> to vector<2x128xf32>
    %250 = vector.extract_strided_slice %248 {offsets = [0, 128], sizes = [2, 128], strides = [1, 1]} : vector<2x384xf32> to vector<2x128xf32>
    %251 = vector.extract_strided_slice %248 {offsets = [0, 256], sizes = [2, 128], strides = [1, 1]} : vector<2x384xf32> to vector<2x128xf32>
    %252 = vector.extract_strided_slice %242 {offsets = [0, 384], sizes = [2, 128], strides = [1, 1]} : vector<2x512xf32> to vector<2x128xf32>
    %253 = math.tanh %252 : vector<2x128xf32>
    %254 = arith.mulf %250, %215 : vector<2x128xf32>
    %255 = arith.mulf %249, %253 : vector<2x128xf32>
    %256 = arith.addf %254, %255 : vector<2x128xf32>
    %257 = math.tanh %256 : vector<2x128xf32>
    %258 = arith.mulf %251, %257 : vector<2x128xf32>
    %c10 = arith.constant 10 : index
    %c0_53 = arith.constant 0 : index
    %259 = vector.load %arg22[%c10, %c0_53] : memref<16x128xf32, #tpu.memory_space<vmem>>, vector<2x128xf32>
    tpu.vector_store %arg22[%c10, %c0_53], %258 {strides = array<i32>} : memref<16x128xf32, #tpu.memory_space<vmem>>, vector<2x128xf32>,
    %260 = vector.extract_strided_slice %5 {offsets = [12, 0], sizes = [2, 512], strides = [1, 1]} : vector<16x512xf32> to vector<2x512xf32>
    %cst_54 = arith.constant dense<0.000000e+00> : vector<2x512xf32>
    %261 = tpu.matmul %237, %6, %cst_54 {dimension_numbers = #tpu.dot_dimension_numbers<[1], [0], [0], [1], [0, 0, 1, 1], [], []>} : vector<2x128xf32>, vector<128x512xf32>, vector<2x512xf32> -> vector<2x512xf32>
    %262 = arith.addf %260, %261 : vector<2x512xf32>
    %263 = vector.extract_strided_slice %262 {offsets = [0, 0], sizes = [2, 384], strides = [1, 1]} : vector<2x512xf32> to vector<2x384xf32>
    %264 = arith.negf %263 : vector<2x384xf32>
    %265 = math.exp %264 : vector<2x384xf32>
    %cst_55 = arith.constant 1.000000e+00 : f32
    %266 = vector.broadcast %cst_55 : f32 to vector<2x384xf32>
    %267 = arith.addf %266, %265 : vector<2x384xf32>
    %268 = arith.divf %266, %267 : vector<2x384xf32>
    %269 = vector.extract_strided_slice %268 {offsets = [0, 0], sizes = [2, 128], strides = [1, 1]} : vector<2x384xf32> to vector<2x128xf32>
    %270 = vector.extract_strided_slice %268 {offsets = [0, 128], sizes = [2, 128], strides = [1, 1]} : vector<2x384xf32> to vector<2x128xf32>
    %271 = vector.extract_strided_slice %268 {offsets = [0, 256], sizes = [2, 128], strides = [1, 1]} : vector<2x384xf32> to vector<2x128xf32>
    %272 = vector.extract_strided_slice %262 {offsets = [0, 384], sizes = [2, 128], strides = [1, 1]} : vector<2x512xf32> to vector<2x128xf32>
    %273 = math.tanh %272 : vector<2x128xf32>
    %274 = arith.mulf %270, %235 : vector<2x128xf32>
    %275 = arith.mulf %269, %273 : vector<2x128xf32>
    %276 = arith.addf %274, %275 : vector<2x128xf32>
    %277 = math.tanh %276 : vector<2x128xf32>
    %278 = arith.mulf %271, %277 : vector<2x128xf32>
    %cst_56 = arith.constant dense<0.000000e+00> : vector<2x512xf32>
    %279 = tpu.matmul %278, %7, %cst_56 {dimension_numbers = #tpu.dot_dimension_numbers<[1], [0], [0], [1], [0, 0, 1, 1], [], []>} : vector<2x128xf32>, vector<128x512xf32>, vector<2x512xf32> -> vector<2x512xf32>
    %cst_57 = arith.constant dense<0.000000e+00> : vector<2x512xf32>
    %280 = tpu.matmul %258, %8, %cst_57 {dimension_numbers = #tpu.dot_dimension_numbers<[1], [0], [0], [1], [0, 0, 1, 1], [], []>} : vector<2x128xf32>, vector<128x512xf32>, vector<2x512xf32> -> vector<2x512xf32>
    %281 = arith.addf %279, %280 : vector<2x512xf32>
    %282 = vector.broadcast %9 : vector<1x512xf32> to vector<2x512xf32>
    %283 = arith.addf %281, %282 : vector<2x512xf32>
    %284 = vector.extract_strided_slice %283 {offsets = [0, 0], sizes = [2, 384], strides = [1, 1]} : vector<2x512xf32> to vector<2x384xf32>
    %285 = arith.negf %284 : vector<2x384xf32>
    %286 = math.exp %285 : vector<2x384xf32>
    %cst_58 = arith.constant 1.000000e+00 : f32
    %287 = vector.broadcast %cst_58 : f32 to vector<2x384xf32>
    %288 = arith.addf %287, %286 : vector<2x384xf32>
    %289 = arith.divf %287, %288 : vector<2x384xf32>
    %290 = vector.extract_strided_slice %289 {offsets = [0, 0], sizes = [2, 128], strides = [1, 1]} : vector<2x384xf32> to vector<2x128xf32>
    %291 = vector.extract_strided_slice %289 {offsets = [0, 128], sizes = [2, 128], strides = [1, 1]} : vector<2x384xf32> to vector<2x128xf32>
    %292 = vector.extract_strided_slice %289 {offsets = [0, 256], sizes = [2, 128], strides = [1, 1]} : vector<2x384xf32> to vector<2x128xf32>
    %293 = vector.extract_strided_slice %283 {offsets = [0, 384], sizes = [2, 128], strides = [1, 1]} : vector<2x512xf32> to vector<2x128xf32>
    %294 = math.tanh %293 : vector<2x128xf32>
    %295 = arith.mulf %291, %256 : vector<2x128xf32>
    %296 = arith.mulf %290, %294 : vector<2x128xf32>
    %297 = arith.addf %295, %296 : vector<2x128xf32>
    %298 = math.tanh %297 : vector<2x128xf32>
    %299 = arith.mulf %292, %298 : vector<2x128xf32>
    %c12 = arith.constant 12 : index
    %c0_59 = arith.constant 0 : index
    %300 = vector.load %arg22[%c12, %c0_59] : memref<16x128xf32, #tpu.memory_space<vmem>>, vector<2x128xf32>
    tpu.vector_store %arg22[%c12, %c0_59], %299 {strides = array<i32>} : memref<16x128xf32, #tpu.memory_space<vmem>>, vector<2x128xf32>,
    %301 = vector.extract_strided_slice %5 {offsets = [14, 0], sizes = [2, 512], strides = [1, 1]} : vector<16x512xf32> to vector<2x512xf32>
    %cst_60 = arith.constant dense<0.000000e+00> : vector<2x512xf32>
    %302 = tpu.matmul %278, %6, %cst_60 {dimension_numbers = #tpu.dot_dimension_numbers<[1], [0], [0], [1], [0, 0, 1, 1], [], []>} : vector<2x128xf32>, vector<128x512xf32>, vector<2x512xf32> -> vector<2x512xf32>
    %303 = arith.addf %301, %302 : vector<2x512xf32>
    %304 = vector.extract_strided_slice %303 {offsets = [0, 0], sizes = [2, 384], strides = [1, 1]} : vector<2x512xf32> to vector<2x384xf32>
    %305 = arith.negf %304 : vector<2x384xf32>
    %306 = math.exp %305 : vector<2x384xf32>
    %cst_61 = arith.constant 1.000000e+00 : f32
    %307 = vector.broadcast %cst_61 : f32 to vector<2x384xf32>
    %308 = arith.addf %307, %306 : vector<2x384xf32>
    %309 = arith.divf %307, %308 : vector<2x384xf32>
    %310 = vector.extract_strided_slice %309 {offsets = [0, 0], sizes = [2, 128], strides = [1, 1]} : vector<2x384xf32> to vector<2x128xf32>
    %311 = vector.extract_strided_slice %309 {offsets = [0, 128], sizes = [2, 128], strides = [1, 1]} : vector<2x384xf32> to vector<2x128xf32>
    %312 = vector.extract_strided_slice %309 {offsets = [0, 256], sizes = [2, 128], strides = [1, 1]} : vector<2x384xf32> to vector<2x128xf32>
    %313 = vector.extract_strided_slice %303 {offsets = [0, 384], sizes = [2, 128], strides = [1, 1]} : vector<2x512xf32> to vector<2x128xf32>
    %314 = math.tanh %313 : vector<2x128xf32>
    %315 = arith.mulf %311, %276 : vector<2x128xf32>
    %316 = arith.mulf %310, %314 : vector<2x128xf32>
    %317 = arith.addf %315, %316 : vector<2x128xf32>
    %318 = math.tanh %317 : vector<2x128xf32>
    %319 = arith.mulf %312, %318 : vector<2x128xf32>
    %cst_62 = arith.constant dense<0.000000e+00> : vector<2x512xf32>
    %320 = tpu.matmul %319, %7, %cst_62 {dimension_numbers = #tpu.dot_dimension_numbers<[1], [0], [0], [1], [0, 0, 1, 1], [], []>} : vector<2x128xf32>, vector<128x512xf32>, vector<2x512xf32> -> vector<2x512xf32>
    %cst_63 = arith.constant dense<0.000000e+00> : vector<2x512xf32>
    %321 = tpu.matmul %299, %8, %cst_63 {dimension_numbers = #tpu.dot_dimension_numbers<[1], [0], [0], [1], [0, 0, 1, 1], [], []>} : vector<2x128xf32>, vector<128x512xf32>, vector<2x512xf32> -> vector<2x512xf32>
    %322 = arith.addf %320, %321 : vector<2x512xf32>
    %323 = vector.broadcast %9 : vector<1x512xf32> to vector<2x512xf32>
    %324 = arith.addf %322, %323 : vector<2x512xf32>
    %325 = vector.extract_strided_slice %324 {offsets = [0, 0], sizes = [2, 384], strides = [1, 1]} : vector<2x512xf32> to vector<2x384xf32>
    %326 = arith.negf %325 : vector<2x384xf32>
    %327 = math.exp %326 : vector<2x384xf32>
    %cst_64 = arith.constant 1.000000e+00 : f32
    %328 = vector.broadcast %cst_64 : f32 to vector<2x384xf32>
    %329 = arith.addf %328, %327 : vector<2x384xf32>
    %330 = arith.divf %328, %329 : vector<2x384xf32>
    %331 = vector.extract_strided_slice %330 {offsets = [0, 0], sizes = [2, 128], strides = [1, 1]} : vector<2x384xf32> to vector<2x128xf32>
    %332 = vector.extract_strided_slice %330 {offsets = [0, 128], sizes = [2, 128], strides = [1, 1]} : vector<2x384xf32> to vector<2x128xf32>
    %333 = vector.extract_strided_slice %330 {offsets = [0, 256], sizes = [2, 128], strides = [1, 1]} : vector<2x384xf32> to vector<2x128xf32>
    %334 = vector.extract_strided_slice %324 {offsets = [0, 384], sizes = [2, 128], strides = [1, 1]} : vector<2x512xf32> to vector<2x128xf32>
    %335 = math.tanh %334 : vector<2x128xf32>
    %336 = arith.mulf %332, %297 : vector<2x128xf32>
    %337 = arith.mulf %331, %335 : vector<2x128xf32>
    %338 = arith.addf %336, %337 : vector<2x128xf32>
    %339 = math.tanh %338 : vector<2x128xf32>
    %340 = arith.mulf %333, %339 : vector<2x128xf32>
    %c14 = arith.constant 14 : index
    %c0_65 = arith.constant 0 : index
    %341 = vector.load %arg22[%c14, %c0_65] : memref<16x128xf32, #tpu.memory_space<vmem>>, vector<2x128xf32>
    tpu.vector_store %arg22[%c14, %c0_65], %340 {strides = array<i32>} : memref<16x128xf32, #tpu.memory_space<vmem>>, vector<2x128xf32>,
    %c0_66 = arith.constant 0 : index
    %c0_67 = arith.constant 0 : index
    %342 = vector.load %arg22[%c0_66, %c0_67] : memref<16x128xf32, #tpu.memory_space<vmem>>, vector<16x128xf32>
    %c0_68 = arith.constant 0 : index
    %c0_69 = arith.constant 0 : index
    %343 = vector.load %arg7[%c0_68, %c0_69] : memref<128x64xf32, #tpu.memory_space<vmem>>, vector<128x64xf32>
    %cst_70 = arith.constant dense<0.000000e+00> : vector<16x64xf32>
    %344 = tpu.matmul %342, %343, %cst_70 {dimension_numbers = #tpu.dot_dimension_numbers<[1], [0], [0], [1], [0, 0, 1, 1], [], []>} : vector<16x128xf32>, vector<128x64xf32>, vector<16x64xf32> -> vector<16x64xf32>
    %c0_71 = arith.constant 0 : index
    %c0_72 = arith.constant 0 : index
    %345 = vector.load %arg8[%c0_71, %c0_72] : memref<1x64xf32, #tpu.memory_space<vmem>>, vector<1x64xf32>
    %346 = vector.broadcast %345 : vector<1x64xf32> to vector<16x64xf32>
    %347 = arith.addf %344, %346 : vector<16x64xf32>
    %348 = math.tanh %347 : vector<16x64xf32>
    %c0_73 = arith.constant 0 : index
    %c0_74 = arith.constant 0 : index
    %349 = vector.load %arg9[%c0_73, %c0_74] : memref<64x1xf32, #tpu.memory_space<vmem>>, vector<64x1xf32>
    %cst_75 = arith.constant dense<0.000000e+00> : vector<16x1xf32>
    %350 = tpu.matmul %348, %349, %cst_75 {dimension_numbers = #tpu.dot_dimension_numbers<[1], [0], [0], [1], [0, 0, 1, 1], [], []>} : vector<16x64xf32>, vector<64x1xf32>, vector<16x1xf32> -> vector<16x1xf32>
    %c0_76 = arith.constant 0 : index
    %c0_77 = arith.constant 0 : index
    %351 = vector.load %arg10[%c0_76, %c0_77] : memref<1x1xf32, #tpu.memory_space<vmem>>, vector<1x1xf32>
    %352 = vector.broadcast %351 : vector<1x1xf32> to vector<16x1xf32>
    %353 = arith.addf %350, %352 : vector<16x1xf32>
    %354 = vector.extract_strided_slice %353 {offsets = [0, 0], sizes = [2, 1], strides = [1, 1]} : vector<16x1xf32> to vector<2x1xf32>
    %355 = vector.extract_strided_slice %353 {offsets = [2, 0], sizes = [2, 1], strides = [1, 1]} : vector<16x1xf32> to vector<2x1xf32>
    %356 = vector.extract_strided_slice %353 {offsets = [4, 0], sizes = [2, 1], strides = [1, 1]} : vector<16x1xf32> to vector<2x1xf32>
    %357 = vector.extract_strided_slice %353 {offsets = [6, 0], sizes = [2, 1], strides = [1, 1]} : vector<16x1xf32> to vector<2x1xf32>
    %358 = vector.extract_strided_slice %353 {offsets = [8, 0], sizes = [2, 1], strides = [1, 1]} : vector<16x1xf32> to vector<2x1xf32>
    %359 = vector.extract_strided_slice %353 {offsets = [10, 0], sizes = [2, 1], strides = [1, 1]} : vector<16x1xf32> to vector<2x1xf32>
    %360 = vector.extract_strided_slice %353 {offsets = [12, 0], sizes = [2, 1], strides = [1, 1]} : vector<16x1xf32> to vector<2x1xf32>
    %361 = vector.extract_strided_slice %353 {offsets = [14, 0], sizes = [2, 1], strides = [1, 1]} : vector<16x1xf32> to vector<2x1xf32>
    %362 = arith.maximumf %354, %355 : vector<2x1xf32>
    %363 = arith.maximumf %362, %356 : vector<2x1xf32>
    %364 = arith.maximumf %363, %357 : vector<2x1xf32>
    %365 = arith.maximumf %364, %358 : vector<2x1xf32>
    %366 = arith.maximumf %365, %359 : vector<2x1xf32>
    %367 = arith.maximumf %366, %360 : vector<2x1xf32>
    %368 = arith.maximumf %367, %361 : vector<2x1xf32>
    %369 = arith.subf %354, %368 : vector<2x1xf32>
    %370 = math.exp %369 : vector<2x1xf32>
    %371 = arith.subf %355, %368 : vector<2x1xf32>
    %372 = math.exp %371 : vector<2x1xf32>
    %373 = arith.subf %356, %368 : vector<2x1xf32>
    %374 = math.exp %373 : vector<2x1xf32>
    %375 = arith.subf %357, %368 : vector<2x1xf32>
    %376 = math.exp %375 : vector<2x1xf32>
    %377 = arith.subf %358, %368 : vector<2x1xf32>
    %378 = math.exp %377 : vector<2x1xf32>
    %379 = arith.subf %359, %368 : vector<2x1xf32>
    %380 = math.exp %379 : vector<2x1xf32>
    %381 = arith.subf %360, %368 : vector<2x1xf32>
    %382 = math.exp %381 : vector<2x1xf32>
    %383 = arith.subf %361, %368 : vector<2x1xf32>
    %384 = math.exp %383 : vector<2x1xf32>
    %385 = arith.addf %370, %372 : vector<2x1xf32>
    %386 = arith.addf %385, %374 : vector<2x1xf32>
    %387 = arith.addf %386, %376 : vector<2x1xf32>
    %388 = arith.addf %387, %378 : vector<2x1xf32>
    %389 = arith.addf %388, %380 : vector<2x1xf32>
    %390 = arith.addf %389, %382 : vector<2x1xf32>
    %391 = arith.addf %390, %384 : vector<2x1xf32>
    %392 = tpu.reciprocal %391 {approx = true} : vector<2x1xf32> -> vector<2x1xf32>
    %393 = vector.extract_strided_slice %342 {offsets = [0, 0], sizes = [2, 128], strides = [1, 1]} : vector<16x128xf32> to vector<2x128xf32>
    %394 = vector.broadcast %370 : vector<2x1xf32> to vector<2x128xf32>
    %395 = arith.mulf %394, %393 : vector<2x128xf32>
    %396 = vector.extract_strided_slice %342 {offsets = [2, 0], sizes = [2, 128], strides = [1, 1]} : vector<16x128xf32> to vector<2x128xf32>
    %397 = vector.broadcast %372 : vector<2x1xf32> to vector<2x128xf32>
    %398 = arith.mulf %397, %396 : vector<2x128xf32>
    %399 = arith.addf %395, %398 : vector<2x128xf32>
    %400 = vector.extract_strided_slice %342 {offsets = [4, 0], sizes = [2, 128], strides = [1, 1]} : vector<16x128xf32> to vector<2x128xf32>
    %401 = vector.broadcast %374 : vector<2x1xf32> to vector<2x128xf32>
    %402 = arith.mulf %401, %400 : vector<2x128xf32>
    %403 = arith.addf %399, %402 : vector<2x128xf32>
    %404 = vector.extract_strided_slice %342 {offsets = [6, 0], sizes = [2, 128], strides = [1, 1]} : vector<16x128xf32> to vector<2x128xf32>
    %405 = vector.broadcast %376 : vector<2x1xf32> to vector<2x128xf32>
    %406 = arith.mulf %405, %404 : vector<2x128xf32>
    %407 = arith.addf %403, %406 : vector<2x128xf32>
    %408 = vector.extract_strided_slice %342 {offsets = [8, 0], sizes = [2, 128], strides = [1, 1]} : vector<16x128xf32> to vector<2x128xf32>
    %409 = vector.broadcast %378 : vector<2x1xf32> to vector<2x128xf32>
    %410 = arith.mulf %409, %408 : vector<2x128xf32>
    %411 = arith.addf %407, %410 : vector<2x128xf32>
    %412 = vector.extract_strided_slice %342 {offsets = [10, 0], sizes = [2, 128], strides = [1, 1]} : vector<16x128xf32> to vector<2x128xf32>
    %413 = vector.broadcast %380 : vector<2x1xf32> to vector<2x128xf32>
    %414 = arith.mulf %413, %412 : vector<2x128xf32>
    %415 = arith.addf %411, %414 : vector<2x128xf32>
    %416 = vector.extract_strided_slice %342 {offsets = [12, 0], sizes = [2, 128], strides = [1, 1]} : vector<16x128xf32> to vector<2x128xf32>
    %417 = vector.broadcast %382 : vector<2x1xf32> to vector<2x128xf32>
    %418 = arith.mulf %417, %416 : vector<2x128xf32>
    %419 = arith.addf %415, %418 : vector<2x128xf32>
    %420 = vector.extract_strided_slice %342 {offsets = [14, 0], sizes = [2, 128], strides = [1, 1]} : vector<16x128xf32> to vector<2x128xf32>
    %421 = vector.broadcast %384 : vector<2x1xf32> to vector<2x128xf32>
    %422 = arith.mulf %421, %420 : vector<2x128xf32>
    %423 = arith.addf %419, %422 : vector<2x128xf32>
    %424 = vector.broadcast %392 : vector<2x1xf32> to vector<2x128xf32>
    %425 = arith.mulf %423, %424 : vector<2x128xf32>
    %c0_78 = arith.constant 0 : index
    %c0_79 = arith.constant 0 : index
    %426 = vector.load %arg11[%c0_78, %c0_79] : memref<128x64xf32, #tpu.memory_space<vmem>>, vector<128x64xf32>
    %cst_80 = arith.constant dense<0.000000e+00> : vector<2x64xf32>
    %427 = tpu.matmul %425, %426, %cst_80 {dimension_numbers = #tpu.dot_dimension_numbers<[1], [0], [0], [1], [0, 0, 1, 1], [], []>} : vector<2x128xf32>, vector<128x64xf32>, vector<2x64xf32> -> vector<2x64xf32>
    %c0_81 = arith.constant 0 : index
    %c0_82 = arith.constant 0 : index
    %428 = vector.load %arg12[%c0_81, %c0_82] : memref<1x64xf32, #tpu.memory_space<vmem>>, vector<1x64xf32>
    %429 = vector.broadcast %428 : vector<1x64xf32> to vector<2x64xf32>
    %430 = arith.addf %427, %429 : vector<2x64xf32>
    %cst_83 = arith.constant 0.000000e+00 : f32
    %431 = vector.broadcast %cst_83 : f32 to vector<2x64xf32>
    %432 = arith.maximumf %430, %431 : vector<2x64xf32>
    %c0_84 = arith.constant 0 : index
    %c0_85 = arith.constant 0 : index
    %433 = vector.load %arg13[%c0_84, %c0_85] : memref<64x1xf32, #tpu.memory_space<vmem>>, vector<64x1xf32>
    %cst_86 = arith.constant dense<0.000000e+00> : vector<2x1xf32>
    %434 = tpu.matmul %432, %433, %cst_86 {dimension_numbers = #tpu.dot_dimension_numbers<[1], [0], [0], [1], [0, 0, 1, 1], [], []>} : vector<2x64xf32>, vector<64x1xf32>, vector<2x1xf32> -> vector<2x1xf32>
    %c0_87 = arith.constant 0 : index
    %c0_88 = arith.constant 0 : index
    %435 = vector.load %arg14[%c0_87, %c0_88] : memref<1x1xf32, #tpu.memory_space<vmem>>, vector<1x1xf32>
    %436 = vector.broadcast %435 : vector<1x1xf32> to vector<2x1xf32>
    %437 = arith.addf %434, %436 : vector<2x1xf32>
    %c0_89 = arith.constant 0 : index
    %c0_90 = arith.constant 0 : index
    %438 = vector.load %arg15[%c0_89, %c0_90] : memref<128x1xf32, #tpu.memory_space<vmem>>, vector<128x1xf32>
    %cst_91 = arith.constant dense<0.000000e+00> : vector<2x1xf32>
    %439 = tpu.matmul %425, %438, %cst_91 {dimension_numbers = #tpu.dot_dimension_numbers<[1], [0], [0], [1], [0, 0, 1, 1], [], []>} : vector<2x128xf32>, vector<128x1xf32>, vector<2x1xf32> -> vector<2x1xf32>
    %c0_92 = arith.constant 0 : index
    %c0_93 = arith.constant 0 : index
    %440 = vector.load %arg16[%c0_92, %c0_93] : memref<1x1xf32, #tpu.memory_space<vmem>>, vector<1x1xf32>
    %441 = vector.broadcast %440 : vector<1x1xf32> to vector<2x1xf32>
    %442 = arith.addf %439, %441 : vector<2x1xf32>
    %443 = math.exp %442 : vector<2x1xf32>
    %c0_94 = arith.constant 0 : index
    %c0_95 = arith.constant 0 : index
    %444 = vector.load %arg17[%c0_94, %c0_95] : memref<2x16xf32, #tpu.memory_space<vmem>>, vector<2x16xf32>
    %445 = vector.extract_strided_slice %444 {offsets = [0, 0], sizes = [1, 16], strides = [1, 1]} : vector<2x16xf32> to vector<1x16xf32>
    %446 = vector.broadcast %437 : vector<2x1xf32> to vector<2x16xf32>
    %447 = vector.broadcast %445 : vector<1x16xf32> to vector<2x16xf32>
    %448 = arith.mulf %446, %447 : vector<2x16xf32>
    %449 = vector.extract_strided_slice %444 {offsets = [1, 0], sizes = [1, 16], strides = [1, 1]} : vector<2x16xf32> to vector<1x16xf32>
    %450 = vector.broadcast %443 : vector<2x1xf32> to vector<2x16xf32>
    %451 = vector.broadcast %449 : vector<1x16xf32> to vector<2x16xf32>
    %452 = arith.mulf %450, %451 : vector<2x16xf32>
    %453 = arith.addf %448, %452 : vector<2x16xf32>
    %c0_96 = arith.constant 0 : index
    %c0_97 = arith.constant 0 : index
    %454 = vector.load %arg18[%c0_96, %c0_97] : memref<1x16xf32, #tpu.memory_space<vmem>>, vector<1x16xf32>
    %455 = vector.broadcast %454 : vector<1x16xf32> to vector<2x16xf32>
    %456 = arith.addf %453, %455 : vector<2x16xf32>
    %cst_98 = arith.constant 0.000000e+00 : f32
    %457 = vector.broadcast %cst_98 : f32 to vector<2x16xf32>
    %458 = arith.maximumf %456, %457 : vector<2x16xf32>
    %c0_99 = arith.constant 0 : index
    %c0_100 = arith.constant 0 : index
    %459 = vector.load %arg19[%c0_99, %c0_100] : memref<16x1xf32, #tpu.memory_space<vmem>>, vector<16x1xf32>
    %cst_101 = arith.constant dense<0.000000e+00> : vector<2x1xf32>
    %460 = tpu.matmul %458, %459, %cst_101 {dimension_numbers = #tpu.dot_dimension_numbers<[1], [0], [0], [1], [0, 0, 1, 1], [], []>} : vector<2x16xf32>, vector<16x1xf32>, vector<2x1xf32> -> vector<2x1xf32>
    %c0_102 = arith.constant 0 : index
    %c0_103 = arith.constant 0 : index
    %461 = vector.load %arg20[%c0_102, %c0_103] : memref<1x1xf32, #tpu.memory_space<vmem>>, vector<1x1xf32>
    %462 = vector.broadcast %461 : vector<1x1xf32> to vector<2x1xf32>
    %463 = arith.addf %460, %462 : vector<2x1xf32>
    %c0_104 = arith.constant 0 : index
    %c0_105 = arith.constant 0 : index
    %464 = vector.load %arg21[%c0_104, %c0_105] : memref<2x1xf32, #tpu.memory_space<vmem>>, vector<2x1xf32>
    tpu.vector_store %arg21[%c0_104, %c0_105], %463 {strides = array<i32>} : memref<2x1xf32, #tpu.memory_space<vmem>>, vector<2x1xf32>,
    return
  }
}

</mosaic_0001>

<llo_original>
// kernel: tpu_custom_call.1
$region0: #{tpu_custom_call.1}
  #allocation0 [shape = 'u32[]', space=smem, size = 0x4, offset = 0x4, fixed_abs, tag = 'smem constant byte address 0x4 - core index']
  #allocation1 [shape = 'u32[144,128]{1,0:T(1,128)}', space=vmem, size = 0x12000, scoped, tag = 'internal scratch']
  #allocation2 [shape = 'f32[16,128]{1,0:T(8,128)}', space=vmem, size = 0x2000, scoped, tag = 'scratch operand']
  #allocation3 [shape = 'f32[1,1]{1,0:T(1,128)S(1)}', space=vmem, size = 0x200, scoped, tag = 'scoped memory for tpu_custom_call.1']
  #allocation4 [shape = 'f32[1,1]{1,0:T(1,128)S(1)}', space=vmem, size = 0x200, scoped, tag = 'scoped memory for tpu_custom_call.1']
  #allocation5 [shape = 'f32[1,1]{1,0:T(1,128)S(1)}', space=vmem, size = 0x200, scoped, tag = 'scoped memory for tpu_custom_call.1']
  #allocation6 [shape = 'f32[1,1]{1,0:T(1,128)S(1)}', space=vmem, size = 0x200, scoped, tag = 'scoped memory for tpu_custom_call.1']
  %s0 = inlined_call_operand.hbm [shape: f32[16,27], index: 0, kind: input, shape index: {}]
  %s1 = inlined_call_operand.vmem [shape: f32[27,512], index: 1, kind: input, shape index: {}]
  %s2 = inlined_call_operand.vmem [shape: f32[128,512], index: 2, kind: input, shape index: {}]
  %s3 = inlined_call_operand.hbm [shape: f32[1,512], index: 3, kind: input, shape index: {}]
  %s4 = inlined_call_operand.hbm [shape: f32[128,512], index: 4, kind: input, shape index: {}]
  %s5 = inlined_call_operand.hbm [shape: f32[128,512], index: 5, kind: input, shape index: {}]
  %s6 = inlined_call_operand.hbm [shape: f32[1,512], index: 6, kind: input, shape index: {}]
  %s7 = inlined_call_operand.vmem [shape: f32[128,64], index: 7, kind: input, shape index: {}]
  %s8 = inlined_call_operand.vmem [shape: f32[1,64], index: 8, kind: input, shape index: {}]
  %s9 = inlined_call_operand.vmem [shape: f32[64,1], index: 9, kind: input, shape index: {}]
  %s10 = inlined_call_operand.<no memory space> [shape: f32[1,1], index: 10, kind: input, shape index: {}]
  %s11 = inlined_call_operand.vmem [shape: f32[128,64], index: 11, kind: input, shape index: {}]
  %s12 = inlined_call_operand.vmem [shape: f32[1,64], index: 12, kind: input, shape index: {}]
  %s13 = inlined_call_operand.vmem [shape: f32[64,1], index: 13, kind: input, shape index: {}]
  %s14 = inlined_call_operand.<no memory space> [shape: f32[1,1], index: 14, kind: input, shape index: {}]
  %s15 = inlined_call_operand.vmem [shape: f32[128,1], index: 15, kind: input, shape index: {}]
  %s16 = inlined_call_operand.<no memory space> [shape: f32[1,1], index: 16, kind: input, shape index: {}]
  %s17 = inlined_call_operand.vmem [shape: f32[2,16], index: 17, kind: input, shape index: {}]
  %s18 = inlined_call_operand.vmem [shape: f32[1,16], index: 18, kind: input, shape index: {}]
  %s19 = inlined_call_operand.vmem [shape: f32[16,1], index: 19, kind: input, shape index: {}]
  %s20 = inlined_call_operand.<no memory space> [shape: f32[1,1], index: 20, kind: input, shape index: {}]
  %s21 = inlined_call_operand.vmem [shape: f32[2,1], index: 21, kind: output, shape index: {}]
  %s22 = sld [smem:[#allocation0]]
  $region114: #{tpu_custom_call.1} parent=0
    _
  %s24 = ssub.s32 1, %s22
  %s25 = scalar_select 0, %s24, %s22
  %v26 = vstv %s10
  %27 = vst [vmem:[#allocation3] sm:$0x1] %v26
  %v28 = vstv %s14
  %29 = vst [vmem:[#allocation4] sm:$0x1] %v28
  %v30 = vstv %s16
  %31 = vst [vmem:[#allocation5] sm:$0x1] %v30
  %v32 = vstv %s20
  %33 = vst [vmem:[#allocation6] sm:$0x1] %v32
  $region1: #{tpu_custom_call.1} parent=0
    #allocation7 [shape = 'u8[8192]{0}', space=vmem, size = 0x2000, scoped, tag = 'input window, operand 0, single buffered']
    #allocation8 [shape = 's32[1]{0}', space=sflag, size = 0x4, scoped, tag = 'scoped memory for tpu_custom_call.1']
    #allocation9 [shape = 'u8[2048]{0}', space=vmem, size = 0x800, scoped, tag = 'input window, operand 3, single buffered']
    #allocation10 [shape = 's32[1]{0}', space=sflag, size = 0x4, scoped, tag = 'scoped memory for tpu_custom_call.1']
    #allocation11 [shape = 'u8[262144]{0}', space=vmem, size = 0x40000, scoped, tag = 'input window, operand 4, single buffered']
    #allocation12 [shape = 'u8[262144]{0}', space=vmem, size = 0x40000, scoped, tag = 'input window, operand 5, single buffered']
    #allocation13 [shape = 's32[1]{0}', space=sflag, size = 0x4, scoped, tag = 'scoped memory for tpu_custom_call.1']
    #allocation14 [shape = 'u8[2048]{0}', space=vmem, size = 0x800, scoped, tag = 'input window, operand 6, single buffered']
    %34 = vsyncpa [#allocation8], 0
    %35 = vsyncpa [#allocation10], 0
    %36 = vsyncpa [#allocation13], 0
    // Predicated region
    $region2: #{tpu_custom_call.1} parent=1 // pred_check
      _
    $region3: #{tpu_custom_call.1} parent=1 // pred_check_branch
      %38 = sbr.rel (0) target = $region5
    $region4: #{tpu_custom_call.1} parent=1 // pred_region
      %s40 = ssub.s32 256, 256
      %41 = vsyncadd [#allocation8], %s40
      %s42 = sshll.u32 [#allocation7], 4
      %s43 = int_to_ptr.vmem [resolvable:$true] %s42
      %48 = dma.hbm_to_vmem [thread:$0]  %s0, 256, %s43, [#allocation8], 128, 128, 8
    $region5: #{tpu_custom_call.1} parent=1 // pred_fallthru
      _
    // Predicated region
    $region6: #{tpu_custom_call.1} parent=1 // pred_check
      _
    $region7: #{tpu_custom_call.1} parent=1 // pred_check_branch
      %50 = sbr.rel (0) target = $region9
    $region8: #{tpu_custom_call.1} parent=1 // pred_region
      _
    $region9: #{tpu_custom_call.1} parent=1 // pred_fallthru
      _
    // Predicated region
    $region10: #{tpu_custom_call.1} parent=1 // pred_check
      _
    $region11: #{tpu_custom_call.1} parent=1 // pred_check_branch
      %52 = sbr.rel (0) target = $region13
    $region12: #{tpu_custom_call.1} parent=1 // pred_region
      _
    $region13: #{tpu_custom_call.1} parent=1 // pred_fallthru
      _
    // Predicated region
    $region14: #{tpu_custom_call.1} parent=1 // pred_check
      _
    $region15: #{tpu_custom_call.1} parent=1 // pred_check_branch
      %54 = sbr.rel (0) target = $region17
    $region16: #{tpu_custom_call.1} parent=1 // pred_region
      %s56 = ssub.s32 64, 64
      %57 = vsyncadd [#allocation10], %s56
      %s59 = sshll.u32 [#allocation9], 4
      %s60 = int_to_ptr.vmem [resolvable:$true] %s59
      %62 = dma.hbm_to_vmem [thread:$0]  %s3, 64, %s60, [#allocation10]
    $region17: #{tpu_custom_call.1} parent=1 // pred_fallthru
      _
    // Predicated region
    $region18: #{tpu_custom_call.1} parent=1 // pred_check
      _
    $region19: #{tpu_custom_call.1} parent=1 // pred_check_branch
      %64 = sbr.rel (0) target = $region21
    $region20: #{tpu_custom_call.1} parent=1 // pred_region
      %s66 = ssub.s32 8192, 8192
      %67 = vsyncadd [#allocation10], %s66
      %s68 = sshll.u32 [#allocation11], 4
      %s69 = int_to_ptr.vmem [resolvable:$true] %s68
      %74 = dma.hbm_to_vmem [thread:$0]  %s4, 8192, %s69, [#allocation10], 512, 512, 32
    $region21: #{tpu_custom_call.1} parent=1 // pred_fallthru
      _
    // Predicated region
    $region22: #{tpu_custom_call.1} parent=1 // pred_check
      _
    $region23: #{tpu_custom_call.1} parent=1 // pred_check_branch
      %76 = sbr.rel (0) target = $region25
    $region24: #{tpu_custom_call.1} parent=1 // pred_region
      %s78 = ssub.s32 8192, 8192
      %79 = vsyncadd [#allocation13], %s78
      %s80 = sshll.u32 [#allocation12], 4
      %s81 = int_to_ptr.vmem [resolvable:$true] %s80
      %86 = dma.hbm_to_vmem [thread:$0]  %s5, 8192, %s81, [#allocation13], 512, 512, 32
    $region25: #{tpu_custom_call.1} parent=1 // pred_fallthru
      _
    // Predicated region
    $region26: #{tpu_custom_call.1} parent=1 // pred_check
      _
    $region27: #{tpu_custom_call.1} parent=1 // pred_check_branch
      %88 = sbr.rel (0) target = $region29
    $region28: #{tpu_custom_call.1} parent=1 // pred_region
      %s90 = ssub.s32 64, 64
      %91 = vsyncadd [#allocation13], %s90
      %s93 = sshll.u32 [#allocation14], 4
      %s94 = int_to_ptr.vmem [resolvable:$true] %s93
      %96 = dma.hbm_to_vmem [thread:$0]  %s6, 64, %s94, [#allocation13]
    $region29: #{tpu_custom_call.1} parent=1 // pred_fallthru
      _
    // Predicated region
    $region30: #{tpu_custom_call.1} parent=1 // pred_check
      _
    $region31: #{tpu_custom_call.1} parent=1 // pred_check_branch
      %98 = sbr.rel (0) target = $region33
    $region32: #{tpu_custom_call.1} parent=1 // pred_region
      _
    $region33: #{tpu_custom_call.1} parent=1 // pred_fallthru
      _
    // Predicated region
    $region34: #{tpu_custom_call.1} parent=1 // pred_check
      _
    $region35: #{tpu_custom_call.1} parent=1 // pred_check_branch
      %100 = sbr.rel (0) target = $region37
    $region36: #{tpu_custom_call.1} parent=1 // pred_region
      _
    $region37: #{tpu_custom_call.1} parent=1 // pred_fallthru
      _
    // Predicated region
    $region38: #{tpu_custom_call.1} parent=1 // pred_check
      _
    $region39: #{tpu_custom_call.1} parent=1 // pred_check_branch
      %102 = sbr.rel (0) target = $region41
    $region40: #{tpu_custom_call.1} parent=1 // pred_region
      _
    $region41: #{tpu_custom_call.1} parent=1 // pred_fallthru
      _
    // Predicated region
    $region42: #{tpu_custom_call.1} parent=1 // pred_check
      _
    $region43: #{tpu_custom_call.1} parent=1 // pred_check_branch
      %104 = sbr.rel (0) target = $region45
    $region44: #{tpu_custom_call.1} parent=1 // pred_region
      _
    $region45: #{tpu_custom_call.1} parent=1 // pred_fallthru
      _
    // Predicated region
    $region46: #{tpu_custom_call.1} parent=1 // pred_check
      _
    $region47: #{tpu_custom_call.1} parent=1 // pred_check_branch
      %106 = sbr.rel (0) target = $region49
    $region48: #{tpu_custom_call.1} parent=1 // pred_region
      _
    $region49: #{tpu_custom_call.1} parent=1 // pred_fallthru
      _
    // Predicated region
    $region50: #{tpu_custom_call.1} parent=1 // pred_check
      _
    $region51: #{tpu_custom_call.1} parent=1 // pred_check_branch
      %108 = sbr.rel (0) target = $region53
    $region52: #{tpu_custom_call.1} parent=1 // pred_region
      _
    $region53: #{tpu_custom_call.1} parent=1 // pred_fallthru
      _
    // Predicated region
    $region54: #{tpu_custom_call.1} parent=1 // pred_check
      _
    $region55: #{tpu_custom_call.1} parent=1 // pred_check_branch
      %110 = sbr.rel (0) target = $region57
    $region56: #{tpu_custom_call.1} parent=1 // pred_region
      _
    $region57: #{tpu_custom_call.1} parent=1 // pred_fallthru
      _
    // Predicated region
    $region58: #{tpu_custom_call.1} parent=1 // pred_check
      _
    $region59: #{tpu_custom_call.1} parent=1 // pred_check_branch
      %112 = sbr.rel (0) target = $region61
    $region60: #{tpu_custom_call.1} parent=1 // pred_region
      _
    $region61: #{tpu_custom_call.1} parent=1 // pred_fallthru
      _
    // Predicated region
    $region62: #{tpu_custom_call.1} parent=1 // pred_check
      _
    $region63: #{tpu_custom_call.1} parent=1 // pred_check_branch
      %114 = sbr.rel (0) target = $region65
    $region64: #{tpu_custom_call.1} parent=1 // pred_region
      _
    $region65: #{tpu_custom_call.1} parent=1 // pred_fallthru
      _
    // Predicated region
    $region66: #{tpu_custom_call.1} parent=1 // pred_check
      _
    $region67: #{tpu_custom_call.1} parent=1 // pred_check_branch
      %116 = sbr.rel (0) target = $region69
    $region68: #{tpu_custom_call.1} parent=1 // pred_region
      _
    $region69: #{tpu_custom_call.1} parent=1 // pred_fallthru
      _
    // Predicated region
    $region70: #{tpu_custom_call.1} parent=1 // pred_check
      _
    $region71: #{tpu_custom_call.1} parent=1 // pred_check_branch
      %118 = sbr.rel (0) target = $region73
    $region72: #{tpu_custom_call.1} parent=1 // pred_region
      _
    $region73: #{tpu_custom_call.1} parent=1 // pred_fallthru
      _
    // Predicated region
    $region74: #{tpu_custom_call.1} parent=1 // pred_check
      _
    $region75: #{tpu_custom_call.1} parent=1 // pred_check_branch
      %120 = sbr.rel (0) target = $region77
    $region76: #{tpu_custom_call.1} parent=1 // pred_region
      _
    $region77: #{tpu_custom_call.1} parent=1 // pred_fallthru
      _
    // Predicated region
    $region78: #{tpu_custom_call.1} parent=1 // pred_check
      _
    $region79: #{tpu_custom_call.1} parent=1 // pred_check_branch
      %122 = sbr.rel (0) target = $region81
    $region80: #{tpu_custom_call.1} parent=1 // pred_region
      _
    $region81: #{tpu_custom_call.1} parent=1 // pred_fallthru
      _
    // Predicated region
    $region82: #{tpu_custom_call.1} parent=1 // pred_check
      _
    $region83: #{tpu_custom_call.1} parent=1 // pred_check_branch
      %124 = sbr.rel (0) target = $region85
    $region84: #{tpu_custom_call.1} parent=1 // pred_region
      _
    $region85: #{tpu_custom_call.1} parent=1 // pred_fallthru
      _
    // Predicated region
    $region86: #{tpu_custom_call.1} parent=1 // pred_check
      _
    $region87: #{tpu_custom_call.1} parent=1 // pred_check_branch
      %126 = sbr.rel (0) target = $region89
    $region88: #{tpu_custom_call.1} parent=1 // pred_region
      %127 = dma.done [#allocation8], 256
    $region89: #{tpu_custom_call.1} parent=1 // pred_fallthru
      _
    // Predicated region
    $region90: #{tpu_custom_call.1} parent=1 // pred_check
      _
    $region91: #{tpu_custom_call.1} parent=1 // pred_check_branch
      %129 = sbr.rel (0) target = $region93
    $region92: #{tpu_custom_call.1} parent=1 // pred_region
      %130 = dma.done [#allocation10], 64
    $region93: #{tpu_custom_call.1} parent=1 // pred_fallthru
      _
    // Predicated region
    $region94: #{tpu_custom_call.1} parent=1 // pred_check
      _
    $region95: #{tpu_custom_call.1} parent=1 // pred_check_branch
      %132 = sbr.rel (0) target = $region97
    $region96: #{tpu_custom_call.1} parent=1 // pred_region
      %133 = dma.done [#allocation10], 8192
    $region97: #{tpu_custom_call.1} parent=1 // pred_fallthru
      _
    // Predicated region
    $region98: #{tpu_custom_call.1} parent=1 // pred_check
      _
    $region99: #{tpu_custom_call.1} parent=1 // pred_check_branch
      %135 = sbr.rel (0) target = $region101
    $region100: #{tpu_custom_call.1} parent=1 // pred_region
      %136 = dma.done [#allocation13], 8192
    $region101: #{tpu_custom_call.1} parent=1 // pred_fallthru
      _
    // Predicated region
    $region102: #{tpu_custom_call.1} parent=1 // pred_check
      _
    $region103: #{tpu_custom_call.1} parent=1 // pred_check_branch
      %138 = sbr.rel (0) target = $region105
    $region104: #{tpu_custom_call.1} parent=1 // pred_region
      %139 = dma.done [#allocation13], 64
    $region105: #{tpu_custom_call.1} parent=1 // pred_fallthru
      _
    %v140 = vld [vmem:[#allocation7] sm:$0xff]
    %v141 = vld [vmem:[#allocation7 + $0x8] sm:$0xff]
    %v142 = vld [vmem:[%s1] sm:$0xff]
    %v143 = vld [vmem:[%s1 + $0x8] sm:$0xff]
    %v144 = vld [vmem:[%s1 + $0x10] sm:$0xff]
    %v145 = vld [vmem:[%s1 + $0x18] sm:$0xff]
    %v146 = vld [vmem:[%s1 + $0x20] sm:$0xff]
    %v147 = vld [vmem:[%s1 + $0x28] sm:$0xff]
    %v148 = vld [vmem:[%s1 + $0x30] sm:$0xff]
    %v149 = vld [vmem:[%s1 + $0x38] sm:$0xff]
    %v150 = vld [vmem:[%s1 + $0x40] sm:$0xff]
    %v151 = vld [vmem:[%s1 + $0x48] sm:$0xff]
    %v152 = vld [vmem:[%s1 + $0x50] sm:$0xff]
    %v153 = vld [vmem:[%s1 + $0x58] sm:$0xff]
    %v154 = vld [vmem:[%s1 + $0x60] sm:$0x7]
    %v155 = vld [vmem:[%s1 + $0x68] sm:$0x7]
    %v156 = vld [vmem:[%s1 + $0x70] sm:$0x7]
    %v157 = vld [vmem:[%s1 + $0x78] sm:$0x7]
    %v158 = vld [vmem:[#allocation9] sm:$0xf]
    %v160 = vlaneseq
    %v161 = vshrl.u32 %v160, 7
    %v162 = vsub.s32 0, %v161
    %v163 = vrot.slane %v158, %v162
    %v164 = vlaneseq
    %v165 = vshrl.u32 %v164, 7
    %v166 = vsub.s32 1, %v165
    %v167 = vrot.slane %v158, %v166
    %v168 = vlaneseq
    %v169 = vshrl.u32 %v168, 7
    %v170 = vsub.s32 2, %v169
    %v171 = vrot.slane %v158, %v170
    %v172 = vlaneseq
    %v173 = vshrl.u32 %v172, 7
    %v174 = vsub.s32 3, %v173
    %v175 = vrot.slane %v158, %v174
    %vm180 = vcmask 220160
    %v182 = vsel %vm180, %v140, 0
    %v185 = vsel %vm180, %v141, 0
    %vm187 = vcmask 1042432
    %v189 = vsel %vm187, %v154, 0
    %v192 = vsel %vm187, %v155, 0
    %v195 = vsel %vm187, %v156, 0
    %v198 = vsel %vm187, %v157, 0
    %200 = vmatprep.subr.mxu0 %v143
    %201 = vmatpush1.msra.mxu0 %v142
    %202 = vmatprep.subr.mxu0 %v147
    %203 = vmatpush1.msra.mxu0 %v146
    %204 = vmatprep.subr.mxu0 %v151
    %205 = vmatpush1.msra.mxu0 %v150
    %206 = vmatprep.subr.mxu0 %v192
    %207 = vmatpush1.msra.mxu0 %v189
    %208 = vmatprep.subr.mxu0 0.0
    %209 = vmatpush1.msra.mxu0 0.0
    %210 = vmatprep.subr.mxu0 0.0
    %211 = vmatpush1.msra.mxu0 0.0
    %212 = vmatprep.subr.mxu0 0.0
    %213 = vmatpush1.msra.mxu0 0.0
    %214 = vmatprep.subr.mxu0 0.0
    %215 = vmatpush1.msra.mxu0 0.0
    %216 = vmatprep.subr.mxu0 0.0
    %217 = vmatpush1.msra.mxu0 0.0
    %218 = vmatprep.subr.mxu0 0.0
    %219 = vmatpush1.msra.mxu0 0.0
    %220 = vmatprep.subr.mxu0 0.0
    %221 = vmatpush1.msra.mxu0 0.0
    %222 = vmatprep.subr.mxu0 0.0
    %223 = vmatpush1.msra.mxu0 0.0
    %224 = vmatprep.subr.mxu0 0.0
    %225 = vmatpush1.msra.mxu0 0.0
    %226 = vmatprep.subr.mxu0 0.0
    %227 = vmatpush1.msra.mxu0 0.0
    %228 = vmatprep.subr.mxu0 0.0
    %229 = vmatpush1.msra.mxu0 0.0
    %230 = vmatprep.subr.mxu0 0.0
    %231 = vmatpush1.msra.mxu0 0.0
    %232 = vmatprep.subr.mxu0 0.0
    %233 = vmatpush1.msra.mxu0 0.0
    %234 = vmatprep.subr.mxu0 0.0
    %235 = vmatpush1.msra.mxu0 0.0
    %236 = vmatprep.subr.mxu0 0.0
    %237 = vmatpush1.msra.mxu0 0.0
    %238 = vmatprep.subr.mxu0 0.0
    %239 = vmatpush1.msra.mxu0 0.0
    %240 = vmatprep.subr.mxu0 0.0
    %241 = vmatpush1.msra.mxu0 0.0
    %242 = vmatprep.subr.mxu0 0.0
    %243 = vmatpush1.msra.mxu0 0.0
    %244 = vmatprep.subr.mxu0 0.0
    %245 = vmatpush1.msra.mxu0 0.0
    %246 = vmatprep.subr.mxu0 0.0
    %247 = vmatpush1.msra.mxu0 0.0
    %248 = vmatprep.subr.mxu0 0.0
    %249 = vmatpush1.msra.mxu0 0.0
    %250 = vmatprep.subr.mxu0 0.0
    %251 = vmatpush1.msra.mxu0 0.0
    %252 = vmatprep.subr.mxu0 0.0
    %253 = vmatpush1.msra.mxu0 0.0
    %254 = vmatprep.subr.mxu0 0.0
    %255 = vmatpush1.msra.mxu0 0.0
    %256 = vmatprep.subr.mxu0 0.0
    %257 = vmatpush1.msra.mxu0 0.0
    %258 = vmatprep.subr.mxu0 0.0
    %259 = vmatpush1.msra.mxu0 0.0
    %260 = vmatprep.subr.mxu0 0.0
    %261 = vmatpush1.msra.mxu0 0.0
    %262 = vmatprep.subr.mxu0 0.0
    %263 = vmatpush1.msra.mxu0 0.0
    %264 = vmatprep.mubr.f32.mxu0 0.0
    %265 = vmatmul.mubr.f32.gmra.mrb[0].mxu0 %v182
    %v266 = vpop.f32.mrb[0].mxu0
    %v267 = vadd.f32 %v163, %v266
    %v268 = vpop.f32.mrb[0].mxu0
    %v269 = vadd.f32 %v167, %v268
    %270 = vmatprep.mubr.f32.mxu0 0.0
    %271 = vmatmul.mubr.f32.gmra.mrb[0].mxu0 %v185
    %v272 = vpop.f32.mrb[0].mxu0
    %v273 = vadd.f32 %v163, %v272
    %v274 = vpop.f32.mrb[0].mxu0
    %v275 = vadd.f32 %v167, %v274
    %276 = vdwg.mxu0
    %277 = vmatprep.subr.mxu0 %v145
    %278 = vmatpush1.msra.mxu0 %v144
    %279 = vmatprep.subr.mxu0 %v149
    %280 = vmatpush1.msra.mxu0 %v148
    %281 = vmatprep.subr.mxu0 %v153
    %282 = vmatpush1.msra.mxu0 %v152
    %283 = vmatprep.subr.mxu0 %v198
    %284 = vmatpush1.msra.mxu0 %v195
    %285 = vmatprep.subr.mxu0 0.0
    %286 = vmatpush1.msra.mxu0 0.0
    %287 = vmatprep.subr.mxu0 0.0
    %288 = vmatpush1.msra.mxu0 0.0
    %289 = vmatprep.subr.mxu0 0.0
    %290 = vmatpush1.msra.mxu0 0.0
    %291 = vmatprep.subr.mxu0 0.0
    %292 = vmatpush1.msra.mxu0 0.0
    %293 = vmatprep.subr.mxu0 0.0
    %294 = vmatpush1.msra.mxu0 0.0
    %295 = vmatprep.subr.mxu0 0.0
    %296 = vmatpush1.msra.mxu0 0.0
    %297 = vmatprep.subr.mxu0 0.0
    %298 = vmatpush1.msra.mxu0 0.0
    %299 = vmatprep.subr.mxu0 0.0
    %300 = vmatpush1.msra.mxu0 0.0
    %301 = vmatprep.subr.mxu0 0.0
    %302 = vmatpush1.msra.mxu0 0.0
    %303 = vmatprep.subr.mxu0 0.0
    %304 = vmatpush1.msra.mxu0 0.0
    %305 = vmatprep.subr.mxu0 0.0
    %306 = vmatpush1.msra.mxu0 0.0
    %307 = vmatprep.subr.mxu0 0.0
    %308 = vmatpush1.msra.mxu0 0.0
    %309 = vmatprep.subr.mxu0 0.0
    %310 = vmatpush1.msra.mxu0 0.0
    %311 = vmatprep.subr.mxu0 0.0
    %312 = vmatpush1.msra.mxu0 0.0
    %313 = vmatprep.subr.mxu0 0.0
    %314 = vmatpush1.msra.mxu0 0.0
    %315 = vmatprep.subr.mxu0 0.0
    %316 = vmatpush1.msra.mxu0 0.0
    %317 = vmatprep.subr.mxu0 0.0
    %318 = vmatpush1.msra.mxu0 0.0
    %319 = vmatprep.subr.mxu0 0.0
    %320 = vmatpush1.msra.mxu0 0.0
    %321 = vmatprep.subr.mxu0 0.0
    %322 = vmatpush1.msra.mxu0 0.0
    %323 = vmatprep.subr.mxu0 0.0
    %324 = vmatpush1.msra.mxu0 0.0
    %325 = vmatprep.subr.mxu0 0.0
    %326 = vmatpush1.msra.mxu0 0.0
    %327 = vmatprep.subr.mxu0 0.0
    %328 = vmatpush1.msra.mxu0 0.0
    %329 = vmatprep.subr.mxu0 0.0
    %330 = vmatpush1.msra.mxu0 0.0
    %331 = vmatprep.subr.mxu0 0.0
    %332 = vmatpush1.msra.mxu0 0.0
    %333 = vmatprep.subr.mxu0 0.0
    %334 = vmatpush1.msra.mxu0 0.0
    %335 = vmatprep.subr.mxu0 0.0
    %336 = vmatpush1.msra.mxu0 0.0
    %337 = vmatprep.subr.mxu0 0.0
    %338 = vmatpush1.msra.mxu0 0.0
    %339 = vmatprep.subr.mxu0 0.0
    %340 = vmatpush1.msra.mxu0 0.0
    %341 = vmatprep.mubr.f32.mxu0 0.0
    %342 = vmatmul.mubr.f32.gmra.mrb[0].mxu0 %v182
    %v343 = vpop.f32.mrb[0].mxu0
    %v344 = vadd.f32 %v171, %v343
    %v345 = vpop.f32.mrb[0].mxu0
    %v346 = vadd.f32 %v175, %v345
    %347 = vmatprep.mubr.f32.mxu0 0.0
    %348 = vmatmul.mubr.f32.gmra.mrb[0].mxu0 %v185
    %v349 = vpop.f32.mrb[0].mxu0
    %v350 = vadd.f32 %v171, %v349
    %v351 = vpop.f32.mrb[0].mxu0
    %v352 = vadd.f32 %v175, %v351
    %353 = vdwg.mxu0
    %v354 = vld [vmem:[%s2] sm:$0xff]
    %v355 = vld [vmem:[%s2 + $0x8] sm:$0xff]
    %v356 = vld [vmem:[%s2 + $0x10] sm:$0xff]
    %v357 = vld [vmem:[%s2 + $0x18] sm:$0xff]
    %v358 = vld [vmem:[%s2 + $0x20] sm:$0xff]
    %v359 = vld [vmem:[%s2 + $0x28] sm:$0xff]
    %v360 = vld [vmem:[%s2 + $0x30] sm:$0xff]
    %v361 = vld [vmem:[%s2 + $0x38] sm:$0xff]
    %v362 = vld [vmem:[%s2 + $0x40] sm:$0xff]
    %v363 = vld [vmem:[%s2 + $0x48] sm:$0xff]
    %v364 = vld [vmem:[%s2 + $0x50] sm:$0xff]
    %v365 = vld [vmem:[%s2 + $0x58] sm:$0xff]
    %v366 = vld [vmem:[%s2 + $0x60] sm:$0xff]
    %v367 = vld [vmem:[%s2 + $0x68] sm:$0xff]
    %v368 = vld [vmem:[%s2 + $0x70] sm:$0xff]
    %v369 = vld [vmem:[%s2 + $0x78] sm:$0xff]
    %v370 = vld [vmem:[%s2 + $0x80] sm:$0xff]
    %v371 = vld [vmem:[%s2 + $0x88] sm:$0xff]
    %v372 = vld [vmem:[%s2 + $0x90] sm:$0xff]
    %v373 = vld [vmem:[%s2 + $0x98] sm:$0xff]
    %v374 = vld [vmem:[%s2 + $0xa0] sm:$0xff]
    %v375 = vld [vmem:[%s2 + $0xa8] sm:$0xff]
    %v376 = vld [vmem:[%s2 + $0xb0] sm:$0xff]
    %v377 = vld [vmem:[%s2 + $0xb8] sm:$0xff]
    %v378 = vld [vmem:[%s2 + $0xc0] sm:$0xff]
    %v379 = vld [vmem:[%s2 + $0xc8] sm:$0xff]
    %v380 = vld [vmem:[%s2 + $0xd0] sm:$0xff]
    %v381 = vld [vmem:[%s2 + $0xd8] sm:$0xff]
    %v382 = vld [vmem:[%s2 + $0xe0] sm:$0xff]
    %v383 = vld [vmem:[%s2 + $0xe8] sm:$0xff]
    %v384 = vld [vmem:[%s2 + $0xf0] sm:$0xff]
    %v385 = vld [vmem:[%s2 + $0xf8] sm:$0xff]
    %v386 = vld [vmem:[%s2 + $0x100] sm:$0xff]
    %v387 = vld [vmem:[%s2 + $0x108] sm:$0xff]
    %v388 = vld [vmem:[%s2 + $0x110] sm:$0xff]
    %v389 = vld [vmem:[%s2 + $0x118] sm:$0xff]
    %v390 = vld [vmem:[%s2 + $0x120] sm:$0xff]
    %v391 = vld [vmem:[%s2 + $0x128] sm:$0xff]
    %v392 = vld [vmem:[%s2 + $0x130] sm:$0xff]
    %v393 = vld [vmem:[%s2 + $0x138] sm:$0xff]
    %v394 = vld [vmem:[%s2 + $0x140] sm:$0xff]
    %v395 = vld [vmem:[%s2 + $0x148] sm:$0xff]
    %v396 = vld [vmem:[%s2 + $0x150] sm:$0xff]
    %v397 = vld [vmem:[%s2 + $0x158] sm:$0xff]
    %v398 = vld [vmem:[%s2 + $0x160] sm:$0xff]
    %v399 = vld [vmem:[%s2 + $0x168] sm:$0xff]
    %v400 = vld [vmem:[%s2 + $0x170] sm:$0xff]
    %v401 = vld [vmem:[%s2 + $0x178] sm:$0xff]
    %v402 = vld [vmem:[%s2 + $0x180] sm:$0xff]
    %v403 = vld [vmem:[%s2 + $0x188] sm:$0xff]
    %v404 = vld [vmem:[%s2 + $0x190] sm:$0xff]
    %v405 = vld [vmem:[%s2 + $0x198] sm:$0xff]
    %v406 = vld [vmem:[%s2 + $0x1a0] sm:$0xff]
    %v407 = vld [vmem:[%s2 + $0x1a8] sm:$0xff]
    %v408 = vld [vmem:[%s2 + $0x1b0] sm:$0xff]
    %v409 = vld [vmem:[%s2 + $0x1b8] sm:$0xff]
    %v410 = vld [vmem:[%s2 + $0x1c0] sm:$0xff]
    %v411 = vld [vmem:[%s2 + $0x1c8] sm:$0xff]
    %v412 = vld [vmem:[%s2 + $0x1d0] sm:$0xff]
    %v413 = vld [vmem:[%s2 + $0x1d8] sm:$0xff]
    %v414 = vld [vmem:[%s2 + $0x1e0] sm:$0xff]
    %v415 = vld [vmem:[%s2 + $0x1e8] sm:$0xff]
    %v416 = vld [vmem:[%s2 + $0x1f0] sm:$0xff]
    %v417 = vld [vmem:[%s2 + $0x1f8] sm:$0xff]
    %v418 = vld [vmem:[#allocation11] sm:$0xff]
    %v419 = vld [vmem:[#allocation11 + $0x8] sm:$0xff]
    %v420 = vld [vmem:[#allocation11 + $0x10] sm:$0xff]
    %v421 = vld [vmem:[#allocation11 + $0x18] sm:$0xff]
    %v422 = vld [vmem:[#allocation11 + $0x20] sm:$0xff]
    %v423 = vld [vmem:[#allocation11 + $0x28] sm:$0xff]
    %v424 = vld [vmem:[#allocation11 + $0x30] sm:$0xff]
    %v425 = vld [vmem:[#allocation11 + $0x38] sm:$0xff]
    %v426 = vld [vmem:[#allocation11 + $0x40] sm:$0xff]
    %v427 = vld [vmem:[#allocation11 + $0x48] sm:$0xff]
    %v428 = vld [vmem:[#allocation11 + $0x50] sm:$0xff]
    %v429 = vld [vmem:[#allocation11 + $0x58] sm:$0xff]
    %v430 = vld [vmem:[#allocation11 + $0x60] sm:$0xff]
    %v431 = vld [vmem:[#allocation11 + $0x68] sm:$0xff]
    %v432 = vld [vmem:[#allocation11 + $0x70] sm:$0xff]
    %v433 = vld [vmem:[#allocation11 + $0x78] sm:$0xff]
    %v434 = vld [vmem:[#allocation11 + $0x80] sm:$0xff]
    %v435 = vld [vmem:[#allocation11 + $0x88] sm:$0xff]
    %v436 = vld [vmem:[#allocation11 + $0x90] sm:$0xff]
    %v437 = vld [vmem:[#allocation11 + $0x98] sm:$0xff]
    %v438 = vld [vmem:[#allocation11 + $0xa0] sm:$0xff]
    %v439 = vld [vmem:[#allocation11 + $0xa8] sm:$0xff]
    %v440 = vld [vmem:[#allocation11 + $0xb0] sm:$0xff]
    %v441 = vld [vmem:[#allocation11 + $0xb8] sm:$0xff]
    %v442 = vld [vmem:[#allocation11 + $0xc0] sm:$0xff]
    %v443 = vld [vmem:[#allocation11 + $0xc8] sm:$0xff]
    %v444 = vld [vmem:[#allocation11 + $0xd0] sm:$0xff]
    %v445 = vld [vmem:[#allocation11 + $0xd8] sm:$0xff]
    %v446 = vld [vmem:[#allocation11 + $0xe0] sm:$0xff]
    %v447 = vld [vmem:[#allocation11 + $0xe8] sm:$0xff]
    %v448 = vld [vmem:[#allocation11 + $0xf0] sm:$0xff]
    %v449 = vld [vmem:[#allocation11 + $0xf8] sm:$0xff]
    %v450 = vld [vmem:[#allocation11 + $0x100] sm:$0xff]
    %v451 = vld [vmem:[#allocation11 + $0x108] sm:$0xff]
    %v452 = vld [vmem:[#allocation11 + $0x110] sm:$0xff]
    %v453 = vld [vmem:[#allocation11 + $0x118] sm:$0xff]
    %v454 = vld [vmem:[#allocation11 + $0x120] sm:$0xff]
    %v455 = vld [vmem:[#allocation11 + $0x128] sm:$0xff]
    %v456 = vld [vmem:[#allocation11 + $0x130] sm:$0xff]
    %v457 = vld [vmem:[#allocation11 + $0x138] sm:$0xff]
    %v458 = vld [vmem:[#allocation11 + $0x140] sm:$0xff]
    %v459 = vld [vmem:[#allocation11 + $0x148] sm:$0xff]
    %v460 = vld [vmem:[#allocation11 + $0x150] sm:$0xff]
    %v461 = vld [vmem:[#allocation11 + $0x158] sm:$0xff]
    %v462 = vld [vmem:[#allocation11 + $0x160] sm:$0xff]
    %v463 = vld [vmem:[#allocation11 + $0x168] sm:$0xff]
    %v464 = vld [vmem:[#allocation11 + $0x170] sm:$0xff]
    %v465 = vld [vmem:[#allocation11 + $0x178] sm:$0xff]
    %v466 = vld [vmem:[#allocation11 + $0x180] sm:$0xff]
    %v467 = vld [vmem:[#allocation11 + $0x188] sm:$0xff]
    %v468 = vld [vmem:[#allocation11 + $0x190] sm:$0xff]
    %v469 = vld [vmem:[#allocation11 + $0x198] sm:$0xff]
    %v470 = vld [vmem:[#allocation11 + $0x1a0] sm:$0xff]
    %v471 = vld [vmem:[#allocation11 + $0x1a8] sm:$0xff]
    %v472 = vld [vmem:[#allocation11 + $0x1b0] sm:$0xff]
    %v473 = vld [vmem:[#allocation11 + $0x1b8] sm:$0xff]
    %v474 = vld [vmem:[#allocation11 + $0x1c0] sm:$0xff]
    %v475 = vld [vmem:[#allocation11 + $0x1c8] sm:$0xff]
    %v476 = vld [vmem:[#allocation11 + $0x1d0] sm:$0xff]
    %v477 = vld [vmem:[#allocation11 + $0x1d8] sm:$0xff]
    %v478 = vld [vmem:[#allocation11 + $0x1e0] sm:$0xff]
    %v479 = vld [vmem:[#allocation11 + $0x1e8] sm:$0xff]
    %v480 = vld [vmem:[#allocation11 + $0x1f0] sm:$0xff]
    %v481 = vld [vmem:[#allocation11 + $0x1f8] sm:$0xff]
    %v482 = vld [vmem:[#allocation12] sm:$0xff]
    %v483 = vld [vmem:[#allocation12 + $0x8] sm:$0xff]
    %v484 = vld [vmem:[#allocation12 + $0x10] sm:$0xff]
    %v485 = vld [vmem:[#allocation12 + $0x18] sm:$0xff]
    %v486 = vld [vmem:[#allocation12 + $0x20] sm:$0xff]
    %v487 = vld [vmem:[#allocation12 + $0x28] sm:$0xff]
    %v488 = vld [vmem:[#allocation12 + $0x30] sm:$0xff]
    %v489 = vld [vmem:[#allocation12 + $0x38] sm:$0xff]
    %v490 = vld [vmem:[#allocation12 + $0x40] sm:$0xff]
    %v491 = vld [vmem:[#allocation12 + $0x48] sm:$0xff]
    %v492 = vld [vmem:[#allocation12 + $0x50] sm:$0xff]
    %v493 = vld [vmem:[#allocation12 + $0x58] sm:$0xff]
    %v494 = vld [vmem:[#allocation12 + $0x60] sm:$0xff]
    %v495 = vld [vmem:[#allocation12 + $0x68] sm:$0xff]
    %v496 = vld [vmem:[#allocation12 + $0x70] sm:$0xff]
    %v497 = vld [vmem:[#allocation12 + $0x78] sm:$0xff]
    %v498 = vld [vmem:[#allocation12 + $0x80] sm:$0xff]
    %v499 = vld [vmem:[#allocation12 + $0x88] sm:$0xff]
    %v500 = vld [vmem:[#allocation12 + $0x90] sm:$0xff]
    %v501 = vld [vmem:[#allocation12 + $0x98] sm:$0xff]
    %v502 = vld [vmem:[#allocation12 + $0xa0] sm:$0xff]
    %v503 = vld [vmem:[#allocation12 + $0xa8] sm:$0xff]
    %v504 = vld [vmem:[#allocation12 + $0xb0] sm:$0xff]
    %v505 = vld [vmem:[#allocation12 + $0xb8] sm:$0xff]
    %v506 = vld [vmem:[#allocation12 + $0xc0] sm:$0xff]
    %v507 = vld [vmem:[#allocation12 + $0xc8] sm:$0xff]
    %v508 = vld [vmem:[#allocation12 + $0xd0] sm:$0xff]
    %v509 = vld [vmem:[#allocation12 + $0xd8] sm:$0xff]
    %v510 = vld [vmem:[#allocation12 + $0xe0] sm:$0xff]
    %v511 = vld [vmem:[#allocation12 + $0xe8] sm:$0xff]
    %v512 = vld [vmem:[#allocation12 + $0xf0] sm:$0xff]
    %v513 = vld [vmem:[#allocation12 + $0xf8] sm:$0xff]
    %v514 = vld [vmem:[#allocation12 + $0x100] sm:$0xff]
    %v515 = vld [vmem:[#allocation12 + $0x108] sm:$0xff]
    %v516 = vld [vmem:[#allocation12 + $0x110] sm:$0xff]
    %v517 = vld [vmem:[#allocation12 + $0x118] sm:$0xff]
    %v518 = vld [vmem:[#allocation12 + $0x120] sm:$0xff]
    %v519 = vld [vmem:[#allocation12 + $0x128] sm:$0xff]
    %v520 = vld [vmem:[#allocation12 + $0x130] sm:$0xff]
    %v521 = vld [vmem:[#allocation12 + $0x138] sm:$0xff]
    %v522 = vld [vmem:[#allocation12 + $0x140] sm:$0xff]
    %v523 = vld [vmem:[#allocation12 + $0x148] sm:$0xff]
    %v524 = vld [vmem:[#allocation12 + $0x150] sm:$0xff]
    %v525 = vld [vmem:[#allocation12 + $0x158] sm:$0xff]
    %v526 = vld [vmem:[#allocation12 + $0x160] sm:$0xff]
    %v527 = vld [vmem:[#allocation12 + $0x168] sm:$0xff]
    %v528 = vld [vmem:[#allocation12 + $0x170] sm:$0xff]
    %v529 = vld [vmem:[#allocation12 + $0x178] sm:$0xff]
    %v530 = vld [vmem:[#allocation12 + $0x180] sm:$0xff]
    %v531 = vld [vmem:[#allocation12 + $0x188] sm:$0xff]
    %v532 = vld [vmem:[#allocation12 + $0x190] sm:$0xff]
    %v533 = vld [vmem:[#allocation12 + $0x198] sm:$0xff]
    %v534 = vld [vmem:[#allocation12 + $0x1a0] sm:$0xff]
    %v535 = vld [vmem:[#allocation12 + $0x1a8] sm:$0xff]
    %v536 = vld [vmem:[#allocation12 + $0x1b0] sm:$0xff]
    %v537 = vld [vmem:[#allocation12 + $0x1b8] sm:$0xff]
    %v538 = vld [vmem:[#allocation12 + $0x1c0] sm:$0xff]
    %v539 = vld [vmem:[#allocation12 + $0x1c8] sm:$0xff]
    %v540 = vld [vmem:[#allocation12 + $0x1d0] sm:$0xff]
    %v541 = vld [vmem:[#allocation12 + $0x1d8] sm:$0xff]
    %v542 = vld [vmem:[#allocation12 + $0x1e0] sm:$0xff]
    %v543 = vld [vmem:[#allocation12 + $0x1e8] sm:$0xff]
    %v544 = vld [vmem:[#allocation12 + $0x1f0] sm:$0xff]
    %v545 = vld [vmem:[#allocation12 + $0x1f8] sm:$0xff]
    %v546 = vld [vmem:[#allocation14] sm:$0xf]
    %547 = vmatprep.subr.mxu0 %v355
    %548 = vmatpush1.msra.mxu0 %v354
    %549 = vmatprep.subr.mxu0 %v359
    %550 = vmatpush1.msra.mxu0 %v358
    %551 = vmatprep.subr.mxu0 %v363
    %552 = vmatpush1.msra.mxu0 %v362
    %553 = vmatprep.subr.mxu0 %v367
    %554 = vmatpush1.msra.mxu0 %v366
    %555 = vmatprep.subr.mxu0 %v371
    %556 = vmatpush1.msra.mxu0 %v370
    %557 = vmatprep.subr.mxu0 %v375
    %558 = vmatpush1.msra.mxu0 %v374
    %559 = vmatprep.subr.mxu0 %v379
    %560 = vmatpush1.msra.mxu0 %v378
    %561 = vmatprep.subr.mxu0 %v383
    %562 = vmatpush1.msra.mxu0 %v382
    %563 = vmatprep.subr.mxu0 %v387
    %564 = vmatpush1.msra.mxu0 %v386
    %565 = vmatprep.subr.mxu0 %v391
    %566 = vmatpush1.msra.mxu0 %v390
    %567 = vmatprep.subr.mxu0 %v395
    %568 = vmatpush1.msra.mxu0 %v394
    %569 = vmatprep.subr.mxu0 %v399
    %570 = vmatpush1.msra.mxu0 %v398
    %571 = vmatprep.subr.mxu0 %v403
    %572 = vmatpush1.msra.mxu0 %v402
    %573 = vmatprep.subr.mxu0 %v407
    %574 = vmatpush1.msra.mxu0 %v406
    %575 = vmatprep.subr.mxu0 %v411
    %576 = vmatpush1.msra.mxu0 %v410
    %577 = vmatprep.subr.mxu0 %v415
    %578 = vmatpush1.msra.mxu0 %v414
    %579 = vmatprep.subr.mxu0 0.0
    %580 = vmatpush1.msra.mxu0 0.0
    %581 = vmatprep.subr.mxu0 0.0
    %582 = vmatpush1.msra.mxu0 0.0
    %583 = vmatprep.subr.mxu0 0.0
    %584 = vmatpush1.msra.mxu0 0.0
    %585 = vmatprep.subr.mxu0 0.0
    %586 = vmatpush1.msra.mxu0 0.0
    %587 = vmatprep.subr.mxu0 0.0
    %588 = vmatpush1.msra.mxu0 0.0
    %589 = vmatprep.subr.mxu0 0.0
    %590 = vmatpush1.msra.mxu0 0.0
    %591 = vmatprep.subr.mxu0 0.0
    %592 = vmatpush1.msra.mxu0 0.0
    %593 = vmatprep.subr.mxu0 0.0
    %594 = vmatpush1.msra.mxu0 0.0
    %595 = vmatprep.subr.mxu0 0.0
    %596 = vmatpush1.msra.mxu0 0.0
    %597 = vmatprep.subr.mxu0 0.0
    %598 = vmatpush1.msra.mxu0 0.0
    %599 = vmatprep.subr.mxu0 0.0
    %600 = vmatpush1.msra.mxu0 0.0
    %601 = vmatprep.subr.mxu0 0.0
    %602 = vmatpush1.msra.mxu0 0.0
    %603 = vmatprep.subr.mxu0 0.0
    %604 = vmatpush1.msra.mxu0 0.0
    %605 = vmatprep.subr.mxu0 0.0
    %606 = vmatpush1.msra.mxu0 0.0
    %607 = vmatprep.subr.mxu0 0.0
    %608 = vmatpush1.msra.mxu0 0.0
    %609 = vmatprep.subr.mxu0 0.0
    %610 = vmatpush1.msra.mxu0 0.0
    %611 = vmatprep.mubr.f32.mxu0 0.0
    %612 = vmatmul.mubr.f32.gmra.mrb[0].mxu0 0.0
    %v613 = vpop.f32.mrb[0].mxu0
    %v614 = vadd.f32 0.0, %v613
    %v615 = vpop.f32.mrb[0].mxu0
    %v616 = vadd.f32 0.0, %v615
    %617 = vdwg.mxu0
    %618 = vmatprep.subr.mxu0 %v357
    %619 = vmatpush1.msra.mxu0 %v356
    %620 = vmatprep.subr.mxu0 %v361
    %621 = vmatpush1.msra.mxu0 %v360
    %622 = vmatprep.subr.mxu0 %v365
    %623 = vmatpush1.msra.mxu0 %v364
    %624 = vmatprep.subr.mxu0 %v369
    %625 = vmatpush1.msra.mxu0 %v368
    %626 = vmatprep.subr.mxu0 %v373
    %627 = vmatpush1.msra.mxu0 %v372
    %628 = vmatprep.subr.mxu0 %v377
    %629 = vmatpush1.msra.mxu0 %v376
    %630 = vmatprep.subr.mxu0 %v381
    %631 = vmatpush1.msra.mxu0 %v380
    %632 = vmatprep.subr.mxu0 %v385
    %633 = vmatpush1.msra.mxu0 %v384
    %634 = vmatprep.subr.mxu0 %v389
    %635 = vmatpush1.msra.mxu0 %v388
    %636 = vmatprep.subr.mxu0 %v393
    %637 = vmatpush1.msra.mxu0 %v392
    %638 = vmatprep.subr.mxu0 %v397
    %639 = vmatpush1.msra.mxu0 %v396
    %640 = vmatprep.subr.mxu0 %v401
    %641 = vmatpush1.msra.mxu0 %v400
    %642 = vmatprep.subr.mxu0 %v405
    %643 = vmatpush1.msra.mxu0 %v404
    %644 = vmatprep.subr.mxu0 %v409
    %645 = vmatpush1.msra.mxu0 %v408
    %646 = vmatprep.subr.mxu0 %v413
    %647 = vmatpush1.msra.mxu0 %v412
    %648 = vmatprep.subr.mxu0 %v417
    %649 = vmatpush1.msra.mxu0 %v416
    %650 = vmatprep.subr.mxu0 0.0
    %651 = vmatpush1.msra.mxu0 0.0
    %652 = vmatprep.subr.mxu0 0.0
    %653 = vmatpush1.msra.mxu0 0.0
    %654 = vmatprep.subr.mxu0 0.0
    %655 = vmatpush1.msra.mxu0 0.0
    %656 = vmatprep.subr.mxu0 0.0
    %657 = vmatpush1.msra.mxu0 0.0
    %658 = vmatprep.subr.mxu0 0.0
    %659 = vmatpush1.msra.mxu0 0.0
    %660 = vmatprep.subr.mxu0 0.0
    %661 = vmatpush1.msra.mxu0 0.0
    %662 = vmatprep.subr.mxu0 0.0
    %663 = vmatpush1.msra.mxu0 0.0
    %664 = vmatprep.subr.mxu0 0.0
    %665 = vmatpush1.msra.mxu0 0.0
    %666 = vmatprep.subr.mxu0 0.0
    %667 = vmatpush1.msra.mxu0 0.0
    %668 = vmatprep.subr.mxu0 0.0
    %669 = vmatpush1.msra.mxu0 0.0
    %670 = vmatprep.subr.mxu0 0.0
    %671 = vmatpush1.msra.mxu0 0.0
    %672 = vmatprep.subr.mxu0 0.0
    %673 = vmatpush1.msra.mxu0 0.0
    %674 = vmatprep.subr.mxu0 0.0
    %675 = vmatpush1.msra.mxu0 0.0
    %676 = vmatprep.subr.mxu0 0.0
    %677 = vmatpush1.msra.mxu0 0.0
    %678 = vmatprep.subr.mxu0 0.0
    %679 = vmatpush1.msra.mxu0 0.0
    %680 = vmatprep.subr.mxu0 0.0
    %681 = vmatpush1.msra.mxu0 0.0
    %682 = vmatprep.mubr.f32.mxu0 0.0
    %683 = vmatmul.mubr.f32.gmra.mrb[0].mxu0 0.0
    %v684 = vpop.f32.mrb[0].mxu0
    %v685 = vadd.f32 0.0, %v684
    %v686 = vpop.f32.mrb[0].mxu0
    %v687 = vadd.f32 0.0, %v686
    %688 = vdwg.mxu0
    %v689 = vadd.f32 %v267, %v614
    %v690 = vadd.f32 %v269, %v616
    %v691 = vadd.f32 %v344, %v685
    %v692 = vadd.f32 %v346, %v687
    %v693 = vxor.u32 %v689, 2147483648
    %v694 = vxor.u32 %v690, 2147483648
    %v695 = vxor.u32 %v691, 2147483648
    %v696 = vmul.f32 %v693, 1.442695
    %v697 = vpow.pop %v696
    %v698 = vmul.f32 %v694, 1.442695
    %v699 = vpow.pop %v698
    %v700 = vmul.f32 %v695, 1.442695
    %v701 = vpow.pop %v700
    %v702 = vadd.f32 %v697, 1.0
    %v703 = vadd.f32 %v699, 1.0
    %v704 = vadd.f32 %v701, 1.0
    %v705 = vrcp.pop %v702
    %v706 = vmul.f32 1.0, %v705
    %v707 = vrcp.pop %v703
    %v708 = vmul.f32 1.0, %v707
    %v709 = vrcp.pop %v704
    %v710 = vmul.f32 1.0, %v709
    %v711 = vtanh.pop %v692
    %v712 = vmul.f32 %v708, 0.0
    %v713 = vmul.f32 %v706, %v711
    %v714 = vadd.f32 %v712, %v713
    %v715 = vtanh.pop %v714
    %v716 = vmul.f32 %v710, %v715
    %717 = vmatprep.subr.mxu0 %v483
    %718 = vmatpush1.msra.mxu0 %v482
    %719 = vmatprep.subr.mxu0 %v487
    %720 = vmatpush1.msra.mxu0 %v486
    %721 = vmatprep.subr.mxu0 %v491
    %722 = vmatpush1.msra.mxu0 %v490
    %723 = vmatprep.subr.mxu0 %v495
    %724 = vmatpush1.msra.mxu0 %v494
    %725 = vmatprep.subr.mxu0 %v499
    %726 = vmatpush1.msra.mxu0 %v498
    %727 = vmatprep.subr.mxu0 %v503
    %728 = vmatpush1.msra.mxu0 %v502
    %729 = vmatprep.subr.mxu0 %v507
    %730 = vmatpush1.msra.mxu0 %v506
    %731 = vmatprep.subr.mxu0 %v511
    %732 = vmatpush1.msra.mxu0 %v510
    %733 = vmatprep.subr.mxu0 %v515
    %734 = vmatpush1.msra.mxu0 %v514
    %735 = vmatprep.subr.mxu0 %v519
    %736 = vmatpush1.msra.mxu0 %v518
    %737 = vmatprep.subr.mxu0 %v523
    %738 = vmatpush1.msra.mxu0 %v522
    %739 = vmatprep.subr.mxu0 %v527
    %740 = vmatpush1.msra.mxu0 %v526
    %741 = vmatprep.subr.mxu0 %v531
    %742 = vmatpush1.msra.mxu0 %v530
    %743 = vmatprep.subr.mxu0 %v535
    %744 = vmatpush1.msra.mxu0 %v534
    %745 = vmatprep.subr.mxu0 %v539
    %746 = vmatpush1.msra.mxu0 %v538
    %747 = vmatprep.subr.mxu0 %v543
    %748 = vmatpush1.msra.mxu0 %v542
    %749 = vmatprep.subr.mxu0 0.0
    %750 = vmatpush1.msra.mxu0 0.0
    %751 = vmatprep.subr.mxu0 0.0
    %752 = vmatpush1.msra.mxu0 0.0
    %753 = vmatprep.subr.mxu0 0.0
    %754 = vmatpush1.msra.mxu0 0.0
    %755 = vmatprep.subr.mxu0 0.0
    %756 = vmatpush1.msra.mxu0 0.0
    %757 = vmatprep.subr.mxu0 0.0
    %758 = vmatpush1.msra.mxu0 0.0
    %759 = vmatprep.subr.mxu0 0.0
    %760 = vmatpush1.msra.mxu0 0.0
    %761 = vmatprep.subr.mxu0 0.0
    %762 = vmatpush1.msra.mxu0 0.0
    %763 = vmatprep.subr.mxu0 0.0
    %764 = vmatpush1.msra.mxu0 0.0
    %765 = vmatprep.subr.mxu0 0.0
    %766 = vmatpush1.msra.mxu0 0.0
    %767 = vmatprep.subr.mxu0 0.0
    %768 = vmatpush1.msra.mxu0 0.0
    %769 = vmatprep.subr.mxu0 0.0
    %770 = vmatpush1.msra.mxu0 0.0
    %771 = vmatprep.subr.mxu0 0.0
    %772 = vmatpush1.msra.mxu0 0.0
    %773 = vmatprep.subr.mxu0 0.0
    %774 = vmatpush1.msra.mxu0 0.0
    %775 = vmatprep.subr.mxu0 0.0
    %776 = vmatpush1.msra.mxu0 0.0
    %777 = vmatprep.subr.mxu0 0.0
    %778 = vmatpush1.msra.mxu0 0.0
    %779 = vmatprep.subr.mxu0 0.0
    %780 = vmatpush1.msra.mxu0 0.0
    %781 = vmatprep.mubr.f32.mxu0 0.0
    %782 = vmatmul.mubr.f32.gmra.mrb[0].mxu0 0.0
    %v783 = vpop.f32.mrb[0].mxu0
    %v784 = vadd.f32 0.0, %v783
    %v785 = vpop.f32.mrb[0].mxu0
    %v786 = vadd.f32 0.0, %v785
    %787 = vdwg.mxu0
    %788 = vmatprep.subr.mxu0 %v485
    %789 = vmatpush1.msra.mxu0 %v484
    %790 = vmatprep.subr.mxu0 %v489
    %791 = vmatpush1.msra.mxu0 %v488
    %792 = vmatprep.subr.mxu0 %v493
    %793 = vmatpush1.msra.mxu0 %v492
    %794 = vmatprep.subr.mxu0 %v497
    %795 = vmatpush1.msra.mxu0 %v496
    %796 = vmatprep.subr.mxu0 %v501
    %797 = vmatpush1.msra.mxu0 %v500
    %798 = vmatprep.subr.mxu0 %v505
    %799 = vmatpush1.msra.mxu0 %v504
    %800 = vmatprep.subr.mxu0 %v509
    %801 = vmatpush1.msra.mxu0 %v508
    %802 = vmatprep.subr.mxu0 %v513
    %803 = vmatpush1.msra.mxu0 %v512
    %804 = vmatprep.subr.mxu0 %v517
    %805 = vmatpush1.msra.mxu0 %v516
    %806 = vmatprep.subr.mxu0 %v521
    %807 = vmatpush1.msra.mxu0 %v520
    %808 = vmatprep.subr.mxu0 %v525
    %809 = vmatpush1.msra.mxu0 %v524
    %810 = vmatprep.subr.mxu0 %v529
    %811 = vmatpush1.msra.mxu0 %v528
    %812 = vmatprep.subr.mxu0 %v533
    %813 = vmatpush1.msra.mxu0 %v532
    %814 = vmatprep.subr.mxu0 %v537
    %815 = vmatpush1.msra.mxu0 %v536
    %816 = vmatprep.subr.mxu0 %v541
    %817 = vmatpush1.msra.mxu0 %v540
    %818 = vmatprep.subr.mxu0 %v545
    %819 = vmatpush1.msra.mxu0 %v544
    %820 = vmatprep.subr.mxu0 0.0
    %821 = vmatpush1.msra.mxu0 0.0
    %822 = vmatprep.subr.mxu0 0.0
    %823 = vmatpush1.msra.mxu0 0.0
    %824 = vmatprep.subr.mxu0 0.0
    %825 = vmatpush1.msra.mxu0 0.0
    %826 = vmatprep.subr.mxu0 0.0
    %827 = vmatpush1.msra.mxu0 0.0
    %828 = vmatprep.subr.mxu0 0.0
    %829 = vmatpush1.msra.mxu0 0.0
    %830 = vmatprep.subr.mxu0 0.0
    %831 = vmatpush1.msra.mxu0 0.0
    %832 = vmatprep.subr.mxu0 0.0
    %833 = vmatpush1.msra.mxu0 0.0
    %834 = vmatprep.subr.mxu0 0.0
    %835 = vmatpush1.msra.mxu0 0.0
    %836 = vmatprep.subr.mxu0 0.0
    %837 = vmatpush1.msra.mxu0 0.0
    %838 = vmatprep.subr.mxu0 0.0
    %839 = vmatpush1.msra.mxu0 0.0
    %840 = vmatprep.subr.mxu0 0.0
    %841 = vmatpush1.msra.mxu0 0.0
    %842 = vmatprep.subr.mxu0 0.0
    %843 = vmatpush1.msra.mxu0 0.0
    %844 = vmatprep.subr.mxu0 0.0
    %845 = vmatpush1.msra.mxu0 0.0
    %846 = vmatprep.subr.mxu0 0.0
    %847 = vmatpush1.msra.mxu0 0.0
    %848 = vmatprep.subr.mxu0 0.0
    %849 = vmatpush1.msra.mxu0 0.0
    %850 = vmatprep.subr.mxu0 0.0
    %851 = vmatpush1.msra.mxu0 0.0
    %852 = vmatprep.mubr.f32.mxu0 0.0
    %853 = vmatmul.mubr.f32.gmra.mrb[0].mxu0 0.0
    %v854 = vpop.f32.mrb[0].mxu0
    %v855 = vadd.f32 0.0, %v854
    %v856 = vpop.f32.mrb[0].mxu0
    %v857 = vadd.f32 0.0, %v856
    %858 = vdwg.mxu0
    %859 = vmatprep.subr.mxu0 %v419
    %860 = vmatpush1.msra.mxu0 %v418
    %861 = vmatprep.subr.mxu0 %v423
    %862 = vmatpush1.msra.mxu0 %v422
    %863 = vmatprep.subr.mxu0 %v427
    %864 = vmatpush1.msra.mxu0 %v426
    %865 = vmatprep.subr.mxu0 %v431
    %866 = vmatpush1.msra.mxu0 %v430
    %867 = vmatprep.subr.mxu0 %v435
    %868 = vmatpush1.msra.mxu0 %v434
    %869 = vmatprep.subr.mxu0 %v439
    %870 = vmatpush1.msra.mxu0 %v438
    %871 = vmatprep.subr.mxu0 %v443
    %872 = vmatpush1.msra.mxu0 %v442
    %873 = vmatprep.subr.mxu0 %v447
    %874 = vmatpush1.msra.mxu0 %v446
    %875 = vmatprep.subr.mxu0 %v451
    %876 = vmatpush1.msra.mxu0 %v450
    %877 = vmatprep.subr.mxu0 %v455
    %878 = vmatpush1.msra.mxu0 %v454
    %879 = vmatprep.subr.mxu0 %v459
    %880 = vmatpush1.msra.mxu0 %v458
    %881 = vmatprep.subr.mxu0 %v463
    %882 = vmatpush1.msra.mxu0 %v462
    %883 = vmatprep.subr.mxu0 %v467
    %884 = vmatpush1.msra.mxu0 %v466
    %885 = vmatprep.subr.mxu0 %v471
    %886 = vmatpush1.msra.mxu0 %v470
    %887 = vmatprep.subr.mxu0 %v475
    %888 = vmatpush1.msra.mxu0 %v474
    %889 = vmatprep.subr.mxu0 %v479
    %890 = vmatpush1.msra.mxu0 %v478
    %891 = vmatprep.subr.mxu0 0.0
    %892 = vmatpush1.msra.mxu0 0.0
    %893 = vmatprep.subr.mxu0 0.0
    %894 = vmatpush1.msra.mxu0 0.0
    %895 = vmatprep.subr.mxu0 0.0
    %896 = vmatpush1.msra.mxu0 0.0
    %897 = vmatprep.subr.mxu0 0.0
    %898 = vmatpush1.msra.mxu0 0.0
    %899 = vmatprep.subr.mxu0 0.0
    %900 = vmatpush1.msra.mxu0 0.0
    %901 = vmatprep.subr.mxu0 0.0
    %902 = vmatpush1.msra.mxu0 0.0
    %903 = vmatprep.subr.mxu0 0.0
    %904 = vmatpush1.msra.mxu0 0.0
    %905 = vmatprep.subr.mxu0 0.0
    %906 = vmatpush1.msra.mxu0 0.0
    %907 = vmatprep.subr.mxu0 0.0
    %908 = vmatpush1.msra.mxu0 0.0
    %909 = vmatprep.subr.mxu0 0.0
    %910 = vmatpush1.msra.mxu0 0.0
    %911 = vmatprep.subr.mxu0 0.0
    %912 = vmatpush1.msra.mxu0 0.0
    %913 = vmatprep.subr.mxu0 0.0
    %914 = vmatpush1.msra.mxu0 0.0
    %915 = vmatprep.subr.mxu0 0.0
    %916 = vmatpush1.msra.mxu0 0.0
    %917 = vmatprep.subr.mxu0 0.0
    %918 = vmatpush1.msra.mxu0 0.0
    %919 = vmatprep.subr.mxu0 0.0
    %920 = vmatpush1.msra.mxu0 0.0
    %921 = vmatprep.subr.mxu0 0.0
    %922 = vmatpush1.msra.mxu0 0.0
    %923 = vmatprep.mubr.f32.mxu0 0.0
    %924 = vmatmul.mubr.f32.gmra.mrb[0].mxu0 %v716
    %v925 = vpop.f32.mrb[0].mxu0
    %v926 = vadd.f32 %v784, %v925
    %v927 = vpop.f32.mrb[0].mxu0
    %v928 = vadd.f32 %v786, %v927
    %929 = vdwg.mxu0
    %930 = vmatprep.subr.mxu0 %v421
    %931 = vmatpush1.msra.mxu0 %v420
    %932 = vmatprep.subr.mxu0 %v425
    %933 = vmatpush1.msra.mxu0 %v424
    %934 = vmatprep.subr.mxu0 %v429
    %935 = vmatpush1.msra.mxu0 %v428
    %936 = vmatprep.subr.mxu0 %v433
    %937 = vmatpush1.msra.mxu0 %v432
    %938 = vmatprep.subr.mxu0 %v437
    %939 = vmatpush1.msra.mxu0 %v436
    %940 = vmatprep.subr.mxu0 %v441
    %941 = vmatpush1.msra.mxu0 %v440
    %942 = vmatprep.subr.mxu0 %v445
    %943 = vmatpush1.msra.mxu0 %v444
    %944 = vmatprep.subr.mxu0 %v449
    %945 = vmatpush1.msra.mxu0 %v448
    %946 = vmatprep.subr.mxu0 %v453
    %947 = vmatpush1.msra.mxu0 %v452
    %948 = vmatprep.subr.mxu0 %v457
    %949 = vmatpush1.msra.mxu0 %v456
    %950 = vmatprep.subr.mxu0 %v461
    %951 = vmatpush1.msra.mxu0 %v460
    %952 = vmatprep.subr.mxu0 %v465
    %953 = vmatpush1.msra.mxu0 %v464
    %954 = vmatprep.subr.mxu0 %v469
    %955 = vmatpush1.msra.mxu0 %v468
    %956 = vmatprep.subr.mxu0 %v473
    %957 = vmatpush1.msra.mxu0 %v472
    %958 = vmatprep.subr.mxu0 %v477
    %959 = vmatpush1.msra.mxu0 %v476
    %960 = vmatprep.subr.mxu0 %v481
    %961 = vmatpush1.msra.mxu0 %v480
    %962 = vmatprep.subr.mxu0 0.0
    %963 = vmatpush1.msra.mxu0 0.0
    %964 = vmatprep.subr.mxu0 0.0
    %965 = vmatpush1.msra.mxu0 0.0
    %966 = vmatprep.subr.mxu0 0.0
    %967 = vmatpush1.msra.mxu0 0.0
    %968 = vmatprep.subr.mxu0 0.0
    %969 = vmatpush1.msra.mxu0 0.0
    %970 = vmatprep.subr.mxu0 0.0
    %971 = vmatpush1.msra.mxu0 0.0
    %972 = vmatprep.subr.mxu0 0.0
    %973 = vmatpush1.msra.mxu0 0.0
    %974 = vmatprep.subr.mxu0 0.0
    %975 = vmatpush1.msra.mxu0 0.0
    %976 = vmatprep.subr.mxu0 0.0
    %977 = vmatpush1.msra.mxu0 0.0
    %978 = vmatprep.subr.mxu0 0.0
    %979 = vmatpush1.msra.mxu0 0.0
    %980 = vmatprep.subr.mxu0 0.0
    %981 = vmatpush1.msra.mxu0 0.0
    %982 = vmatprep.subr.mxu0 0.0
    %983 = vmatpush1.msra.mxu0 0.0
    %984 = vmatprep.subr.mxu0 0.0
    %985 = vmatpush1.msra.mxu0 0.0
    %986 = vmatprep.subr.mxu0 0.0
    %987 = vmatpush1.msra.mxu0 0.0
    %988 = vmatprep.subr.mxu0 0.0
    %989 = vmatpush1.msra.mxu0 0.0
    %990 = vmatprep.subr.mxu0 0.0
    %991 = vmatpush1.msra.mxu0 0.0
    %992 = vmatprep.subr.mxu0 0.0
    %993 = vmatpush1.msra.mxu0 0.0
    %994 = vmatprep.mubr.f32.mxu0 0.0
    %995 = vmatmul.mubr.f32.gmra.mrb[0].mxu0 %v716
    %v996 = vpop.f32.mrb[0].mxu0
    %v997 = vadd.f32 %v855, %v996
    %v998 = vpop.f32.mrb[0].mxu0
    %v999 = vadd.f32 %v857, %v998
    %1000 = vdwg.mxu0
    %v1002 = vlaneseq
    %v1003 = vshrl.u32 %v1002, 7
    %v1004 = vsub.s32 0, %v1003
    %v1005 = vrot.slane %v546, %v1004
    %v1006 = vlaneseq
    %v1007 = vshrl.u32 %v1006, 7
    %v1008 = vsub.s32 1, %v1007
    %v1009 = vrot.slane %v546, %v1008
    %v1010 = vlaneseq
    %v1011 = vshrl.u32 %v1010, 7
    %v1012 = vsub.s32 2, %v1011
    %v1013 = vrot.slane %v546, %v1012
    %v1014 = vlaneseq
    %v1015 = vshrl.u32 %v1014, 7
    %v1016 = vsub.s32 3, %v1015
    %v1017 = vrot.slane %v546, %v1016
    %v1022 = vadd.f32 %v926, %v1005
    %v1023 = vadd.f32 %v928, %v1009
    %v1024 = vadd.f32 %v997, %v1013
    %v1025 = vadd.f32 %v999, %v1017
    %v1026 = vxor.u32 %v1022, 2147483648
    %v1027 = vxor.u32 %v1023, 2147483648
    %v1028 = vxor.u32 %v1024, 2147483648
    %v1029 = vmul.f32 %v1026, 1.442695
    %v1030 = vpow.pop %v1029
    %v1031 = vmul.f32 %v1027, 1.442695
    %v1032 = vpow.pop %v1031
    %v1033 = vmul.f32 %v1028, 1.442695
    %v1034 = vpow.pop %v1033
    %v1035 = vadd.f32 %v1030, 1.0
    %v1036 = vadd.f32 %v1032, 1.0
    %v1037 = vadd.f32 %v1034, 1.0
    %v1038 = vrcp.pop %v1035
    %v1039 = vmul.f32 1.0, %v1038
    %v1040 = vrcp.pop %v1036
    %v1041 = vmul.f32 1.0, %v1040
    %v1042 = vrcp.pop %v1037
    %v1043 = vmul.f32 1.0, %v1042
    %v1044 = vtanh.pop %v1025
    %v1045 = vmul.f32 %v1041, 0.0
    %v1046 = vmul.f32 %v1039, %v1044
    %v1047 = vadd.f32 %v1045, %v1046
    %v1048 = vtanh.pop %v1047
    %v1049 = vmul.f32 %v1043, %v1048
    %1050 = vst [vmem:[#allocation2] sm:$0x3] %v1049
    %1051 = vmatprep.subr.mxu0 %v355
    %1052 = vmatpush1.msra.mxu0 %v354
    %1053 = vmatprep.subr.mxu0 %v359
    %1054 = vmatpush1.msra.mxu0 %v358
    %1055 = vmatprep.subr.mxu0 %v363
    %1056 = vmatpush1.msra.mxu0 %v362
    %1057 = vmatprep.subr.mxu0 %v367
    %1058 = vmatpush1.msra.mxu0 %v366
    %1059 = vmatprep.subr.mxu0 %v371
    %1060 = vmatpush1.msra.mxu0 %v370
    %1061 = vmatprep.subr.mxu0 %v375
    %1062 = vmatpush1.msra.mxu0 %v374
    %1063 = vmatprep.subr.mxu0 %v379
    %1064 = vmatpush1.msra.mxu0 %v378
    %1065 = vmatprep.subr.mxu0 %v383
    %1066 = vmatpush1.msra.mxu0 %v382
    %1067 = vmatprep.subr.mxu0 %v387
    %1068 = vmatpush1.msra.mxu0 %v386
    %1069 = vmatprep.subr.mxu0 %v391
    %1070 = vmatpush1.msra.mxu0 %v390
    %1071 = vmatprep.subr.mxu0 %v395
    %1072 = vmatpush1.msra.mxu0 %v394
    %1073 = vmatprep.subr.mxu0 %v399
    %1074 = vmatpush1.msra.mxu0 %v398
    %1075 = vmatprep.subr.mxu0 %v403
    %1076 = vmatpush1.msra.mxu0 %v402
    %1077 = vmatprep.subr.mxu0 %v407
    %1078 = vmatpush1.msra.mxu0 %v406
    %1079 = vmatprep.subr.mxu0 %v411
    %1080 = vmatpush1.msra.mxu0 %v410
    %1081 = vmatprep.subr.mxu0 %v415
    %1082 = vmatpush1.msra.mxu0 %v414
    %1083 = vmatprep.subr.mxu0 0.0
    %1084 = vmatpush1.msra.mxu0 0.0
    %1085 = vmatprep.subr.mxu0 0.0
    %1086 = vmatpush1.msra.mxu0 0.0
    %1087 = vmatprep.subr.mxu0 0.0
    %1088 = vmatpush1.msra.mxu0 0.0
    %1089 = vmatprep.subr.mxu0 0.0
    %1090 = vmatpush1.msra.mxu0 0.0
    %1091 = vmatprep.subr.mxu0 0.0
    %1092 = vmatpush1.msra.mxu0 0.0
    %1093 = vmatprep.subr.mxu0 0.0
    %1094 = vmatpush1.msra.mxu0 0.0
    %1095 = vmatprep.subr.mxu0 0.0
    %1096 = vmatpush1.msra.mxu0 0.0
    %1097 = vmatprep.subr.mxu0 0.0
    %1098 = vmatpush1.msra.mxu0 0.0
    %1099 = vmatprep.subr.mxu0 0.0
    %1100 = vmatpush1.msra.mxu0 0.0
    %1101 = vmatprep.subr.mxu0 0.0
    %1102 = vmatpush1.msra.mxu0 0.0
    %1103 = vmatprep.subr.mxu0 0.0
    %1104 = vmatpush1.msra.mxu0 0.0
    %1105 = vmatprep.subr.mxu0 0.0
    %1106 = vmatpush1.msra.mxu0 0.0
    %1107 = vmatprep.subr.mxu0 0.0
    %1108 = vmatpush1.msra.mxu0 0.0
    %1109 = vmatprep.subr.mxu0 0.0
    %1110 = vmatpush1.msra.mxu0 0.0
    %1111 = vmatprep.subr.mxu0 0.0
    %1112 = vmatpush1.msra.mxu0 0.0
    %1113 = vmatprep.subr.mxu0 0.0
    %1114 = vmatpush1.msra.mxu0 0.0
    %1115 = vmatprep.mubr.f32.mxu0 0.0
    %1116 = vmatmul.mubr.f32.gmra.mrb[0].mxu0 %v716
    %v1117 = vpop.f32.mrb[0].mxu0
    %v1118 = vadd.f32 0.0, %v1117
    %v1119 = vpop.f32.mrb[0].mxu0
    %v1120 = vadd.f32 0.0, %v1119
    %1121 = vdwg.mxu0
    %1122 = vmatprep.subr.mxu0 %v357
    %1123 = vmatpush1.msra.mxu0 %v356
    %1124 = vmatprep.subr.mxu0 %v361
    %1125 = vmatpush1.msra.mxu0 %v360
    %1126 = vmatprep.subr.mxu0 %v365
    %1127 = vmatpush1.msra.mxu0 %v364
    %1128 = vmatprep.subr.mxu0 %v369
    %1129 = vmatpush1.msra.mxu0 %v368
    %1130 = vmatprep.subr.mxu0 %v373
    %1131 = vmatpush1.msra.mxu0 %v372
    %1132 = vmatprep.subr.mxu0 %v377
    %1133 = vmatpush1.msra.mxu0 %v376
    %1134 = vmatprep.subr.mxu0 %v381
    %1135 = vmatpush1.msra.mxu0 %v380
    %1136 = vmatprep.subr.mxu0 %v385
    %1137 = vmatpush1.msra.mxu0 %v384
    %1138 = vmatprep.subr.mxu0 %v389
    %1139 = vmatpush1.msra.mxu0 %v388
    %1140 = vmatprep.subr.mxu0 %v393
    %1141 = vmatpush1.msra.mxu0 %v392
    %1142 = vmatprep.subr.mxu0 %v397
    %1143 = vmatpush1.msra.mxu0 %v396
    %1144 = vmatprep.subr.mxu0 %v401
    %1145 = vmatpush1.msra.mxu0 %v400
    %1146 = vmatprep.subr.mxu0 %v405
    %1147 = vmatpush1.msra.mxu0 %v404
    %1148 = vmatprep.subr.mxu0 %v409
    %1149 = vmatpush1.msra.mxu0 %v408
    %1150 = vmatprep.subr.mxu0 %v413
    %1151 = vmatpush1.msra.mxu0 %v412
    %1152 = vmatprep.subr.mxu0 %v417
    %1153 = vmatpush1.msra.mxu0 %v416
    %1154 = vmatprep.subr.mxu0 0.0
    %1155 = vmatpush1.msra.mxu0 0.0
    %1156 = vmatprep.subr.mxu0 0.0
    %1157 = vmatpush1.msra.mxu0 0.0
    %1158 = vmatprep.subr.mxu0 0.0
    %1159 = vmatpush1.msra.mxu0 0.0
    %1160 = vmatprep.subr.mxu0 0.0
    %1161 = vmatpush1.msra.mxu0 0.0
    %1162 = vmatprep.subr.mxu0 0.0
    %1163 = vmatpush1.msra.mxu0 0.0
    %1164 = vmatprep.subr.mxu0 0.0
    %1165 = vmatpush1.msra.mxu0 0.0
    %1166 = vmatprep.subr.mxu0 0.0
    %1167 = vmatpush1.msra.mxu0 0.0
    %1168 = vmatprep.subr.mxu0 0.0
    %1169 = vmatpush1.msra.mxu0 0.0
    %1170 = vmatprep.subr.mxu0 0.0
    %1171 = vmatpush1.msra.mxu0 0.0
    %1172 = vmatprep.subr.mxu0 0.0
    %1173 = vmatpush1.msra.mxu0 0.0
    %1174 = vmatprep.subr.mxu0 0.0
    %1175 = vmatpush1.msra.mxu0 0.0
    %1176 = vmatprep.subr.mxu0 0.0
    %1177 = vmatpush1.msra.mxu0 0.0
    %1178 = vmatprep.subr.mxu0 0.0
    %1179 = vmatpush1.msra.mxu0 0.0
    %1180 = vmatprep.subr.mxu0 0.0
    %1181 = vmatpush1.msra.mxu0 0.0
    %1182 = vmatprep.subr.mxu0 0.0
    %1183 = vmatpush1.msra.mxu0 0.0
    %1184 = vmatprep.subr.mxu0 0.0
    %1185 = vmatpush1.msra.mxu0 0.0
    %1186 = vmatprep.mubr.f32.mxu0 0.0
    %1187 = vmatmul.mubr.f32.gmra.mrb[0].mxu0 %v716
    %v1188 = vpop.f32.mrb[0].mxu0
    %v1189 = vadd.f32 0.0, %v1188
    %v1190 = vpop.f32.mrb[0].mxu0
    %v1191 = vadd.f32 0.0, %v1190
    %1192 = vdwg.mxu0
    %v1197 = vrot.slane %v1118, 6
    %v1198 = vrot.slane %v1120, 6
    %v1199 = vrot.slane %v1189, 6
    %v1200 = vrot.slane %v1191, 6
    %v1205 = vadd.f32 %v267, %v1197
    %v1206 = vadd.f32 %v269, %v1198
    %v1207 = vadd.f32 %v344, %v1199
    %v1208 = vadd.f32 %v346, %v1200
    %v1209 = vxor.u32 %v1205, 2147483648
    %v1210 = vxor.u32 %v1206, 2147483648
    %v1211 = vxor.u32 %v1207, 2147483648
    %v1212 = vmul.f32 %v1209, 1.442695
    %v1213 = vpow.pop %v1212
    %v1214 = vmul.f32 %v1210, 1.442695
    %v1215 = vpow.pop %v1214
    %v1216 = vmul.f32 %v1211, 1.442695
    %v1217 = vpow.pop %v1216
    %v1218 = vadd.f32 %v1213, 1.0
    %v1219 = vadd.f32 %v1215, 1.0
    %v1220 = vadd.f32 %v1217, 1.0
    %v1221 = vrcp.pop %v1218
    %v1222 = vmul.f32 1.0, %v1221
    %v1223 = vrcp.pop %v1219
    %v1224 = vmul.f32 1.0, %v1223
    %v1225 = vrcp.pop %v1220
    %v1226 = vmul.f32 1.0, %v1225
    %v1227 = vtanh.pop %v1208
    %v1229 = vrot.slane %v714, 6
    %v1231 = vmul.f32 %v1224, %v1229
    %v1232 = vmul.f32 %v1222, %v1227
    %v1233 = vadd.f32 %v1231, %v1232
    %v1234 = vtanh.pop %v1233
    %v1235 = vmul.f32 %v1226, %v1234
    %1236 = vmatprep.subr.mxu0 %v483
    %1237 = vmatpush1.msra.mxu0 %v482
    %1238 = vmatprep.subr.mxu0 %v487
    %1239 = vmatpush1.msra.mxu0 %v486
    %1240 = vmatprep.subr.mxu0 %v491
    %1241 = vmatpush1.msra.mxu0 %v490
    %1242 = vmatprep.subr.mxu0 %v495
    %1243 = vmatpush1.msra.mxu0 %v494
    %1244 = vmatprep.subr.mxu0 %v499
    %1245 = vmatpush1.msra.mxu0 %v498
    %1246 = vmatprep.subr.mxu0 %v503
    %1247 = vmatpush1.msra.mxu0 %v502
    %1248 = vmatprep.subr.mxu0 %v507
    %1249 = vmatpush1.msra.mxu0 %v506
    %1250 = vmatprep.subr.mxu0 %v511
    %1251 = vmatpush1.msra.mxu0 %v510
    %1252 = vmatprep.subr.mxu0 %v515
    %1253 = vmatpush1.msra.mxu0 %v514
    %1254 = vmatprep.subr.mxu0 %v519
    %1255 = vmatpush1.msra.mxu0 %v518
    %1256 = vmatprep.subr.mxu0 %v523
    %1257 = vmatpush1.msra.mxu0 %v522
    %1258 = vmatprep.subr.mxu0 %v527
    %1259 = vmatpush1.msra.mxu0 %v526
    %1260 = vmatprep.subr.mxu0 %v531
    %1261 = vmatpush1.msra.mxu0 %v530
    %1262 = vmatprep.subr.mxu0 %v535
    %1263 = vmatpush1.msra.mxu0 %v534
    %1264 = vmatprep.subr.mxu0 %v539
    %1265 = vmatpush1.msra.mxu0 %v538
    %1266 = vmatprep.subr.mxu0 %v543
    %1267 = vmatpush1.msra.mxu0 %v542
    %1268 = vmatprep.subr.mxu0 0.0
    %1269 = vmatpush1.msra.mxu0 0.0
    %1270 = vmatprep.subr.mxu0 0.0
    %1271 = vmatpush1.msra.mxu0 0.0
    %1272 = vmatprep.subr.mxu0 0.0
    %1273 = vmatpush1.msra.mxu0 0.0
    %1274 = vmatprep.subr.mxu0 0.0
    %1275 = vmatpush1.msra.mxu0 0.0
    %1276 = vmatprep.subr.mxu0 0.0
    %1277 = vmatpush1.msra.mxu0 0.0
    %1278 = vmatprep.subr.mxu0 0.0
    %1279 = vmatpush1.msra.mxu0 0.0
    %1280 = vmatprep.subr.mxu0 0.0
    %1281 = vmatpush1.msra.mxu0 0.0
    %1282 = vmatprep.subr.mxu0 0.0
    %1283 = vmatpush1.msra.mxu0 0.0
    %1284 = vmatprep.subr.mxu0 0.0
    %1285 = vmatpush1.msra.mxu0 0.0
    %1286 = vmatprep.subr.mxu0 0.0
    %1287 = vmatpush1.msra.mxu0 0.0
    %1288 = vmatprep.subr.mxu0 0.0
    %1289 = vmatpush1.msra.mxu0 0.0
    %1290 = vmatprep.subr.mxu0 0.0
    %1291 = vmatpush1.msra.mxu0 0.0
    %1292 = vmatprep.subr.mxu0 0.0
    %1293 = vmatpush1.msra.mxu0 0.0
    %1294 = vmatprep.subr.mxu0 0.0
    %1295 = vmatpush1.msra.mxu0 0.0
    %1296 = vmatprep.subr.mxu0 0.0
    %1297 = vmatpush1.msra.mxu0 0.0
    %1298 = vmatprep.subr.mxu0 0.0
    %1299 = vmatpush1.msra.mxu0 0.0
    %1300 = vmatprep.mubr.f32.mxu0 0.0
    %1301 = vmatmul.mubr.f32.gmra.mrb[0].mxu0 %v1049
    %v1302 = vpop.f32.mrb[0].mxu0
    %v1303 = vadd.f32 0.0, %v1302
    %v1304 = vpop.f32.mrb[0].mxu0
    %v1305 = vadd.f32 0.0, %v1304
    %1306 = vdwg.mxu0
    %1307 = vmatprep.subr.mxu0 %v485
    %1308 = vmatpush1.msra.mxu0 %v484
    %1309 = vmatprep.subr.mxu0 %v489
    %1310 = vmatpush1.msra.mxu0 %v488
    %1311 = vmatprep.subr.mxu0 %v493
    %1312 = vmatpush1.msra.mxu0 %v492
    %1313 = vmatprep.subr.mxu0 %v497
    %1314 = vmatpush1.msra.mxu0 %v496
    %1315 = vmatprep.subr.mxu0 %v501
    %1316 = vmatpush1.msra.mxu0 %v500
    %1317 = vmatprep.subr.mxu0 %v505
    %1318 = vmatpush1.msra.mxu0 %v504
    %1319 = vmatprep.subr.mxu0 %v509
    %1320 = vmatpush1.msra.mxu0 %v508
    %1321 = vmatprep.subr.mxu0 %v513
    %1322 = vmatpush1.msra.mxu0 %v512
    %1323 = vmatprep.subr.mxu0 %v517
    %1324 = vmatpush1.msra.mxu0 %v516
    %1325 = vmatprep.subr.mxu0 %v521
    %1326 = vmatpush1.msra.mxu0 %v520
    %1327 = vmatprep.subr.mxu0 %v525
    %1328 = vmatpush1.msra.mxu0 %v524
    %1329 = vmatprep.subr.mxu0 %v529
    %1330 = vmatpush1.msra.mxu0 %v528
    %1331 = vmatprep.subr.mxu0 %v533
    %1332 = vmatpush1.msra.mxu0 %v532
    %1333 = vmatprep.subr.mxu0 %v537
    %1334 = vmatpush1.msra.mxu0 %v536
    %1335 = vmatprep.subr.mxu0 %v541
    %1336 = vmatpush1.msra.mxu0 %v540
    %1337 = vmatprep.subr.mxu0 %v545
    %1338 = vmatpush1.msra.mxu0 %v544
    %1339 = vmatprep.subr.mxu0 0.0
    %1340 = vmatpush1.msra.mxu0 0.0
    %1341 = vmatprep.subr.mxu0 0.0
    %1342 = vmatpush1.msra.mxu0 0.0
    %1343 = vmatprep.subr.mxu0 0.0
    %1344 = vmatpush1.msra.mxu0 0.0
    %1345 = vmatprep.subr.mxu0 0.0
    %1346 = vmatpush1.msra.mxu0 0.0
    %1347 = vmatprep.subr.mxu0 0.0
    %1348 = vmatpush1.msra.mxu0 0.0
    %1349 = vmatprep.subr.mxu0 0.0
    %1350 = vmatpush1.msra.mxu0 0.0
    %1351 = vmatprep.subr.mxu0 0.0
    %1352 = vmatpush1.msra.mxu0 0.0
    %1353 = vmatprep.subr.mxu0 0.0
    %1354 = vmatpush1.msra.mxu0 0.0
    %1355 = vmatprep.subr.mxu0 0.0
    %1356 = vmatpush1.msra.mxu0 0.0
    %1357 = vmatprep.subr.mxu0 0.0
    %1358 = vmatpush1.msra.mxu0 0.0
    %1359 = vmatprep.subr.mxu0 0.0
    %1360 = vmatpush1.msra.mxu0 0.0
    %1361 = vmatprep.subr.mxu0 0.0
    %1362 = vmatpush1.msra.mxu0 0.0
    %1363 = vmatprep.subr.mxu0 0.0
    %1364 = vmatpush1.msra.mxu0 0.0
    %1365 = vmatprep.subr.mxu0 0.0
    %1366 = vmatpush1.msra.mxu0 0.0
    %1367 = vmatprep.subr.mxu0 0.0
    %1368 = vmatpush1.msra.mxu0 0.0
    %1369 = vmatprep.subr.mxu0 0.0
    %1370 = vmatpush1.msra.mxu0 0.0
    %1371 = vmatprep.mubr.f32.mxu0 0.0
    %1372 = vmatmul.mubr.f32.gmra.mrb[0].mxu0 %v1049
    %v1373 = vpop.f32.mrb[0].mxu0
    %v1374 = vadd.f32 0.0, %v1373
    %v1375 = vpop.f32.mrb[0].mxu0
    %v1376 = vadd.f32 0.0, %v1375
    %1377 = vdwg.mxu0
    %v1379 = vrot.slane %v1235, 2
    %1381 = vmatprep.subr.mxu0 %v419
    %1382 = vmatpush1.msra.mxu0 %v418
    %1383 = vmatprep.subr.mxu0 %v423
    %1384 = vmatpush1.msra.mxu0 %v422
    %1385 = vmatprep.subr.mxu0 %v427
    %1386 = vmatpush1.msra.mxu0 %v426
    %1387 = vmatprep.subr.mxu0 %v431
    %1388 = vmatpush1.msra.mxu0 %v430
    %1389 = vmatprep.subr.mxu0 %v435
    %1390 = vmatpush1.msra.mxu0 %v434
    %1391 = vmatprep.subr.mxu0 %v439
    %1392 = vmatpush1.msra.mxu0 %v438
    %1393 = vmatprep.subr.mxu0 %v443
    %1394 = vmatpush1.msra.mxu0 %v442
    %1395 = vmatprep.subr.mxu0 %v447
    %1396 = vmatpush1.msra.mxu0 %v446
    %1397 = vmatprep.subr.mxu0 %v451
    %1398 = vmatpush1.msra.mxu0 %v450
    %1399 = vmatprep.subr.mxu0 %v455
    %1400 = vmatpush1.msra.mxu0 %v454
    %1401 = vmatprep.subr.mxu0 %v459
    %1402 = vmatpush1.msra.mxu0 %v458
    %1403 = vmatprep.subr.mxu0 %v463
    %1404 = vmatpush1.msra.mxu0 %v462
    %1405 = vmatprep.subr.mxu0 %v467
    %1406 = vmatpush1.msra.mxu0 %v466
    %1407 = vmatprep.subr.mxu0 %v471
    %1408 = vmatpush1.msra.mxu0 %v470
    %1409 = vmatprep.subr.mxu0 %v475
    %1410 = vmatpush1.msra.mxu0 %v474
    %1411 = vmatprep.subr.mxu0 %v479
    %1412 = vmatpush1.msra.mxu0 %v478
    %1413 = vmatprep.subr.mxu0 0.0
    %1414 = vmatpush1.msra.mxu0 0.0
    %1415 = vmatprep.subr.mxu0 0.0
    %1416 = vmatpush1.msra.mxu0 0.0
    %1417 = vmatprep.subr.mxu0 0.0
    %1418 = vmatpush1.msra.mxu0 0.0
    %1419 = vmatprep.subr.mxu0 0.0
    %1420 = vmatpush1.msra.mxu0 0.0
    %1421 = vmatprep.subr.mxu0 0.0
    %1422 = vmatpush1.msra.mxu0 0.0
    %1423 = vmatprep.subr.mxu0 0.0
    %1424 = vmatpush1.msra.mxu0 0.0
    %1425 = vmatprep.subr.mxu0 0.0
    %1426 = vmatpush1.msra.mxu0 0.0
    %1427 = vmatprep.subr.mxu0 0.0
    %1428 = vmatpush1.msra.mxu0 0.0
    %1429 = vmatprep.subr.mxu0 0.0
    %1430 = vmatpush1.msra.mxu0 0.0
    %1431 = vmatprep.subr.mxu0 0.0
    %1432 = vmatpush1.msra.mxu0 0.0
    %1433 = vmatprep.subr.mxu0 0.0
    %1434 = vmatpush1.msra.mxu0 0.0
    %1435 = vmatprep.subr.mxu0 0.0
    %1436 = vmatpush1.msra.mxu0 0.0
    %1437 = vmatprep.subr.mxu0 0.0
    %1438 = vmatpush1.msra.mxu0 0.0
    %1439 = vmatprep.subr.mxu0 0.0
    %1440 = vmatpush1.msra.mxu0 0.0
    %1441 = vmatprep.subr.mxu0 0.0
    %1442 = vmatpush1.msra.mxu0 0.0
    %1443 = vmatprep.subr.mxu0 0.0
    %1444 = vmatpush1.msra.mxu0 0.0
    %1445 = vmatprep.mubr.f32.mxu0 0.0
    %1446 = vmatmul.mubr.f32.gmra.mrb[0].mxu0 %v1379
    %v1447 = vpop.f32.mrb[0].mxu0
    %v1448 = vadd.f32 %v1303, %v1447
    %v1449 = vpop.f32.mrb[0].mxu0
    %v1450 = vadd.f32 %v1305, %v1449
    %1451 = vdwg.mxu0
    %1452 = vmatprep.subr.mxu0 %v421
    %1453 = vmatpush1.msra.mxu0 %v420
    %1454 = vmatprep.subr.mxu0 %v425
    %1455 = vmatpush1.msra.mxu0 %v424
    %1456 = vmatprep.subr.mxu0 %v429
    %1457 = vmatpush1.msra.mxu0 %v428
    %1458 = vmatprep.subr.mxu0 %v433
    %1459 = vmatpush1.msra.mxu0 %v432
    %1460 = vmatprep.subr.mxu0 %v437
    %1461 = vmatpush1.msra.mxu0 %v436
    %1462 = vmatprep.subr.mxu0 %v441
    %1463 = vmatpush1.msra.mxu0 %v440
    %1464 = vmatprep.subr.mxu0 %v445
    %1465 = vmatpush1.msra.mxu0 %v444
    %1466 = vmatprep.subr.mxu0 %v449
    %1467 = vmatpush1.msra.mxu0 %v448
    %1468 = vmatprep.subr.mxu0 %v453
    %1469 = vmatpush1.msra.mxu0 %v452
    %1470 = vmatprep.subr.mxu0 %v457
    %1471 = vmatpush1.msra.mxu0 %v456
    %1472 = vmatprep.subr.mxu0 %v461
    %1473 = vmatpush1.msra.mxu0 %v460
    %1474 = vmatprep.subr.mxu0 %v465
    %1475 = vmatpush1.msra.mxu0 %v464
    %1476 = vmatprep.subr.mxu0 %v469
    %1477 = vmatpush1.msra.mxu0 %v468
    %1478 = vmatprep.subr.mxu0 %v473
    %1479 = vmatpush1.msra.mxu0 %v472
    %1480 = vmatprep.subr.mxu0 %v477
    %1481 = vmatpush1.msra.mxu0 %v476
    %1482 = vmatprep.subr.mxu0 %v481
    %1483 = vmatpush1.msra.mxu0 %v480
    %1484 = vmatprep.subr.mxu0 0.0
    %1485 = vmatpush1.msra.mxu0 0.0
    %1486 = vmatprep.subr.mxu0 0.0
    %1487 = vmatpush1.msra.mxu0 0.0
    %1488 = vmatprep.subr.mxu0 0.0
    %1489 = vmatpush1.msra.mxu0 0.0
    %1490 = vmatprep.subr.mxu0 0.0
    %1491 = vmatpush1.msra.mxu0 0.0
    %1492 = vmatprep.subr.mxu0 0.0
    %1493 = vmatpush1.msra.mxu0 0.0
    %1494 = vmatprep.subr.mxu0 0.0
    %1495 = vmatpush1.msra.mxu0 0.0
    %1496 = vmatprep.subr.mxu0 0.0
    %1497 = vmatpush1.msra.mxu0 0.0
    %1498 = vmatprep.subr.mxu0 0.0
    %1499 = vmatpush1.msra.mxu0 0.0
    %1500 = vmatprep.subr.mxu0 0.0
    %1501 = vmatpush1.msra.mxu0 0.0
    %1502 = vmatprep.subr.mxu0 0.0
    %1503 = vmatpush1.msra.mxu0 0.0
    %1504 = vmatprep.subr.mxu0 0.0
    %1505 = vmatpush1.msra.mxu0 0.0
    %1506 = vmatprep.subr.mxu0 0.0
    %1507 = vmatpush1.msra.mxu0 0.0
    %1508 = vmatprep.subr.mxu0 0.0
    %1509 = vmatpush1.msra.mxu0 0.0
    %1510 = vmatprep.subr.mxu0 0.0
    %1511 = vmatpush1.msra.mxu0 0.0
    %1512 = vmatprep.subr.mxu0 0.0
    %1513 = vmatpush1.msra.mxu0 0.0
    %1514 = vmatprep.subr.mxu0 0.0
    %1515 = vmatpush1.msra.mxu0 0.0
    %1516 = vmatprep.mubr.f32.mxu0 0.0
    %1517 = vmatmul.mubr.f32.gmra.mrb[0].mxu0 %v1379
    %v1518 = vpop.f32.mrb[0].mxu0
    %v1519 = vadd.f32 %v1374, %v1518
    %v1520 = vpop.f32.mrb[0].mxu0
    %v1521 = vadd.f32 %v1376, %v1520
    %1522 = vdwg.mxu0
    %v1523 = vadd.f32 %v1448, %v1005
    %v1524 = vadd.f32 %v1450, %v1009
    %v1525 = vadd.f32 %v1519, %v1013
    %v1526 = vadd.f32 %v1521, %v1017
    %v1527 = vxor.u32 %v1523, 2147483648
    %v1528 = vxor.u32 %v1524, 2147483648
    %v1529 = vxor.u32 %v1525, 2147483648
    %v1530 = vmul.f32 %v1527, 1.442695
    %v1531 = vpow.pop %v1530
    %v1532 = vmul.f32 %v1528, 1.442695
    %v1533 = vpow.pop %v1532
    %v1534 = vmul.f32 %v1529, 1.442695
    %v1535 = vpow.pop %v1534
    %v1536 = vadd.f32 %v1531, 1.0
    %v1537 = vadd.f32 %v1533, 1.0
    %v1538 = vadd.f32 %v1535, 1.0
    %v1539 = vrcp.pop %v1536
    %v1540 = vmul.f32 1.0, %v1539
    %v1541 = vrcp.pop %v1537
    %v1542 = vmul.f32 1.0, %v1541
    %v1543 = vrcp.pop %v1538
    %v1544 = vmul.f32 1.0, %v1543
    %v1545 = vtanh.pop %v1526
    %v1546 = vmul.f32 %v1542, %v1047
    %v1547 = vmul.f32 %v1540, %v1545
    %v1548 = vadd.f32 %v1546, %v1547
    %v1549 = vtanh.pop %v1548
    %v1550 = vmul.f32 %v1544, %v1549
    %1551 = vst [vmem:[#allocation2 + $0x2] sm:$0x3] %v1550
    %1552 = vmatprep.subr.mxu0 %v355
    %1553 = vmatpush1.msra.mxu0 %v354
    %1554 = vmatprep.subr.mxu0 %v359
    %1555 = vmatpush1.msra.mxu0 %v358
    %1556 = vmatprep.subr.mxu0 %v363
    %1557 = vmatpush1.msra.mxu0 %v362
    %1558 = vmatprep.subr.mxu0 %v367
    %1559 = vmatpush1.msra.mxu0 %v366
    %1560 = vmatprep.subr.mxu0 %v371
    %1561 = vmatpush1.msra.mxu0 %v370
    %1562 = vmatprep.subr.mxu0 %v375
    %1563 = vmatpush1.msra.mxu0 %v374
    %1564 = vmatprep.subr.mxu0 %v379
    %1565 = vmatpush1.msra.mxu0 %v378
    %1566 = vmatprep.subr.mxu0 %v383
    %1567 = vmatpush1.msra.mxu0 %v382
    %1568 = vmatprep.subr.mxu0 %v387
    %1569 = vmatpush1.msra.mxu0 %v386
    %1570 = vmatprep.subr.mxu0 %v391
    %1571 = vmatpush1.msra.mxu0 %v390
    %1572 = vmatprep.subr.mxu0 %v395
    %1573 = vmatpush1.msra.mxu0 %v394
    %1574 = vmatprep.subr.mxu0 %v399
    %1575 = vmatpush1.msra.mxu0 %v398
    %1576 = vmatprep.subr.mxu0 %v403
    %1577 = vmatpush1.msra.mxu0 %v402
    %1578 = vmatprep.subr.mxu0 %v407
    %1579 = vmatpush1.msra.mxu0 %v406
    %1580 = vmatprep.subr.mxu0 %v411
    %1581 = vmatpush1.msra.mxu0 %v410
    %1582 = vmatprep.subr.mxu0 %v415
    %1583 = vmatpush1.msra.mxu0 %v414
    %1584 = vmatprep.subr.mxu0 0.0
    %1585 = vmatpush1.msra.mxu0 0.0
    %1586 = vmatprep.subr.mxu0 0.0
    %1587 = vmatpush1.msra.mxu0 0.0
    %1588 = vmatprep.subr.mxu0 0.0
    %1589 = vmatpush1.msra.mxu0 0.0
    %1590 = vmatprep.subr.mxu0 0.0
    %1591 = vmatpush1.msra.mxu0 0.0
    %1592 = vmatprep.subr.mxu0 0.0
    %1593 = vmatpush1.msra.mxu0 0.0
    %1594 = vmatprep.subr.mxu0 0.0
    %1595 = vmatpush1.msra.mxu0 0.0
    %1596 = vmatprep.subr.mxu0 0.0
    %1597 = vmatpush1.msra.mxu0 0.0
    %1598 = vmatprep.subr.mxu0 0.0
    %1599 = vmatpush1.msra.mxu0 0.0
    %1600 = vmatprep.subr.mxu0 0.0
    %1601 = vmatpush1.msra.mxu0 0.0
    %1602 = vmatprep.subr.mxu0 0.0
    %1603 = vmatpush1.msra.mxu0 0.0
    %1604 = vmatprep.subr.mxu0 0.0
    %1605 = vmatpush1.msra.mxu0 0.0
    %1606 = vmatprep.subr.mxu0 0.0
    %1607 = vmatpush1.msra.mxu0 0.0
    %1608 = vmatprep.subr.mxu0 0.0
    %1609 = vmatpush1.msra.mxu0 0.0
    %1610 = vmatprep.subr.mxu0 0.0
    %1611 = vmatpush1.msra.mxu0 0.0
    %1612 = vmatprep.subr.mxu0 0.0
    %1613 = vmatpush1.msra.mxu0 0.0
    %1614 = vmatprep.subr.mxu0 0.0
    %1615 = vmatpush1.msra.mxu0 0.0
    %1616 = vmatprep.mubr.f32.mxu0 0.0
    %1617 = vmatmul.mubr.f32.gmra.mrb[0].mxu0 %v1379
    %v1618 = vpop.f32.mrb[0].mxu0
    %v1619 = vadd.f32 0.0, %v1618
    %v1620 = vpop.f32.mrb[0].mxu0
    %v1621 = vadd.f32 0.0, %v1620
    %1622 = vdwg.mxu0
    %1623 = vmatprep.subr.mxu0 %v357
    %1624 = vmatpush1.msra.mxu0 %v356
    %1625 = vmatprep.subr.mxu0 %v361
    %1626 = vmatpush1.msra.mxu0 %v360
    %1627 = vmatprep.subr.mxu0 %v365
    %1628 = vmatpush1.msra.mxu0 %v364
    %1629 = vmatprep.subr.mxu0 %v369
    %1630 = vmatpush1.msra.mxu0 %v368
    %1631 = vmatprep.subr.mxu0 %v373
    %1632 = vmatpush1.msra.mxu0 %v372
    %1633 = vmatprep.subr.mxu0 %v377
    %1634 = vmatpush1.msra.mxu0 %v376
    %1635 = vmatprep.subr.mxu0 %v381
    %1636 = vmatpush1.msra.mxu0 %v380
    %1637 = vmatprep.subr.mxu0 %v385
    %1638 = vmatpush1.msra.mxu0 %v384
    %1639 = vmatprep.subr.mxu0 %v389
    %1640 = vmatpush1.msra.mxu0 %v388
    %1641 = vmatprep.subr.mxu0 %v393
    %1642 = vmatpush1.msra.mxu0 %v392
    %1643 = vmatprep.subr.mxu0 %v397
    %1644 = vmatpush1.msra.mxu0 %v396
    %1645 = vmatprep.subr.mxu0 %v401
    %1646 = vmatpush1.msra.mxu0 %v400
    %1647 = vmatprep.subr.mxu0 %v405
    %1648 = vmatpush1.msra.mxu0 %v404
    %1649 = vmatprep.subr.mxu0 %v409
    %1650 = vmatpush1.msra.mxu0 %v408
    %1651 = vmatprep.subr.mxu0 %v413
    %1652 = vmatpush1.msra.mxu0 %v412
    %1653 = vmatprep.subr.mxu0 %v417
    %1654 = vmatpush1.msra.mxu0 %v416
    %1655 = vmatprep.subr.mxu0 0.0
    %1656 = vmatpush1.msra.mxu0 0.0
    %1657 = vmatprep.subr.mxu0 0.0
    %1658 = vmatpush1.msra.mxu0 0.0
    %1659 = vmatprep.subr.mxu0 0.0
    %1660 = vmatpush1.msra.mxu0 0.0
    %1661 = vmatprep.subr.mxu0 0.0
    %1662 = vmatpush1.msra.mxu0 0.0
    %1663 = vmatprep.subr.mxu0 0.0
    %1664 = vmatpush1.msra.mxu0 0.0
    %1665 = vmatprep.subr.mxu0 0.0
    %1666 = vmatpush1.msra.mxu0 0.0
    %1667 = vmatprep.subr.mxu0 0.0
    %1668 = vmatpush1.msra.mxu0 0.0
    %1669 = vmatprep.subr.mxu0 0.0
    %1670 = vmatpush1.msra.mxu0 0.0
    %1671 = vmatprep.subr.mxu0 0.0
    %1672 = vmatpush1.msra.mxu0 0.0
    %1673 = vmatprep.subr.mxu0 0.0
    %1674 = vmatpush1.msra.mxu0 0.0
    %1675 = vmatprep.subr.mxu0 0.0
    %1676 = vmatpush1.msra.mxu0 0.0
    %1677 = vmatprep.subr.mxu0 0.0
    %1678 = vmatpush1.msra.mxu0 0.0
    %1679 = vmatprep.subr.mxu0 0.0
    %1680 = vmatpush1.msra.mxu0 0.0
    %1681 = vmatprep.subr.mxu0 0.0
    %1682 = vmatpush1.msra.mxu0 0.0
    %1683 = vmatprep.subr.mxu0 0.0
    %1684 = vmatpush1.msra.mxu0 0.0
    %1685 = vmatprep.subr.mxu0 0.0
    %1686 = vmatpush1.msra.mxu0 0.0
    %1687 = vmatprep.mubr.f32.mxu0 0.0
    %1688 = vmatmul.mubr.f32.gmra.mrb[0].mxu0 %v1379
    %v1689 = vpop.f32.mrb[0].mxu0
    %v1690 = vadd.f32 0.0, %v1689
    %v1691 = vpop.f32.mrb[0].mxu0
    %v1692 = vadd.f32 0.0, %v1691
    %1693 = vdwg.mxu0
    %v1698 = vrot.slane %v1619, 4
    %v1699 = vrot.slane %v1621, 4
    %v1700 = vrot.slane %v1690, 4
    %v1701 = vrot.slane %v1692, 4
    %v1706 = vadd.f32 %v267, %v1698
    %v1707 = vadd.f32 %v269, %v1699
    %v1708 = vadd.f32 %v344, %v1700
    %v1709 = vadd.f32 %v346, %v1701
    %v1710 = vxor.u32 %v1706, 2147483648
    %v1711 = vxor.u32 %v1707, 2147483648
    %v1712 = vxor.u32 %v1708, 2147483648
    %v1713 = vmul.f32 %v1710, 1.442695
    %v1714 = vpow.pop %v1713
    %v1715 = vmul.f32 %v1711, 1.442695
    %v1716 = vpow.pop %v1715
    %v1717 = vmul.f32 %v1712, 1.442695
    %v1718 = vpow.pop %v1717
    %v1719 = vadd.f32 %v1714, 1.0
    %v1720 = vadd.f32 %v1716, 1.0
    %v1721 = vadd.f32 %v1718, 1.0
    %v1722 = vrcp.pop %v1719
    %v1723 = vmul.f32 1.0, %v1722
    %v1724 = vrcp.pop %v1720
    %v1725 = vmul.f32 1.0, %v1724
    %v1726 = vrcp.pop %v1721
    %v1727 = vmul.f32 1.0, %v1726
    %v1728 = vtanh.pop %v1709
    %v1730 = vrot.slane %v1233, 6
    %v1732 = vmul.f32 %v1725, %v1730
    %v1733 = vmul.f32 %v1723, %v1728
    %v1734 = vadd.f32 %v1732, %v1733
    %v1735 = vtanh.pop %v1734
    %v1736 = vmul.f32 %v1727, %v1735
    %1737 = vmatprep.subr.mxu0 %v483
    %1738 = vmatpush1.msra.mxu0 %v482
    %1739 = vmatprep.subr.mxu0 %v487
    %1740 = vmatpush1.msra.mxu0 %v486
    %1741 = vmatprep.subr.mxu0 %v491
    %1742 = vmatpush1.msra.mxu0 %v490
    %1743 = vmatprep.subr.mxu0 %v495
    %1744 = vmatpush1.msra.mxu0 %v494
    %1745 = vmatprep.subr.mxu0 %v499
    %1746 = vmatpush1.msra.mxu0 %v498
    %1747 = vmatprep.subr.mxu0 %v503
    %1748 = vmatpush1.msra.mxu0 %v502
    %1749 = vmatprep.subr.mxu0 %v507
    %1750 = vmatpush1.msra.mxu0 %v506
    %1751 = vmatprep.subr.mxu0 %v511
    %1752 = vmatpush1.msra.mxu0 %v510
    %1753 = vmatprep.subr.mxu0 %v515
    %1754 = vmatpush1.msra.mxu0 %v514
    %1755 = vmatprep.subr.mxu0 %v519
    %1756 = vmatpush1.msra.mxu0 %v518
    %1757 = vmatprep.subr.mxu0 %v523
    %1758 = vmatpush1.msra.mxu0 %v522
    %1759 = vmatprep.subr.mxu0 %v527
    %1760 = vmatpush1.msra.mxu0 %v526
    %1761 = vmatprep.subr.mxu0 %v531
    %1762 = vmatpush1.msra.mxu0 %v530
    %1763 = vmatprep.subr.mxu0 %v535
    %1764 = vmatpush1.msra.mxu0 %v534
    %1765 = vmatprep.subr.mxu0 %v539
    %1766 = vmatpush1.msra.mxu0 %v538
    %1767 = vmatprep.subr.mxu0 %v543
    %1768 = vmatpush1.msra.mxu0 %v542
    %1769 = vmatprep.subr.mxu0 0.0
    %1770 = vmatpush1.msra.mxu0 0.0
    %1771 = vmatprep.subr.mxu0 0.0
    %1772 = vmatpush1.msra.mxu0 0.0
    %1773 = vmatprep.subr.mxu0 0.0
    %1774 = vmatpush1.msra.mxu0 0.0
    %1775 = vmatprep.subr.mxu0 0.0
    %1776 = vmatpush1.msra.mxu0 0.0
    %1777 = vmatprep.subr.mxu0 0.0
    %1778 = vmatpush1.msra.mxu0 0.0
    %1779 = vmatprep.subr.mxu0 0.0
    %1780 = vmatpush1.msra.mxu0 0.0
    %1781 = vmatprep.subr.mxu0 0.0
    %1782 = vmatpush1.msra.mxu0 0.0
    %1783 = vmatprep.subr.mxu0 0.0
    %1784 = vmatpush1.msra.mxu0 0.0
    %1785 = vmatprep.subr.mxu0 0.0
    %1786 = vmatpush1.msra.mxu0 0.0
    %1787 = vmatprep.subr.mxu0 0.0
    %1788 = vmatpush1.msra.mxu0 0.0
    %1789 = vmatprep.subr.mxu0 0.0
    %1790 = vmatpush1.msra.mxu0 0.0
    %1791 = vmatprep.subr.mxu0 0.0
    %1792 = vmatpush1.msra.mxu0 0.0
    %1793 = vmatprep.subr.mxu0 0.0
    %1794 = vmatpush1.msra.mxu0 0.0
    %1795 = vmatprep.subr.mxu0 0.0
    %1796 = vmatpush1.msra.mxu0 0.0
    %1797 = vmatprep.subr.mxu0 0.0
    %1798 = vmatpush1.msra.mxu0 0.0
    %1799 = vmatprep.subr.mxu0 0.0
    %1800 = vmatpush1.msra.mxu0 0.0
    %1801 = vmatprep.mubr.f32.mxu0 0.0
    %1802 = vmatmul.mubr.f32.gmra.mrb[0].mxu0 %v1550
    %v1803 = vpop.f32.mrb[0].mxu0
    %v1804 = vadd.f32 0.0, %v1803
    %v1805 = vpop.f32.mrb[0].mxu0
    %v1806 = vadd.f32 0.0, %v1805
    %1807 = vdwg.mxu0
    %1808 = vmatprep.subr.mxu0 %v485
    %1809 = vmatpush1.msra.mxu0 %v484
    %1810 = vmatprep.subr.mxu0 %v489
    %1811 = vmatpush1.msra.mxu0 %v488
    %1812 = vmatprep.subr.mxu0 %v493
    %1813 = vmatpush1.msra.mxu0 %v492
    %1814 = vmatprep.subr.mxu0 %v497
    %1815 = vmatpush1.msra.mxu0 %v496
    %1816 = vmatprep.subr.mxu0 %v501
    %1817 = vmatpush1.msra.mxu0 %v500
    %1818 = vmatprep.subr.mxu0 %v505
    %1819 = vmatpush1.msra.mxu0 %v504
    %1820 = vmatprep.subr.mxu0 %v509
    %1821 = vmatpush1.msra.mxu0 %v508
    %1822 = vmatprep.subr.mxu0 %v513
    %1823 = vmatpush1.msra.mxu0 %v512
    %1824 = vmatprep.subr.mxu0 %v517
    %1825 = vmatpush1.msra.mxu0 %v516
    %1826 = vmatprep.subr.mxu0 %v521
    %1827 = vmatpush1.msra.mxu0 %v520
    %1828 = vmatprep.subr.mxu0 %v525
    %1829 = vmatpush1.msra.mxu0 %v524
    %1830 = vmatprep.subr.mxu0 %v529
    %1831 = vmatpush1.msra.mxu0 %v528
    %1832 = vmatprep.subr.mxu0 %v533
    %1833 = vmatpush1.msra.mxu0 %v532
    %1834 = vmatprep.subr.mxu0 %v537
    %1835 = vmatpush1.msra.mxu0 %v536
    %1836 = vmatprep.subr.mxu0 %v541
    %1837 = vmatpush1.msra.mxu0 %v540
    %1838 = vmatprep.subr.mxu0 %v545
    %1839 = vmatpush1.msra.mxu0 %v544
    %1840 = vmatprep.subr.mxu0 0.0
    %1841 = vmatpush1.msra.mxu0 0.0
    %1842 = vmatprep.subr.mxu0 0.0
    %1843 = vmatpush1.msra.mxu0 0.0
    %1844 = vmatprep.subr.mxu0 0.0
    %1845 = vmatpush1.msra.mxu0 0.0
    %1846 = vmatprep.subr.mxu0 0.0
    %1847 = vmatpush1.msra.mxu0 0.0
    %1848 = vmatprep.subr.mxu0 0.0
    %1849 = vmatpush1.msra.mxu0 0.0
    %1850 = vmatprep.subr.mxu0 0.0
    %1851 = vmatpush1.msra.mxu0 0.0
    %1852 = vmatprep.subr.mxu0 0.0
    %1853 = vmatpush1.msra.mxu0 0.0
    %1854 = vmatprep.subr.mxu0 0.0
    %1855 = vmatpush1.msra.mxu0 0.0
    %1856 = vmatprep.subr.mxu0 0.0
    %1857 = vmatpush1.msra.mxu0 0.0
    %1858 = vmatprep.subr.mxu0 0.0
    %1859 = vmatpush1.msra.mxu0 0.0
    %1860 = vmatprep.subr.mxu0 0.0
    %1861 = vmatpush1.msra.mxu0 0.0
    %1862 = vmatprep.subr.mxu0 0.0
    %1863 = vmatpush1.msra.mxu0 0.0
    %1864 = vmatprep.subr.mxu0 0.0
    %1865 = vmatpush1.msra.mxu0 0.0
    %1866 = vmatprep.subr.mxu0 0.0
    %1867 = vmatpush1.msra.mxu0 0.0
    %1868 = vmatprep.subr.mxu0 0.0
    %1869 = vmatpush1.msra.mxu0 0.0
    %1870 = vmatprep.subr.mxu0 0.0
    %1871 = vmatpush1.msra.mxu0 0.0
    %1872 = vmatprep.mubr.f32.mxu0 0.0
    %1873 = vmatmul.mubr.f32.gmra.mrb[0].mxu0 %v1550
    %v1874 = vpop.f32.mrb[0].mxu0
    %v1875 = vadd.f32 0.0, %v1874
    %v1876 = vpop.f32.mrb[0].mxu0
    %v1877 = vadd.f32 0.0, %v1876
    %1878 = vdwg.mxu0
    %v1880 = vrot.slane %v1736, 4
    %1882 = vmatprep.subr.mxu0 %v419
    %1883 = vmatpush1.msra.mxu0 %v418
    %1884 = vmatprep.subr.mxu0 %v423
    %1885 = vmatpush1.msra.mxu0 %v422
    %1886 = vmatprep.subr.mxu0 %v427
    %1887 = vmatpush1.msra.mxu0 %v426
    %1888 = vmatprep.subr.mxu0 %v431
    %1889 = vmatpush1.msra.mxu0 %v430
    %1890 = vmatprep.subr.mxu0 %v435
    %1891 = vmatpush1.msra.mxu0 %v434
    %1892 = vmatprep.subr.mxu0 %v439
    %1893 = vmatpush1.msra.mxu0 %v438
    %1894 = vmatprep.subr.mxu0 %v443
    %1895 = vmatpush1.msra.mxu0 %v442
    %1896 = vmatprep.subr.mxu0 %v447
    %1897 = vmatpush1.msra.mxu0 %v446
    %1898 = vmatprep.subr.mxu0 %v451
    %1899 = vmatpush1.msra.mxu0 %v450
    %1900 = vmatprep.subr.mxu0 %v455
    %1901 = vmatpush1.msra.mxu0 %v454
    %1902 = vmatprep.subr.mxu0 %v459
    %1903 = vmatpush1.msra.mxu0 %v458
    %1904 = vmatprep.subr.mxu0 %v463
    %1905 = vmatpush1.msra.mxu0 %v462
    %1906 = vmatprep.subr.mxu0 %v467
    %1907 = vmatpush1.msra.mxu0 %v466
    %1908 = vmatprep.subr.mxu0 %v471
    %1909 = vmatpush1.msra.mxu0 %v470
    %1910 = vmatprep.subr.mxu0 %v475
    %1911 = vmatpush1.msra.mxu0 %v474
    %1912 = vmatprep.subr.mxu0 %v479
    %1913 = vmatpush1.msra.mxu0 %v478
    %1914 = vmatprep.subr.mxu0 0.0
    %1915 = vmatpush1.msra.mxu0 0.0
    %1916 = vmatprep.subr.mxu0 0.0
    %1917 = vmatpush1.msra.mxu0 0.0
    %1918 = vmatprep.subr.mxu0 0.0
    %1919 = vmatpush1.msra.mxu0 0.0
    %1920 = vmatprep.subr.mxu0 0.0
    %1921 = vmatpush1.msra.mxu0 0.0
    %1922 = vmatprep.subr.mxu0 0.0
    %1923 = vmatpush1.msra.mxu0 0.0
    %1924 = vmatprep.subr.mxu0 0.0
    %1925 = vmatpush1.msra.mxu0 0.0
    %1926 = vmatprep.subr.mxu0 0.0
    %1927 = vmatpush1.msra.mxu0 0.0
    %1928 = vmatprep.subr.mxu0 0.0
    %1929 = vmatpush1.msra.mxu0 0.0
    %1930 = vmatprep.subr.mxu0 0.0
    %1931 = vmatpush1.msra.mxu0 0.0
    %1932 = vmatprep.subr.mxu0 0.0
    %1933 = vmatpush1.msra.mxu0 0.0
    %1934 = vmatprep.subr.mxu0 0.0
    %1935 = vmatpush1.msra.mxu0 0.0
    %1936 = vmatprep.subr.mxu0 0.0
    %1937 = vmatpush1.msra.mxu0 0.0
    %1938 = vmatprep.subr.mxu0 0.0
    %1939 = vmatpush1.msra.mxu0 0.0
    %1940 = vmatprep.subr.mxu0 0.0
    %1941 = vmatpush1.msra.mxu0 0.0
    %1942 = vmatprep.subr.mxu0 0.0
    %1943 = vmatpush1.msra.mxu0 0.0
    %1944 = vmatprep.subr.mxu0 0.0
    %1945 = vmatpush1.msra.mxu0 0.0
    %1946 = vmatprep.mubr.f32.mxu0 0.0
    %1947 = vmatmul.mubr.f32.gmra.mrb[0].mxu0 %v1880
    %v1948 = vpop.f32.mrb[0].mxu0
    %v1949 = vadd.f32 %v1804, %v1948
    %v1950 = vpop.f32.mrb[0].mxu0
    %v1951 = vadd.f32 %v1806, %v1950
    %1952 = vdwg.mxu0
    %1953 = vmatprep.subr.mxu0 %v421
    %1954 = vmatpush1.msra.mxu0 %v420
    %1955 = vmatprep.subr.mxu0 %v425
    %1956 = vmatpush1.msra.mxu0 %v424
    %1957 = vmatprep.subr.mxu0 %v429
    %1958 = vmatpush1.msra.mxu0 %v428
    %1959 = vmatprep.subr.mxu0 %v433
    %1960 = vmatpush1.msra.mxu0 %v432
    %1961 = vmatprep.subr.mxu0 %v437
    %1962 = vmatpush1.msra.mxu0 %v436
    %1963 = vmatprep.subr.mxu0 %v441
    %1964 = vmatpush1.msra.mxu0 %v440
    %1965 = vmatprep.subr.mxu0 %v445
    %1966 = vmatpush1.msra.mxu0 %v444
    %1967 = vmatprep.subr.mxu0 %v449
    %1968 = vmatpush1.msra.mxu0 %v448
    %1969 = vmatprep.subr.mxu0 %v453
    %1970 = vmatpush1.msra.mxu0 %v452
    %1971 = vmatprep.subr.mxu0 %v457
    %1972 = vmatpush1.msra.mxu0 %v456
    %1973 = vmatprep.subr.mxu0 %v461
    %1974 = vmatpush1.msra.mxu0 %v460
    %1975 = vmatprep.subr.mxu0 %v465
    %1976 = vmatpush1.msra.mxu0 %v464
    %1977 = vmatprep.subr.mxu0 %v469
    %1978 = vmatpush1.msra.mxu0 %v468
    %1979 = vmatprep.subr.mxu0 %v473
    %1980 = vmatpush1.msra.mxu0 %v472
    %1981 = vmatprep.subr.mxu0 %v477
    %1982 = vmatpush1.msra.mxu0 %v476
    %1983 = vmatprep.subr.mxu0 %v481
    %1984 = vmatpush1.msra.mxu0 %v480
    %1985 = vmatprep.subr.mxu0 0.0
    %1986 = vmatpush1.msra.mxu0 0.0
    %1987 = vmatprep.subr.mxu0 0.0
    %1988 = vmatpush1.msra.mxu0 0.0
    %1989 = vmatprep.subr.mxu0 0.0
    %1990 = vmatpush1.msra.mxu0 0.0
    %1991 = vmatprep.subr.mxu0 0.0
    %1992 = vmatpush1.msra.mxu0 0.0
    %1993 = vmatprep.subr.mxu0 0.0
    %1994 = vmatpush1.msra.mxu0 0.0
    %1995 = vmatprep.subr.mxu0 0.0
    %1996 = vmatpush1.msra.mxu0 0.0
    %1997 = vmatprep.subr.mxu0 0.0
    %1998 = vmatpush1.msra.mxu0 0.0
    %1999 = vmatprep.subr.mxu0 0.0
    %2000 = vmatpush1.msra.mxu0 0.0
    %2001 = vmatprep.subr.mxu0 0.0
    %2002 = vmatpush1.msra.mxu0 0.0
    %2003 = vmatprep.subr.mxu0 0.0
    %2004 = vmatpush1.msra.mxu0 0.0
    %2005 = vmatprep.subr.mxu0 0.0
    %2006 = vmatpush1.msra.mxu0 0.0
    %2007 = vmatprep.subr.mxu0 0.0
    %2008 = vmatpush1.msra.mxu0 0.0
    %2009 = vmatprep.subr.mxu0 0.0
    %2010 = vmatpush1.msra.mxu0 0.0
    %2011 = vmatprep.subr.mxu0 0.0
    %2012 = vmatpush1.msra.mxu0 0.0
    %2013 = vmatprep.subr.mxu0 0.0
    %2014 = vmatpush1.msra.mxu0 0.0
    %2015 = vmatprep.subr.mxu0 0.0
    %2016 = vmatpush1.msra.mxu0 0.0
    %2017 = vmatprep.mubr.f32.mxu0 0.0
    %2018 = vmatmul.mubr.f32.gmra.mrb[0].mxu0 %v1880
    %v2019 = vpop.f32.mrb[0].mxu0
    %v2020 = vadd.f32 %v1875, %v2019
    %v2021 = vpop.f32.mrb[0].mxu0
    %v2022 = vadd.f32 %v1877, %v2021
    %2023 = vdwg.mxu0
    %v2024 = vadd.f32 %v1949, %v1005
    %v2025 = vadd.f32 %v1951, %v1009
    %v2026 = vadd.f32 %v2020, %v1013
    %v2027 = vadd.f32 %v2022, %v1017
    %v2028 = vxor.u32 %v2024, 2147483648
    %v2029 = vxor.u32 %v2025, 2147483648
    %v2030 = vxor.u32 %v2026, 2147483648
    %v2031 = vmul.f32 %v2028, 1.442695
    %v2032 = vpow.pop %v2031
    %v2033 = vmul.f32 %v2029, 1.442695
    %v2034 = vpow.pop %v2033
    %v2035 = vmul.f32 %v2030, 1.442695
    %v2036 = vpow.pop %v2035
    %v2037 = vadd.f32 %v2032, 1.0
    %v2038 = vadd.f32 %v2034, 1.0
    %v2039 = vadd.f32 %v2036, 1.0
    %v2040 = vrcp.pop %v2037
    %v2041 = vmul.f32 1.0, %v2040
    %v2042 = vrcp.pop %v2038
    %v2043 = vmul.f32 1.0, %v2042
    %v2044 = vrcp.pop %v2039
    %v2045 = vmul.f32 1.0, %v2044
    %v2046 = vtanh.pop %v2027
    %v2047 = vmul.f32 %v2043, %v1548
    %v2048 = vmul.f32 %v2041, %v2046
    %v2049 = vadd.f32 %v2047, %v2048
    %v2050 = vtanh.pop %v2049
    %v2051 = vmul.f32 %v2045, %v2050
    %2052 = vst [vmem:[#allocation2 + $0x4] sm:$0x3] %v2051
    %2053 = vmatprep.subr.mxu0 %v355
    %2054 = vmatpush1.msra.mxu0 %v354
    %2055 = vmatprep.subr.mxu0 %v359
    %2056 = vmatpush1.msra.mxu0 %v358
    %2057 = vmatprep.subr.mxu0 %v363
    %2058 = vmatpush1.msra.mxu0 %v362
    %2059 = vmatprep.subr.mxu0 %v367
    %2060 = vmatpush1.msra.mxu0 %v366
    %2061 = vmatprep.subr.mxu0 %v371
    %2062 = vmatpush1.msra.mxu0 %v370
    %2063 = vmatprep.subr.mxu0 %v375
    %2064 = vmatpush1.msra.mxu0 %v374
    %2065 = vmatprep.subr.mxu0 %v379
    %2066 = vmatpush1.msra.mxu0 %v378
    %2067 = vmatprep.subr.mxu0 %v383
    %2068 = vmatpush1.msra.mxu0 %v382
    %2069 = vmatprep.subr.mxu0 %v387
    %2070 = vmatpush1.msra.mxu0 %v386
    %2071 = vmatprep.subr.mxu0 %v391
    %2072 = vmatpush1.msra.mxu0 %v390
    %2073 = vmatprep.subr.mxu0 %v395
    %2074 = vmatpush1.msra.mxu0 %v394
    %2075 = vmatprep.subr.mxu0 %v399
    %2076 = vmatpush1.msra.mxu0 %v398
    %2077 = vmatprep.subr.mxu0 %v403
    %2078 = vmatpush1.msra.mxu0 %v402
    %2079 = vmatprep.subr.mxu0 %v407
    %2080 = vmatpush1.msra.mxu0 %v406
    %2081 = vmatprep.subr.mxu0 %v411
    %2082 = vmatpush1.msra.mxu0 %v410
    %2083 = vmatprep.subr.mxu0 %v415
    %2084 = vmatpush1.msra.mxu0 %v414
    %2085 = vmatprep.subr.mxu0 0.0
    %2086 = vmatpush1.msra.mxu0 0.0
    %2087 = vmatprep.subr.mxu0 0.0
    %2088 = vmatpush1.msra.mxu0 0.0
    %2089 = vmatprep.subr.mxu0 0.0
    %2090 = vmatpush1.msra.mxu0 0.0
    %2091 = vmatprep.subr.mxu0 0.0
    %2092 = vmatpush1.msra.mxu0 0.0
    %2093 = vmatprep.subr.mxu0 0.0
    %2094 = vmatpush1.msra.mxu0 0.0
    %2095 = vmatprep.subr.mxu0 0.0
    %2096 = vmatpush1.msra.mxu0 0.0
    %2097 = vmatprep.subr.mxu0 0.0
    %2098 = vmatpush1.msra.mxu0 0.0
    %2099 = vmatprep.subr.mxu0 0.0
    %2100 = vmatpush1.msra.mxu0 0.0
    %2101 = vmatprep.subr.mxu0 0.0
    %2102 = vmatpush1.msra.mxu0 0.0
    %2103 = vmatprep.subr.mxu0 0.0
    %2104 = vmatpush1.msra.mxu0 0.0
    %2105 = vmatprep.subr.mxu0 0.0
    %2106 = vmatpush1.msra.mxu0 0.0
    %2107 = vmatprep.subr.mxu0 0.0
    %2108 = vmatpush1.msra.mxu0 0.0
    %2109 = vmatprep.subr.mxu0 0.0
    %2110 = vmatpush1.msra.mxu0 0.0
    %2111 = vmatprep.subr.mxu0 0.0
    %2112 = vmatpush1.msra.mxu0 0.0
    %2113 = vmatprep.subr.mxu0 0.0
    %2114 = vmatpush1.msra.mxu0 0.0
    %2115 = vmatprep.subr.mxu0 0.0
    %2116 = vmatpush1.msra.mxu0 0.0
    %2117 = vmatprep.mubr.f32.mxu0 0.0
    %2118 = vmatmul.mubr.f32.gmra.mrb[0].mxu0 %v1880
    %v2119 = vpop.f32.mrb[0].mxu0
    %v2120 = vadd.f32 0.0, %v2119
    %v2121 = vpop.f32.mrb[0].mxu0
    %v2122 = vadd.f32 0.0, %v2121
    %2123 = vdwg.mxu0
    %2124 = vmatprep.subr.mxu0 %v357
    %2125 = vmatpush1.msra.mxu0 %v356
    %2126 = vmatprep.subr.mxu0 %v361
    %2127 = vmatpush1.msra.mxu0 %v360
    %2128 = vmatprep.subr.mxu0 %v365
    %2129 = vmatpush1.msra.mxu0 %v364
    %2130 = vmatprep.subr.mxu0 %v369
    %2131 = vmatpush1.msra.mxu0 %v368
    %2132 = vmatprep.subr.mxu0 %v373
    %2133 = vmatpush1.msra.mxu0 %v372
    %2134 = vmatprep.subr.mxu0 %v377
    %2135 = vmatpush1.msra.mxu0 %v376
    %2136 = vmatprep.subr.mxu0 %v381
    %2137 = vmatpush1.msra.mxu0 %v380
    %2138 = vmatprep.subr.mxu0 %v385
    %2139 = vmatpush1.msra.mxu0 %v384
    %2140 = vmatprep.subr.mxu0 %v389
    %2141 = vmatpush1.msra.mxu0 %v388
    %2142 = vmatprep.subr.mxu0 %v393
    %2143 = vmatpush1.msra.mxu0 %v392
    %2144 = vmatprep.subr.mxu0 %v397
    %2145 = vmatpush1.msra.mxu0 %v396
    %2146 = vmatprep.subr.mxu0 %v401
    %2147 = vmatpush1.msra.mxu0 %v400
    %2148 = vmatprep.subr.mxu0 %v405
    %2149 = vmatpush1.msra.mxu0 %v404
    %2150 = vmatprep.subr.mxu0 %v409
    %2151 = vmatpush1.msra.mxu0 %v408
    %2152 = vmatprep.subr.mxu0 %v413
    %2153 = vmatpush1.msra.mxu0 %v412
    %2154 = vmatprep.subr.mxu0 %v417
    %2155 = vmatpush1.msra.mxu0 %v416
    %2156 = vmatprep.subr.mxu0 0.0
    %2157 = vmatpush1.msra.mxu0 0.0
    %2158 = vmatprep.subr.mxu0 0.0
    %2159 = vmatpush1.msra.mxu0 0.0
    %2160 = vmatprep.subr.mxu0 0.0
    %2161 = vmatpush1.msra.mxu0 0.0
    %2162 = vmatprep.subr.mxu0 0.0
    %2163 = vmatpush1.msra.mxu0 0.0
    %2164 = vmatprep.subr.mxu0 0.0
    %2165 = vmatpush1.msra.mxu0 0.0
    %2166 = vmatprep.subr.mxu0 0.0
    %2167 = vmatpush1.msra.mxu0 0.0
    %2168 = vmatprep.subr.mxu0 0.0
    %2169 = vmatpush1.msra.mxu0 0.0
    %2170 = vmatprep.subr.mxu0 0.0
    %2171 = vmatpush1.msra.mxu0 0.0
    %2172 = vmatprep.subr.mxu0 0.0
    %2173 = vmatpush1.msra.mxu0 0.0
    %2174 = vmatprep.subr.mxu0 0.0
    %2175 = vmatpush1.msra.mxu0 0.0
    %2176 = vmatprep.subr.mxu0 0.0
    %2177 = vmatpush1.msra.mxu0 0.0
    %2178 = vmatprep.subr.mxu0 0.0
    %2179 = vmatpush1.msra.mxu0 0.0
    %2180 = vmatprep.subr.mxu0 0.0
    %2181 = vmatpush1.msra.mxu0 0.0
    %2182 = vmatprep.subr.mxu0 0.0
    %2183 = vmatpush1.msra.mxu0 0.0
    %2184 = vmatprep.subr.mxu0 0.0
    %2185 = vmatpush1.msra.mxu0 0.0
    %2186 = vmatprep.subr.mxu0 0.0
    %2187 = vmatpush1.msra.mxu0 0.0
    %2188 = vmatprep.mubr.f32.mxu0 0.0
    %2189 = vmatmul.mubr.f32.gmra.mrb[0].mxu0 %v1880
    %v2190 = vpop.f32.mrb[0].mxu0
    %v2191 = vadd.f32 0.0, %v2190
    %v2192 = vpop.f32.mrb[0].mxu0
    %v2193 = vadd.f32 0.0, %v2192
    %2194 = vdwg.mxu0
    %v2199 = vrot.slane %v2120, 2
    %v2200 = vrot.slane %v2122, 2
    %v2201 = vrot.slane %v2191, 2
    %v2202 = vrot.slane %v2193, 2
    %v2207 = vadd.f32 %v267, %v2199
    %v2208 = vadd.f32 %v269, %v2200
    %v2209 = vadd.f32 %v344, %v2201
    %v2210 = vadd.f32 %v346, %v2202
    %v2211 = vxor.u32 %v2207, 2147483648
    %v2212 = vxor.u32 %v2208, 2147483648
    %v2213 = vxor.u32 %v2209, 2147483648
    %v2214 = vmul.f32 %v2211, 1.442695
    %v2215 = vpow.pop %v2214
    %v2216 = vmul.f32 %v2212, 1.442695
    %v2217 = vpow.pop %v2216
    %v2218 = vmul.f32 %v2213, 1.442695
    %v2219 = vpow.pop %v2218
    %v2220 = vadd.f32 %v2215, 1.0
    %v2221 = vadd.f32 %v2217, 1.0
    %v2222 = vadd.f32 %v2219, 1.0
    %v2223 = vrcp.pop %v2220
    %v2224 = vmul.f32 1.0, %v2223
    %v2225 = vrcp.pop %v2221
    %v2226 = vmul.f32 1.0, %v2225
    %v2227 = vrcp.pop %v2222
    %v2228 = vmul.f32 1.0, %v2227
    %v2229 = vtanh.pop %v2210
    %v2231 = vrot.slane %v1734, 6
    %v2233 = vmul.f32 %v2226, %v2231
    %v2234 = vmul.f32 %v2224, %v2229
    %v2235 = vadd.f32 %v2233, %v2234
    %v2236 = vtanh.pop %v2235
    %v2237 = vmul.f32 %v2228, %v2236
    %2238 = vmatprep.subr.mxu0 %v483
    %2239 = vmatpush1.msra.mxu0 %v482
    %2240 = vmatprep.subr.mxu0 %v487
    %2241 = vmatpush1.msra.mxu0 %v486
    %2242 = vmatprep.subr.mxu0 %v491
    %2243 = vmatpush1.msra.mxu0 %v490
    %2244 = vmatprep.subr.mxu0 %v495
    %2245 = vmatpush1.msra.mxu0 %v494
    %2246 = vmatprep.subr.mxu0 %v499
    %2247 = vmatpush1.msra.mxu0 %v498
    %2248 = vmatprep.subr.mxu0 %v503
    %2249 = vmatpush1.msra.mxu0 %v502
    %2250 = vmatprep.subr.mxu0 %v507
    %2251 = vmatpush1.msra.mxu0 %v506
    %2252 = vmatprep.subr.mxu0 %v511
    %2253 = vmatpush1.msra.mxu0 %v510
    %2254 = vmatprep.subr.mxu0 %v515
    %2255 = vmatpush1.msra.mxu0 %v514
    %2256 = vmatprep.subr.mxu0 %v519
    %2257 = vmatpush1.msra.mxu0 %v518
    %2258 = vmatprep.subr.mxu0 %v523
    %2259 = vmatpush1.msra.mxu0 %v522
    %2260 = vmatprep.subr.mxu0 %v527
    %2261 = vmatpush1.msra.mxu0 %v526
    %2262 = vmatprep.subr.mxu0 %v531
    %2263 = vmatpush1.msra.mxu0 %v530
    %2264 = vmatprep.subr.mxu0 %v535
    %2265 = vmatpush1.msra.mxu0 %v534
    %2266 = vmatprep.subr.mxu0 %v539
    %2267 = vmatpush1.msra.mxu0 %v538
    %2268 = vmatprep.subr.mxu0 %v543
    %2269 = vmatpush1.msra.mxu0 %v542
    %2270 = vmatprep.subr.mxu0 0.0
    %2271 = vmatpush1.msra.mxu0 0.0
    %2272 = vmatprep.subr.mxu0 0.0
    %2273 = vmatpush1.msra.mxu0 0.0
    %2274 = vmatprep.subr.mxu0 0.0
    %2275 = vmatpush1.msra.mxu0 0.0
    %2276 = vmatprep.subr.mxu0 0.0
    %2277 = vmatpush1.msra.mxu0 0.0
    %2278 = vmatprep.subr.mxu0 0.0
    %2279 = vmatpush1.msra.mxu0 0.0
    %2280 = vmatprep.subr.mxu0 0.0
    %2281 = vmatpush1.msra.mxu0 0.0
    %2282 = vmatprep.subr.mxu0 0.0
    %2283 = vmatpush1.msra.mxu0 0.0
    %2284 = vmatprep.subr.mxu0 0.0
    %2285 = vmatpush1.msra.mxu0 0.0
    %2286 = vmatprep.subr.mxu0 0.0
    %2287 = vmatpush1.msra.mxu0 0.0
    %2288 = vmatprep.subr.mxu0 0.0
    %2289 = vmatpush1.msra.mxu0 0.0
    %2290 = vmatprep.subr.mxu0 0.0
    %2291 = vmatpush1.msra.mxu0 0.0
    %2292 = vmatprep.subr.mxu0 0.0
    %2293 = vmatpush1.msra.mxu0 0.0
    %2294 = vmatprep.subr.mxu0 0.0
    %2295 = vmatpush1.msra.mxu0 0.0
    %2296 = vmatprep.subr.mxu0 0.0
    %2297 = vmatpush1.msra.mxu0 0.0
    %2298 = vmatprep.subr.mxu0 0.0
    %2299 = vmatpush1.msra.mxu0 0.0
    %2300 = vmatprep.subr.mxu0 0.0
    %2301 = vmatpush1.msra.mxu0 0.0
    %2302 = vmatprep.mubr.f32.mxu0 0.0
    %2303 = vmatmul.mubr.f32.gmra.mrb[0].mxu0 %v2051
    %v2304 = vpop.f32.mrb[0].mxu0
    %v2305 = vadd.f32 0.0, %v2304
    %v2306 = vpop.f32.mrb[0].mxu0
    %v2307 = vadd.f32 0.0, %v2306
    %2308 = vdwg.mxu0
    %2309 = vmatprep.subr.mxu0 %v485
    %2310 = vmatpush1.msra.mxu0 %v484
    %2311 = vmatprep.subr.mxu0 %v489
    %2312 = vmatpush1.msra.mxu0 %v488
    %2313 = vmatprep.subr.mxu0 %v493
    %2314 = vmatpush1.msra.mxu0 %v492
    %2315 = vmatprep.subr.mxu0 %v497
    %2316 = vmatpush1.msra.mxu0 %v496
    %2317 = vmatprep.subr.mxu0 %v501
    %2318 = vmatpush1.msra.mxu0 %v500
    %2319 = vmatprep.subr.mxu0 %v505
    %2320 = vmatpush1.msra.mxu0 %v504
    %2321 = vmatprep.subr.mxu0 %v509
    %2322 = vmatpush1.msra.mxu0 %v508
    %2323 = vmatprep.subr.mxu0 %v513
    %2324 = vmatpush1.msra.mxu0 %v512
    %2325 = vmatprep.subr.mxu0 %v517
    %2326 = vmatpush1.msra.mxu0 %v516
    %2327 = vmatprep.subr.mxu0 %v521
    %2328 = vmatpush1.msra.mxu0 %v520
    %2329 = vmatprep.subr.mxu0 %v525
    %2330 = vmatpush1.msra.mxu0 %v524
    %2331 = vmatprep.subr.mxu0 %v529
    %2332 = vmatpush1.msra.mxu0 %v528
    %2333 = vmatprep.subr.mxu0 %v533
    %2334 = vmatpush1.msra.mxu0 %v532
    %2335 = vmatprep.subr.mxu0 %v537
    %2336 = vmatpush1.msra.mxu0 %v536
    %2337 = vmatprep.subr.mxu0 %v541
    %2338 = vmatpush1.msra.mxu0 %v540
    %2339 = vmatprep.subr.mxu0 %v545
    %2340 = vmatpush1.msra.mxu0 %v544
    %2341 = vmatprep.subr.mxu0 0.0
    %2342 = vmatpush1.msra.mxu0 0.0
    %2343 = vmatprep.subr.mxu0 0.0
    %2344 = vmatpush1.msra.mxu0 0.0
    %2345 = vmatprep.subr.mxu0 0.0
    %2346 = vmatpush1.msra.mxu0 0.0
    %2347 = vmatprep.subr.mxu0 0.0
    %2348 = vmatpush1.msra.mxu0 0.0
    %2349 = vmatprep.subr.mxu0 0.0
    %2350 = vmatpush1.msra.mxu0 0.0
    %2351 = vmatprep.subr.mxu0 0.0
    %2352 = vmatpush1.msra.mxu0 0.0
    %2353 = vmatprep.subr.mxu0 0.0
    %2354 = vmatpush1.msra.mxu0 0.0
    %2355 = vmatprep.subr.mxu0 0.0
    %2356 = vmatpush1.msra.mxu0 0.0
    %2357 = vmatprep.subr.mxu0 0.0
    %2358 = vmatpush1.msra.mxu0 0.0
    %2359 = vmatprep.subr.mxu0 0.0
    %2360 = vmatpush1.msra.mxu0 0.0
    %2361 = vmatprep.subr.mxu0 0.0
    %2362 = vmatpush1.msra.mxu0 0.0
    %2363 = vmatprep.subr.mxu0 0.0
    %2364 = vmatpush1.msra.mxu0 0.0
    %2365 = vmatprep.subr.mxu0 0.0
    %2366 = vmatpush1.msra.mxu0 0.0
    %2367 = vmatprep.subr.mxu0 0.0
    %2368 = vmatpush1.msra.mxu0 0.0
    %2369 = vmatprep.subr.mxu0 0.0
    %2370 = vmatpush1.msra.mxu0 0.0
    %2371 = vmatprep.subr.mxu0 0.0
    %2372 = vmatpush1.msra.mxu0 0.0
    %2373 = vmatprep.mubr.f32.mxu0 0.0
    %2374 = vmatmul.mubr.f32.gmra.mrb[0].mxu0 %v2051
    %v2375 = vpop.f32.mrb[0].mxu0
    %v2376 = vadd.f32 0.0, %v2375
    %v2377 = vpop.f32.mrb[0].mxu0
    %v2378 = vadd.f32 0.0, %v2377
    %2379 = vdwg.mxu0
    %v2381 = vrot.slane %v2237, 6
    %2383 = vmatprep.subr.mxu0 %v419
    %2384 = vmatpush1.msra.mxu0 %v418
    %2385 = vmatprep.subr.mxu0 %v423
    %2386 = vmatpush1.msra.mxu0 %v422
    %2387 = vmatprep.subr.mxu0 %v427
    %2388 = vmatpush1.msra.mxu0 %v426
    %2389 = vmatprep.subr.mxu0 %v431
    %2390 = vmatpush1.msra.mxu0 %v430
    %2391 = vmatprep.subr.mxu0 %v435
    %2392 = vmatpush1.msra.mxu0 %v434
    %2393 = vmatprep.subr.mxu0 %v439
    %2394 = vmatpush1.msra.mxu0 %v438
    %2395 = vmatprep.subr.mxu0 %v443
    %2396 = vmatpush1.msra.mxu0 %v442
    %2397 = vmatprep.subr.mxu0 %v447
    %2398 = vmatpush1.msra.mxu0 %v446
    %2399 = vmatprep.subr.mxu0 %v451
    %2400 = vmatpush1.msra.mxu0 %v450
    %2401 = vmatprep.subr.mxu0 %v455
    %2402 = vmatpush1.msra.mxu0 %v454
    %2403 = vmatprep.subr.mxu0 %v459
    %2404 = vmatpush1.msra.mxu0 %v458
    %2405 = vmatprep.subr.mxu0 %v463
    %2406 = vmatpush1.msra.mxu0 %v462
    %2407 = vmatprep.subr.mxu0 %v467
    %2408 = vmatpush1.msra.mxu0 %v466
    %2409 = vmatprep.subr.mxu0 %v471
    %2410 = vmatpush1.msra.mxu0 %v470
    %2411 = vmatprep.subr.mxu0 %v475
    %2412 = vmatpush1.msra.mxu0 %v474
    %2413 = vmatprep.subr.mxu0 %v479
    %2414 = vmatpush1.msra.mxu0 %v478
    %2415 = vmatprep.subr.mxu0 0.0
    %2416 = vmatpush1.msra.mxu0 0.0
    %2417 = vmatprep.subr.mxu0 0.0
    %2418 = vmatpush1.msra.mxu0 0.0
    %2419 = vmatprep.subr.mxu0 0.0
    %2420 = vmatpush1.msra.mxu0 0.0
    %2421 = vmatprep.subr.mxu0 0.0
    %2422 = vmatpush1.msra.mxu0 0.0
    %2423 = vmatprep.subr.mxu0 0.0
    %2424 = vmatpush1.msra.mxu0 0.0
    %2425 = vmatprep.subr.mxu0 0.0
    %2426 = vmatpush1.msra.mxu0 0.0
    %2427 = vmatprep.subr.mxu0 0.0
    %2428 = vmatpush1.msra.mxu0 0.0
    %2429 = vmatprep.subr.mxu0 0.0
    %2430 = vmatpush1.msra.mxu0 0.0
    %2431 = vmatprep.subr.mxu0 0.0
    %2432 = vmatpush1.msra.mxu0 0.0
    %2433 = vmatprep.subr.mxu0 0.0
    %2434 = vmatpush1.msra.mxu0 0.0
    %2435 = vmatprep.subr.mxu0 0.0
    %2436 = vmatpush1.msra.mxu0 0.0
    %2437 = vmatprep.subr.mxu0 0.0
    %2438 = vmatpush1.msra.mxu0 0.0
    %2439 = vmatprep.subr.mxu0 0.0
    %2440 = vmatpush1.msra.mxu0 0.0
    %2441 = vmatprep.subr.mxu0 0.0
    %2442 = vmatpush1.msra.mxu0 0.0
    %2443 = vmatprep.subr.mxu0 0.0
    %2444 = vmatpush1.msra.mxu0 0.0
    %2445 = vmatprep.subr.mxu0 0.0
    %2446 = vmatpush1.msra.mxu0 0.0
    %2447 = vmatprep.mubr.f32.mxu0 0.0
    %2448 = vmatmul.mubr.f32.gmra.mrb[0].mxu0 %v2381
    %v2449 = vpop.f32.mrb[0].mxu0
    %v2450 = vadd.f32 %v2305, %v2449
    %v2451 = vpop.f32.mrb[0].mxu0
    %v2452 = vadd.f32 %v2307, %v2451
    %2453 = vdwg.mxu0
    %2454 = vmatprep.subr.mxu0 %v421
    %2455 = vmatpush1.msra.mxu0 %v420
    %2456 = vmatprep.subr.mxu0 %v425
    %2457 = vmatpush1.msra.mxu0 %v424
    %2458 = vmatprep.subr.mxu0 %v429
    %2459 = vmatpush1.msra.mxu0 %v428
    %2460 = vmatprep.subr.mxu0 %v433
    %2461 = vmatpush1.msra.mxu0 %v432
    %2462 = vmatprep.subr.mxu0 %v437
    %2463 = vmatpush1.msra.mxu0 %v436
    %2464 = vmatprep.subr.mxu0 %v441
    %2465 = vmatpush1.msra.mxu0 %v440
    %2466 = vmatprep.subr.mxu0 %v445
    %2467 = vmatpush1.msra.mxu0 %v444
    %2468 = vmatprep.subr.mxu0 %v449
    %2469 = vmatpush1.msra.mxu0 %v448
    %2470 = vmatprep.subr.mxu0 %v453
    %2471 = vmatpush1.msra.mxu0 %v452
    %2472 = vmatprep.subr.mxu0 %v457
    %2473 = vmatpush1.msra.mxu0 %v456
    %2474 = vmatprep.subr.mxu0 %v461
    %2475 = vmatpush1.msra.mxu0 %v460
    %2476 = vmatprep.subr.mxu0 %v465
    %2477 = vmatpush1.msra.mxu0 %v464
    %2478 = vmatprep.subr.mxu0 %v469
    %2479 = vmatpush1.msra.mxu0 %v468
    %2480 = vmatprep.subr.mxu0 %v473
    %2481 = vmatpush1.msra.mxu0 %v472
    %2482 = vmatprep.subr.mxu0 %v477
    %2483 = vmatpush1.msra.mxu0 %v476
    %2484 = vmatprep.subr.mxu0 %v481
    %2485 = vmatpush1.msra.mxu0 %v480
    %2486 = vmatprep.subr.mxu0 0.0
    %2487 = vmatpush1.msra.mxu0 0.0
    %2488 = vmatprep.subr.mxu0 0.0
    %2489 = vmatpush1.msra.mxu0 0.0
    %2490 = vmatprep.subr.mxu0 0.0
    %2491 = vmatpush1.msra.mxu0 0.0
    %2492 = vmatprep.subr.mxu0 0.0
    %2493 = vmatpush1.msra.mxu0 0.0
    %2494 = vmatprep.subr.mxu0 0.0
    %2495 = vmatpush1.msra.mxu0 0.0
    %2496 = vmatprep.subr.mxu0 0.0
    %2497 = vmatpush1.msra.mxu0 0.0
    %2498 = vmatprep.subr.mxu0 0.0
    %2499 = vmatpush1.msra.mxu0 0.0
    %2500 = vmatprep.subr.mxu0 0.0
    %2501 = vmatpush1.msra.mxu0 0.0
    %2502 = vmatprep.subr.mxu0 0.0
    %2503 = vmatpush1.msra.mxu0 0.0
    %2504 = vmatprep.subr.mxu0 0.0
    %2505 = vmatpush1.msra.mxu0 0.0
    %2506 = vmatprep.subr.mxu0 0.0
    %2507 = vmatpush1.msra.mxu0 0.0
    %2508 = vmatprep.subr.mxu0 0.0
    %2509 = vmatpush1.msra.mxu0 0.0
    %2510 = vmatprep.subr.mxu0 0.0
    %2511 = vmatpush1.msra.mxu0 0.0
    %2512 = vmatprep.subr.mxu0 0.0
    %2513 = vmatpush1.msra.mxu0 0.0
    %2514 = vmatprep.subr.mxu0 0.0
    %2515 = vmatpush1.msra.mxu0 0.0
    %2516 = vmatprep.subr.mxu0 0.0
    %2517 = vmatpush1.msra.mxu0 0.0
    %2518 = vmatprep.mubr.f32.mxu0 0.0
    %2519 = vmatmul.mubr.f32.gmra.mrb[0].mxu0 %v2381
    %v2520 = vpop.f32.mrb[0].mxu0
    %v2521 = vadd.f32 %v2376, %v2520
    %v2522 = vpop.f32.mrb[0].mxu0
    %v2523 = vadd.f32 %v2378, %v2522
    %2524 = vdwg.mxu0
    %v2525 = vadd.f32 %v2450, %v1005
    %v2526 = vadd.f32 %v2452, %v1009
    %v2527 = vadd.f32 %v2521, %v1013
    %v2528 = vadd.f32 %v2523, %v1017
    %v2529 = vxor.u32 %v2525, 2147483648
    %v2530 = vxor.u32 %v2526, 2147483648
    %v2531 = vxor.u32 %v2527, 2147483648
    %v2532 = vmul.f32 %v2529, 1.442695
    %v2533 = vpow.pop %v2532
    %v2534 = vmul.f32 %v2530, 1.442695
    %v2535 = vpow.pop %v2534
    %v2536 = vmul.f32 %v2531, 1.442695
    %v2537 = vpow.pop %v2536
    %v2538 = vadd.f32 %v2533, 1.0
    %v2539 = vadd.f32 %v2535, 1.0
    %v2540 = vadd.f32 %v2537, 1.0
    %v2541 = vrcp.pop %v2538
    %v2542 = vmul.f32 1.0, %v2541
    %v2543 = vrcp.pop %v2539
    %v2544 = vmul.f32 1.0, %v2543
    %v2545 = vrcp.pop %v2540
    %v2546 = vmul.f32 1.0, %v2545
    %v2547 = vtanh.pop %v2528
    %v2548 = vmul.f32 %v2544, %v2049
    %v2549 = vmul.f32 %v2542, %v2547
    %v2550 = vadd.f32 %v2548, %v2549
    %v2551 = vtanh.pop %v2550
    %v2552 = vmul.f32 %v2546, %v2551
    %2553 = vst [vmem:[#allocation2 + $0x6] sm:$0x3] %v2552
    %2554 = vmatprep.subr.mxu0 %v355
    %2555 = vmatpush1.msra.mxu0 %v354
    %2556 = vmatprep.subr.mxu0 %v359
    %2557 = vmatpush1.msra.mxu0 %v358
    %2558 = vmatprep.subr.mxu0 %v363
    %2559 = vmatpush1.msra.mxu0 %v362
    %2560 = vmatprep.subr.mxu0 %v367
    %2561 = vmatpush1.msra.mxu0 %v366
    %2562 = vmatprep.subr.mxu0 %v371
    %2563 = vmatpush1.msra.mxu0 %v370
    %2564 = vmatprep.subr.mxu0 %v375
    %2565 = vmatpush1.msra.mxu0 %v374
    %2566 = vmatprep.subr.mxu0 %v379
    %2567 = vmatpush1.msra.mxu0 %v378
    %2568 = vmatprep.subr.mxu0 %v383
    %2569 = vmatpush1.msra.mxu0 %v382
    %2570 = vmatprep.subr.mxu0 %v387
    %2571 = vmatpush1.msra.mxu0 %v386
    %2572 = vmatprep.subr.mxu0 %v391
    %2573 = vmatpush1.msra.mxu0 %v390
    %2574 = vmatprep.subr.mxu0 %v395
    %2575 = vmatpush1.msra.mxu0 %v394
    %2576 = vmatprep.subr.mxu0 %v399
    %2577 = vmatpush1.msra.mxu0 %v398
    %2578 = vmatprep.subr.mxu0 %v403
    %2579 = vmatpush1.msra.mxu0 %v402
    %2580 = vmatprep.subr.mxu0 %v407
    %2581 = vmatpush1.msra.mxu0 %v406
    %2582 = vmatprep.subr.mxu0 %v411
    %2583 = vmatpush1.msra.mxu0 %v410
    %2584 = vmatprep.subr.mxu0 %v415
    %2585 = vmatpush1.msra.mxu0 %v414
    %2586 = vmatprep.subr.mxu0 0.0
    %2587 = vmatpush1.msra.mxu0 0.0
    %2588 = vmatprep.subr.mxu0 0.0
    %2589 = vmatpush1.msra.mxu0 0.0
    %2590 = vmatprep.subr.mxu0 0.0
    %2591 = vmatpush1.msra.mxu0 0.0
    %2592 = vmatprep.subr.mxu0 0.0
    %2593 = vmatpush1.msra.mxu0 0.0
    %2594 = vmatprep.subr.mxu0 0.0
    %2595 = vmatpush1.msra.mxu0 0.0
    %2596 = vmatprep.subr.mxu0 0.0
    %2597 = vmatpush1.msra.mxu0 0.0
    %2598 = vmatprep.subr.mxu0 0.0
    %2599 = vmatpush1.msra.mxu0 0.0
    %2600 = vmatprep.subr.mxu0 0.0
    %2601 = vmatpush1.msra.mxu0 0.0
    %2602 = vmatprep.subr.mxu0 0.0
    %2603 = vmatpush1.msra.mxu0 0.0
    %2604 = vmatprep.subr.mxu0 0.0
    %2605 = vmatpush1.msra.mxu0 0.0
    %2606 = vmatprep.subr.mxu0 0.0
    %2607 = vmatpush1.msra.mxu0 0.0
    %2608 = vmatprep.subr.mxu0 0.0
    %2609 = vmatpush1.msra.mxu0 0.0
    %2610 = vmatprep.subr.mxu0 0.0
    %2611 = vmatpush1.msra.mxu0 0.0
    %2612 = vmatprep.subr.mxu0 0.0
    %2613 = vmatpush1.msra.mxu0 0.0
    %2614 = vmatprep.subr.mxu0 0.0
    %2615 = vmatpush1.msra.mxu0 0.0
    %2616 = vmatprep.subr.mxu0 0.0
    %2617 = vmatpush1.msra.mxu0 0.0
    %2618 = vmatprep.mubr.f32.mxu0 0.0
    %2619 = vmatmul.mubr.f32.gmra.mrb[0].mxu0 %v2381
    %v2620 = vpop.f32.mrb[0].mxu0
    %v2621 = vadd.f32 0.0, %v2620
    %v2622 = vpop.f32.mrb[0].mxu0
    %v2623 = vadd.f32 0.0, %v2622
    %2624 = vdwg.mxu0
    %2625 = vmatprep.subr.mxu0 %v357
    %2626 = vmatpush1.msra.mxu0 %v356
    %2627 = vmatprep.subr.mxu0 %v361
    %2628 = vmatpush1.msra.mxu0 %v360
    %2629 = vmatprep.subr.mxu0 %v365
    %2630 = vmatpush1.msra.mxu0 %v364
    %2631 = vmatprep.subr.mxu0 %v369
    %2632 = vmatpush1.msra.mxu0 %v368
    %2633 = vmatprep.subr.mxu0 %v373
    %2634 = vmatpush1.msra.mxu0 %v372
    %2635 = vmatprep.subr.mxu0 %v377
    %2636 = vmatpush1.msra.mxu0 %v376
    %2637 = vmatprep.subr.mxu0 %v381
    %2638 = vmatpush1.msra.mxu0 %v380
    %2639 = vmatprep.subr.mxu0 %v385
    %2640 = vmatpush1.msra.mxu0 %v384
    %2641 = vmatprep.subr.mxu0 %v389
    %2642 = vmatpush1.msra.mxu0 %v388
    %2643 = vmatprep.subr.mxu0 %v393
    %2644 = vmatpush1.msra.mxu0 %v392
    %2645 = vmatprep.subr.mxu0 %v397
    %2646 = vmatpush1.msra.mxu0 %v396
    %2647 = vmatprep.subr.mxu0 %v401
    %2648 = vmatpush1.msra.mxu0 %v400
    %2649 = vmatprep.subr.mxu0 %v405
    %2650 = vmatpush1.msra.mxu0 %v404
    %2651 = vmatprep.subr.mxu0 %v409
    %2652 = vmatpush1.msra.mxu0 %v408
    %2653 = vmatprep.subr.mxu0 %v413
    %2654 = vmatpush1.msra.mxu0 %v412
    %2655 = vmatprep.subr.mxu0 %v417
    %2656 = vmatpush1.msra.mxu0 %v416
    %2657 = vmatprep.subr.mxu0 0.0
    %2658 = vmatpush1.msra.mxu0 0.0
    %2659 = vmatprep.subr.mxu0 0.0
    %2660 = vmatpush1.msra.mxu0 0.0
    %2661 = vmatprep.subr.mxu0 0.0
    %2662 = vmatpush1.msra.mxu0 0.0
    %2663 = vmatprep.subr.mxu0 0.0
    %2664 = vmatpush1.msra.mxu0 0.0
    %2665 = vmatprep.subr.mxu0 0.0
    %2666 = vmatpush1.msra.mxu0 0.0
    %2667 = vmatprep.subr.mxu0 0.0
    %2668 = vmatpush1.msra.mxu0 0.0
    %2669 = vmatprep.subr.mxu0 0.0
    %2670 = vmatpush1.msra.mxu0 0.0
    %2671 = vmatprep.subr.mxu0 0.0
    %2672 = vmatpush1.msra.mxu0 0.0
    %2673 = vmatprep.subr.mxu0 0.0
    %2674 = vmatpush1.msra.mxu0 0.0
    %2675 = vmatprep.subr.mxu0 0.0
    %2676 = vmatpush1.msra.mxu0 0.0
    %2677 = vmatprep.subr.mxu0 0.0
    %2678 = vmatpush1.msra.mxu0 0.0
    %2679 = vmatprep.subr.mxu0 0.0
    %2680 = vmatpush1.msra.mxu0 0.0
    %2681 = vmatprep.subr.mxu0 0.0
    %2682 = vmatpush1.msra.mxu0 0.0
    %2683 = vmatprep.subr.mxu0 0.0
    %2684 = vmatpush1.msra.mxu0 0.0
    %2685 = vmatprep.subr.mxu0 0.0
    %2686 = vmatpush1.msra.mxu0 0.0
    %2687 = vmatprep.subr.mxu0 0.0
    %2688 = vmatpush1.msra.mxu0 0.0
    %2689 = vmatprep.mubr.f32.mxu0 0.0
    %2690 = vmatmul.mubr.f32.gmra.mrb[0].mxu0 %v2381
    %v2691 = vpop.f32.mrb[0].mxu0
    %v2692 = vadd.f32 0.0, %v2691
    %v2693 = vpop.f32.mrb[0].mxu0
    %v2694 = vadd.f32 0.0, %v2693
    %2695 = vdwg.mxu0
    %v2696 = vadd.f32 %v273, %v2621
    %v2697 = vadd.f32 %v275, %v2623
    %v2698 = vadd.f32 %v350, %v2692
    %v2699 = vadd.f32 %v352, %v2694
    %v2700 = vxor.u32 %v2696, 2147483648
    %v2701 = vxor.u32 %v2697, 2147483648
    %v2702 = vxor.u32 %v2698, 2147483648
    %v2703 = vmul.f32 %v2700, 1.442695
    %v2704 = vpow.pop %v2703
    %v2705 = vmul.f32 %v2701, 1.442695
    %v2706 = vpow.pop %v2705
    %v2707 = vmul.f32 %v2702, 1.442695
    %v2708 = vpow.pop %v2707
    %v2709 = vadd.f32 %v2704, 1.0
    %v2710 = vadd.f32 %v2706, 1.0
    %v2711 = vadd.f32 %v2708, 1.0
    %v2712 = vrcp.pop %v2709
    %v2713 = vmul.f32 1.0, %v2712
    %v2714 = vrcp.pop %v2710
    %v2715 = vmul.f32 1.0, %v2714
    %v2716 = vrcp.pop %v2711
    %v2717 = vmul.f32 1.0, %v2716
    %v2718 = vtanh.pop %v2699
    %v2720 = vrot.slane %v2235, 6
    %v2722 = vmul.f32 %v2715, %v2720
    %v2723 = vmul.f32 %v2713, %v2718
    %v2724 = vadd.f32 %v2722, %v2723
    %v2725 = vtanh.pop %v2724
    %v2726 = vmul.f32 %v2717, %v2725
    %2727 = vmatprep.subr.mxu0 %v483
    %2728 = vmatpush1.msra.mxu0 %v482
    %2729 = vmatprep.subr.mxu0 %v487
    %2730 = vmatpush1.msra.mxu0 %v486
    %2731 = vmatprep.subr.mxu0 %v491
    %2732 = vmatpush1.msra.mxu0 %v490
    %2733 = vmatprep.subr.mxu0 %v495
    %2734 = vmatpush1.msra.mxu0 %v494
    %2735 = vmatprep.subr.mxu0 %v499
    %2736 = vmatpush1.msra.mxu0 %v498
    %2737 = vmatprep.subr.mxu0 %v503
    %2738 = vmatpush1.msra.mxu0 %v502
    %2739 = vmatprep.subr.mxu0 %v507
    %2740 = vmatpush1.msra.mxu0 %v506
    %2741 = vmatprep.subr.mxu0 %v511
    %2742 = vmatpush1.msra.mxu0 %v510
    %2743 = vmatprep.subr.mxu0 %v515
    %2744 = vmatpush1.msra.mxu0 %v514
    %2745 = vmatprep.subr.mxu0 %v519
    %2746 = vmatpush1.msra.mxu0 %v518
    %2747 = vmatprep.subr.mxu0 %v523
    %2748 = vmatpush1.msra.mxu0 %v522
    %2749 = vmatprep.subr.mxu0 %v527
    %2750 = vmatpush1.msra.mxu0 %v526
    %2751 = vmatprep.subr.mxu0 %v531
    %2752 = vmatpush1.msra.mxu0 %v530
    %2753 = vmatprep.subr.mxu0 %v535
    %2754 = vmatpush1.msra.mxu0 %v534
    %2755 = vmatprep.subr.mxu0 %v539
    %2756 = vmatpush1.msra.mxu0 %v538
    %2757 = vmatprep.subr.mxu0 %v543
    %2758 = vmatpush1.msra.mxu0 %v542
    %2759 = vmatprep.subr.mxu0 0.0
    %2760 = vmatpush1.msra.mxu0 0.0
    %2761 = vmatprep.subr.mxu0 0.0
    %2762 = vmatpush1.msra.mxu0 0.0
    %2763 = vmatprep.subr.mxu0 0.0
    %2764 = vmatpush1.msra.mxu0 0.0
    %2765 = vmatprep.subr.mxu0 0.0
    %2766 = vmatpush1.msra.mxu0 0.0
    %2767 = vmatprep.subr.mxu0 0.0
    %2768 = vmatpush1.msra.mxu0 0.0
    %2769 = vmatprep.subr.mxu0 0.0
    %2770 = vmatpush1.msra.mxu0 0.0
    %2771 = vmatprep.subr.mxu0 0.0
    %2772 = vmatpush1.msra.mxu0 0.0
    %2773 = vmatprep.subr.mxu0 0.0
    %2774 = vmatpush1.msra.mxu0 0.0
    %2775 = vmatprep.subr.mxu0 0.0
    %2776 = vmatpush1.msra.mxu0 0.0
    %2777 = vmatprep.subr.mxu0 0.0
    %2778 = vmatpush1.msra.mxu0 0.0
    %2779 = vmatprep.subr.mxu0 0.0
    %2780 = vmatpush1.msra.mxu0 0.0
    %2781 = vmatprep.subr.mxu0 0.0
    %2782 = vmatpush1.msra.mxu0 0.0
    %2783 = vmatprep.subr.mxu0 0.0
    %2784 = vmatpush1.msra.mxu0 0.0
    %2785 = vmatprep.subr.mxu0 0.0
    %2786 = vmatpush1.msra.mxu0 0.0
    %2787 = vmatprep.subr.mxu0 0.0
    %2788 = vmatpush1.msra.mxu0 0.0
    %2789 = vmatprep.subr.mxu0 0.0
    %2790 = vmatpush1.msra.mxu0 0.0
    %2791 = vmatprep.mubr.f32.mxu0 0.0
    %2792 = vmatmul.mubr.f32.gmra.mrb[0].mxu0 %v2552
    %v2793 = vpop.f32.mrb[0].mxu0
    %v2794 = vadd.f32 0.0, %v2793
    %v2795 = vpop.f32.mrb[0].mxu0
    %v2796 = vadd.f32 0.0, %v2795
    %2797 = vdwg.mxu0
    %2798 = vmatprep.subr.mxu0 %v485
    %2799 = vmatpush1.msra.mxu0 %v484
    %2800 = vmatprep.subr.mxu0 %v489
    %2801 = vmatpush1.msra.mxu0 %v488
    %2802 = vmatprep.subr.mxu0 %v493
    %2803 = vmatpush1.msra.mxu0 %v492
    %2804 = vmatprep.subr.mxu0 %v497
    %2805 = vmatpush1.msra.mxu0 %v496
    %2806 = vmatprep.subr.mxu0 %v501
    %2807 = vmatpush1.msra.mxu0 %v500
    %2808 = vmatprep.subr.mxu0 %v505
    %2809 = vmatpush1.msra.mxu0 %v504
    %2810 = vmatprep.subr.mxu0 %v509
    %2811 = vmatpush1.msra.mxu0 %v508
    %2812 = vmatprep.subr.mxu0 %v513
    %2813 = vmatpush1.msra.mxu0 %v512
    %2814 = vmatprep.subr.mxu0 %v517
    %2815 = vmatpush1.msra.mxu0 %v516
    %2816 = vmatprep.subr.mxu0 %v521
    %2817 = vmatpush1.msra.mxu0 %v520
    %2818 = vmatprep.subr.mxu0 %v525
    %2819 = vmatpush1.msra.mxu0 %v524
    %2820 = vmatprep.subr.mxu0 %v529
    %2821 = vmatpush1.msra.mxu0 %v528
    %2822 = vmatprep.subr.mxu0 %v533
    %2823 = vmatpush1.msra.mxu0 %v532
    %2824 = vmatprep.subr.mxu0 %v537
    %2825 = vmatpush1.msra.mxu0 %v536
    %2826 = vmatprep.subr.mxu0 %v541
    %2827 = vmatpush1.msra.mxu0 %v540
    %2828 = vmatprep.subr.mxu0 %v545
    %2829 = vmatpush1.msra.mxu0 %v544
    %2830 = vmatprep.subr.mxu0 0.0
    %2831 = vmatpush1.msra.mxu0 0.0
    %2832 = vmatprep.subr.mxu0 0.0
    %2833 = vmatpush1.msra.mxu0 0.0
    %2834 = vmatprep.subr.mxu0 0.0
    %2835 = vmatpush1.msra.mxu0 0.0
    %2836 = vmatprep.subr.mxu0 0.0
    %2837 = vmatpush1.msra.mxu0 0.0
    %2838 = vmatprep.subr.mxu0 0.0
    %2839 = vmatpush1.msra.mxu0 0.0
    %2840 = vmatprep.subr.mxu0 0.0
    %2841 = vmatpush1.msra.mxu0 0.0
    %2842 = vmatprep.subr.mxu0 0.0
    %2843 = vmatpush1.msra.mxu0 0.0
    %2844 = vmatprep.subr.mxu0 0.0
    %2845 = vmatpush1.msra.mxu0 0.0
    %2846 = vmatprep.subr.mxu0 0.0
    %2847 = vmatpush1.msra.mxu0 0.0
    %2848 = vmatprep.subr.mxu0 0.0
    %2849 = vmatpush1.msra.mxu0 0.0
    %2850 = vmatprep.subr.mxu0 0.0
    %2851 = vmatpush1.msra.mxu0 0.0
    %2852 = vmatprep.subr.mxu0 0.0
    %2853 = vmatpush1.msra.mxu0 0.0
    %2854 = vmatprep.subr.mxu0 0.0
    %2855 = vmatpush1.msra.mxu0 0.0
    %2856 = vmatprep.subr.mxu0 0.0
    %2857 = vmatpush1.msra.mxu0 0.0
    %2858 = vmatprep.subr.mxu0 0.0
    %2859 = vmatpush1.msra.mxu0 0.0
    %2860 = vmatprep.subr.mxu0 0.0
    %2861 = vmatpush1.msra.mxu0 0.0
    %2862 = vmatprep.mubr.f32.mxu0 0.0
    %2863 = vmatmul.mubr.f32.gmra.mrb[0].mxu0 %v2552
    %v2864 = vpop.f32.mrb[0].mxu0
    %v2865 = vadd.f32 0.0, %v2864
    %v2866 = vpop.f32.mrb[0].mxu0
    %v2867 = vadd.f32 0.0, %v2866
    %2868 = vdwg.mxu0
    %2869 = vmatprep.subr.mxu0 %v419
    %2870 = vmatpush1.msra.mxu0 %v418
    %2871 = vmatprep.subr.mxu0 %v423
    %2872 = vmatpush1.msra.mxu0 %v422
    %2873 = vmatprep.subr.mxu0 %v427
    %2874 = vmatpush1.msra.mxu0 %v426
    %2875 = vmatprep.subr.mxu0 %v431
    %2876 = vmatpush1.msra.mxu0 %v430
    %2877 = vmatprep.subr.mxu0 %v435
    %2878 = vmatpush1.msra.mxu0 %v434
    %2879 = vmatprep.subr.mxu0 %v439
    %2880 = vmatpush1.msra.mxu0 %v438
    %2881 = vmatprep.subr.mxu0 %v443
    %2882 = vmatpush1.msra.mxu0 %v442
    %2883 = vmatprep.subr.mxu0 %v447
    %2884 = vmatpush1.msra.mxu0 %v446
    %2885 = vmatprep.subr.mxu0 %v451
    %2886 = vmatpush1.msra.mxu0 %v450
    %2887 = vmatprep.subr.mxu0 %v455
    %2888 = vmatpush1.msra.mxu0 %v454
    %2889 = vmatprep.subr.mxu0 %v459
    %2890 = vmatpush1.msra.mxu0 %v458
    %2891 = vmatprep.subr.mxu0 %v463
    %2892 = vmatpush1.msra.mxu0 %v462
    %2893 = vmatprep.subr.mxu0 %v467
    %2894 = vmatpush1.msra.mxu0 %v466
    %2895 = vmatprep.subr.mxu0 %v471
    %2896 = vmatpush1.msra.mxu0 %v470
    %2897 = vmatprep.subr.mxu0 %v475
    %2898 = vmatpush1.msra.mxu0 %v474
    %2899 = vmatprep.subr.mxu0 %v479
    %2900 = vmatpush1.msra.mxu0 %v478
    %2901 = vmatprep.subr.mxu0 0.0
    %2902 = vmatpush1.msra.mxu0 0.0
    %2903 = vmatprep.subr.mxu0 0.0
    %2904 = vmatpush1.msra.mxu0 0.0
    %2905 = vmatprep.subr.mxu0 0.0
    %2906 = vmatpush1.msra.mxu0 0.0
    %2907 = vmatprep.subr.mxu0 0.0
    %2908 = vmatpush1.msra.mxu0 0.0
    %2909 = vmatprep.subr.mxu0 0.0
    %2910 = vmatpush1.msra.mxu0 0.0
    %2911 = vmatprep.subr.mxu0 0.0
    %2912 = vmatpush1.msra.mxu0 0.0
    %2913 = vmatprep.subr.mxu0 0.0
    %2914 = vmatpush1.msra.mxu0 0.0
    %2915 = vmatprep.subr.mxu0 0.0
    %2916 = vmatpush1.msra.mxu0 0.0
    %2917 = vmatprep.subr.mxu0 0.0
    %2918 = vmatpush1.msra.mxu0 0.0
    %2919 = vmatprep.subr.mxu0 0.0
    %2920 = vmatpush1.msra.mxu0 0.0
    %2921 = vmatprep.subr.mxu0 0.0
    %2922 = vmatpush1.msra.mxu0 0.0
    %2923 = vmatprep.subr.mxu0 0.0
    %2924 = vmatpush1.msra.mxu0 0.0
    %2925 = vmatprep.subr.mxu0 0.0
    %2926 = vmatpush1.msra.mxu0 0.0
    %2927 = vmatprep.subr.mxu0 0.0
    %2928 = vmatpush1.msra.mxu0 0.0
    %2929 = vmatprep.subr.mxu0 0.0
    %2930 = vmatpush1.msra.mxu0 0.0
    %2931 = vmatprep.subr.mxu0 0.0
    %2932 = vmatpush1.msra.mxu0 0.0
    %2933 = vmatprep.mubr.f32.mxu0 0.0
    %2934 = vmatmul.mubr.f32.gmra.mrb[0].mxu0 %v2726
    %v2935 = vpop.f32.mrb[0].mxu0
    %v2936 = vadd.f32 %v2794, %v2935
    %v2937 = vpop.f32.mrb[0].mxu0
    %v2938 = vadd.f32 %v2796, %v2937
    %2939 = vdwg.mxu0
    %2940 = vmatprep.subr.mxu0 %v421
    %2941 = vmatpush1.msra.mxu0 %v420
    %2942 = vmatprep.subr.mxu0 %v425
    %2943 = vmatpush1.msra.mxu0 %v424
    %2944 = vmatprep.subr.mxu0 %v429
    %2945 = vmatpush1.msra.mxu0 %v428
    %2946 = vmatprep.subr.mxu0 %v433
    %2947 = vmatpush1.msra.mxu0 %v432
    %2948 = vmatprep.subr.mxu0 %v437
    %2949 = vmatpush1.msra.mxu0 %v436
    %2950 = vmatprep.subr.mxu0 %v441
    %2951 = vmatpush1.msra.mxu0 %v440
    %2952 = vmatprep.subr.mxu0 %v445
    %2953 = vmatpush1.msra.mxu0 %v444
    %2954 = vmatprep.subr.mxu0 %v449
    %2955 = vmatpush1.msra.mxu0 %v448
    %2956 = vmatprep.subr.mxu0 %v453
    %2957 = vmatpush1.msra.mxu0 %v452
    %2958 = vmatprep.subr.mxu0 %v457
    %2959 = vmatpush1.msra.mxu0 %v456
    %2960 = vmatprep.subr.mxu0 %v461
    %2961 = vmatpush1.msra.mxu0 %v460
    %2962 = vmatprep.subr.mxu0 %v465
    %2963 = vmatpush1.msra.mxu0 %v464
    %2964 = vmatprep.subr.mxu0 %v469
    %2965 = vmatpush1.msra.mxu0 %v468
    %2966 = vmatprep.subr.mxu0 %v473
    %2967 = vmatpush1.msra.mxu0 %v472
    %2968 = vmatprep.subr.mxu0 %v477
    %2969 = vmatpush1.msra.mxu0 %v476
    %2970 = vmatprep.subr.mxu0 %v481
    %2971 = vmatpush1.msra.mxu0 %v480
    %2972 = vmatprep.subr.mxu0 0.0
    %2973 = vmatpush1.msra.mxu0 0.0
    %2974 = vmatprep.subr.mxu0 0.0
    %2975 = vmatpush1.msra.mxu0 0.0
    %2976 = vmatprep.subr.mxu0 0.0
    %2977 = vmatpush1.msra.mxu0 0.0
    %2978 = vmatprep.subr.mxu0 0.0
    %2979 = vmatpush1.msra.mxu0 0.0
    %2980 = vmatprep.subr.mxu0 0.0
    %2981 = vmatpush1.msra.mxu0 0.0
    %2982 = vmatprep.subr.mxu0 0.0
    %2983 = vmatpush1.msra.mxu0 0.0
    %2984 = vmatprep.subr.mxu0 0.0
    %2985 = vmatpush1.msra.mxu0 0.0
    %2986 = vmatprep.subr.mxu0 0.0
    %2987 = vmatpush1.msra.mxu0 0.0
    %2988 = vmatprep.subr.mxu0 0.0
    %2989 = vmatpush1.msra.mxu0 0.0
    %2990 = vmatprep.subr.mxu0 0.0
    %2991 = vmatpush1.msra.mxu0 0.0
    %2992 = vmatprep.subr.mxu0 0.0
    %2993 = vmatpush1.msra.mxu0 0.0
    %2994 = vmatprep.subr.mxu0 0.0
    %2995 = vmatpush1.msra.mxu0 0.0
    %2996 = vmatprep.subr.mxu0 0.0
    %2997 = vmatpush1.msra.mxu0 0.0
    %2998 = vmatprep.subr.mxu0 0.0
    %2999 = vmatpush1.msra.mxu0 0.0
    %3000 = vmatprep.subr.mxu0 0.0
    %3001 = vmatpush1.msra.mxu0 0.0
    %3002 = vmatprep.subr.mxu0 0.0
    %3003 = vmatpush1.msra.mxu0 0.0
    %3004 = vmatprep.mubr.f32.mxu0 0.0
    %3005 = vmatmul.mubr.f32.gmra.mrb[0].mxu0 %v2726
    %v3006 = vpop.f32.mrb[0].mxu0
    %v3007 = vadd.f32 %v2865, %v3006
    %v3008 = vpop.f32.mrb[0].mxu0
    %v3009 = vadd.f32 %v2867, %v3008
    %3010 = vdwg.mxu0
    %v3011 = vadd.f32 %v2936, %v1005
    %v3012 = vadd.f32 %v2938, %v1009
    %v3013 = vadd.f32 %v3007, %v1013
    %v3014 = vadd.f32 %v3009, %v1017
    %v3015 = vxor.u32 %v3011, 2147483648
    %v3016 = vxor.u32 %v3012, 2147483648
    %v3017 = vxor.u32 %v3013, 2147483648
    %v3018 = vmul.f32 %v3015, 1.442695
    %v3019 = vpow.pop %v3018
    %v3020 = vmul.f32 %v3016, 1.442695
    %v3021 = vpow.pop %v3020
    %v3022 = vmul.f32 %v3017, 1.442695
    %v3023 = vpow.pop %v3022
    %v3024 = vadd.f32 %v3019, 1.0
    %v3025 = vadd.f32 %v3021, 1.0
    %v3026 = vadd.f32 %v3023, 1.0
    %v3027 = vrcp.pop %v3024
    %v3028 = vmul.f32 1.0, %v3027
    %v3029 = vrcp.pop %v3025
    %v3030 = vmul.f32 1.0, %v3029
    %v3031 = vrcp.pop %v3026
    %v3032 = vmul.f32 1.0, %v3031
    %v3033 = vtanh.pop %v3014
    %v3034 = vmul.f32 %v3030, %v2550
    %v3035 = vmul.f32 %v3028, %v3033
    %v3036 = vadd.f32 %v3034, %v3035
    %v3037 = vtanh.pop %v3036
    %v3038 = vmul.f32 %v3032, %v3037
    %3039 = vst [vmem:[#allocation2 + $0x8] sm:$0x3] %v3038
    %3040 = vmatprep.subr.mxu0 %v355
    %3041 = vmatpush1.msra.mxu0 %v354
    %3042 = vmatprep.subr.mxu0 %v359
    %3043 = vmatpush1.msra.mxu0 %v358
    %3044 = vmatprep.subr.mxu0 %v363
    %3045 = vmatpush1.msra.mxu0 %v362
    %3046 = vmatprep.subr.mxu0 %v367
    %3047 = vmatpush1.msra.mxu0 %v366
    %3048 = vmatprep.subr.mxu0 %v371
    %3049 = vmatpush1.msra.mxu0 %v370
    %3050 = vmatprep.subr.mxu0 %v375
    %3051 = vmatpush1.msra.mxu0 %v374
    %3052 = vmatprep.subr.mxu0 %v379
    %3053 = vmatpush1.msra.mxu0 %v378
    %3054 = vmatprep.subr.mxu0 %v383
    %3055 = vmatpush1.msra.mxu0 %v382
    %3056 = vmatprep.subr.mxu0 %v387
    %3057 = vmatpush1.msra.mxu0 %v386
    %3058 = vmatprep.subr.mxu0 %v391
    %3059 = vmatpush1.msra.mxu0 %v390
    %3060 = vmatprep.subr.mxu0 %v395
    %3061 = vmatpush1.msra.mxu0 %v394
    %3062 = vmatprep.subr.mxu0 %v399
    %3063 = vmatpush1.msra.mxu0 %v398
    %3064 = vmatprep.subr.mxu0 %v403
    %3065 = vmatpush1.msra.mxu0 %v402
    %3066 = vmatprep.subr.mxu0 %v407
    %3067 = vmatpush1.msra.mxu0 %v406
    %3068 = vmatprep.subr.mxu0 %v411
    %3069 = vmatpush1.msra.mxu0 %v410
    %3070 = vmatprep.subr.mxu0 %v415
    %3071 = vmatpush1.msra.mxu0 %v414
    %3072 = vmatprep.subr.mxu0 0.0
    %3073 = vmatpush1.msra.mxu0 0.0
    %3074 = vmatprep.subr.mxu0 0.0
    %3075 = vmatpush1.msra.mxu0 0.0
    %3076 = vmatprep.subr.mxu0 0.0
    %3077 = vmatpush1.msra.mxu0 0.0
    %3078 = vmatprep.subr.mxu0 0.0
    %3079 = vmatpush1.msra.mxu0 0.0
    %3080 = vmatprep.subr.mxu0 0.0
    %3081 = vmatpush1.msra.mxu0 0.0
    %3082 = vmatprep.subr.mxu0 0.0
    %3083 = vmatpush1.msra.mxu0 0.0
    %3084 = vmatprep.subr.mxu0 0.0
    %3085 = vmatpush1.msra.mxu0 0.0
    %3086 = vmatprep.subr.mxu0 0.0
    %3087 = vmatpush1.msra.mxu0 0.0
    %3088 = vmatprep.subr.mxu0 0.0
    %3089 = vmatpush1.msra.mxu0 0.0
    %3090 = vmatprep.subr.mxu0 0.0
    %3091 = vmatpush1.msra.mxu0 0.0
    %3092 = vmatprep.subr.mxu0 0.0
    %3093 = vmatpush1.msra.mxu0 0.0
    %3094 = vmatprep.subr.mxu0 0.0
    %3095 = vmatpush1.msra.mxu0 0.0
    %3096 = vmatprep.subr.mxu0 0.0
    %3097 = vmatpush1.msra.mxu0 0.0
    %3098 = vmatprep.subr.mxu0 0.0
    %3099 = vmatpush1.msra.mxu0 0.0
    %3100 = vmatprep.subr.mxu0 0.0
    %3101 = vmatpush1.msra.mxu0 0.0
    %3102 = vmatprep.subr.mxu0 0.0
    %3103 = vmatpush1.msra.mxu0 0.0
    %3104 = vmatprep.mubr.f32.mxu0 0.0
    %3105 = vmatmul.mubr.f32.gmra.mrb[0].mxu0 %v2726
    %v3106 = vpop.f32.mrb[0].mxu0
    %v3107 = vadd.f32 0.0, %v3106
    %v3108 = vpop.f32.mrb[0].mxu0
    %v3109 = vadd.f32 0.0, %v3108
    %3110 = vdwg.mxu0
    %3111 = vmatprep.subr.mxu0 %v357
    %3112 = vmatpush1.msra.mxu0 %v356
    %3113 = vmatprep.subr.mxu0 %v361
    %3114 = vmatpush1.msra.mxu0 %v360
    %3115 = vmatprep.subr.mxu0 %v365
    %3116 = vmatpush1.msra.mxu0 %v364
    %3117 = vmatprep.subr.mxu0 %v369
    %3118 = vmatpush1.msra.mxu0 %v368
    %3119 = vmatprep.subr.mxu0 %v373
    %3120 = vmatpush1.msra.mxu0 %v372
    %3121 = vmatprep.subr.mxu0 %v377
    %3122 = vmatpush1.msra.mxu0 %v376
    %3123 = vmatprep.subr.mxu0 %v381
    %3124 = vmatpush1.msra.mxu0 %v380
    %3125 = vmatprep.subr.mxu0 %v385
    %3126 = vmatpush1.msra.mxu0 %v384
    %3127 = vmatprep.subr.mxu0 %v389
    %3128 = vmatpush1.msra.mxu0 %v388
    %3129 = vmatprep.subr.mxu0 %v393
    %3130 = vmatpush1.msra.mxu0 %v392
    %3131 = vmatprep.subr.mxu0 %v397
    %3132 = vmatpush1.msra.mxu0 %v396
    %3133 = vmatprep.subr.mxu0 %v401
    %3134 = vmatpush1.msra.mxu0 %v400
    %3135 = vmatprep.subr.mxu0 %v405
    %3136 = vmatpush1.msra.mxu0 %v404
    %3137 = vmatprep.subr.mxu0 %v409
    %3138 = vmatpush1.msra.mxu0 %v408
    %3139 = vmatprep.subr.mxu0 %v413
    %3140 = vmatpush1.msra.mxu0 %v412
    %3141 = vmatprep.subr.mxu0 %v417
    %3142 = vmatpush1.msra.mxu0 %v416
    %3143 = vmatprep.subr.mxu0 0.0
    %3144 = vmatpush1.msra.mxu0 0.0
    %3145 = vmatprep.subr.mxu0 0.0
    %3146 = vmatpush1.msra.mxu0 0.0
    %3147 = vmatprep.subr.mxu0 0.0
    %3148 = vmatpush1.msra.mxu0 0.0
    %3149 = vmatprep.subr.mxu0 0.0
    %3150 = vmatpush1.msra.mxu0 0.0
    %3151 = vmatprep.subr.mxu0 0.0
    %3152 = vmatpush1.msra.mxu0 0.0
    %3153 = vmatprep.subr.mxu0 0.0
    %3154 = vmatpush1.msra.mxu0 0.0
    %3155 = vmatprep.subr.mxu0 0.0
    %3156 = vmatpush1.msra.mxu0 0.0
    %3157 = vmatprep.subr.mxu0 0.0
    %3158 = vmatpush1.msra.mxu0 0.0
    %3159 = vmatprep.subr.mxu0 0.0
    %3160 = vmatpush1.msra.mxu0 0.0
    %3161 = vmatprep.subr.mxu0 0.0
    %3162 = vmatpush1.msra.mxu0 0.0
    %3163 = vmatprep.subr.mxu0 0.0
    %3164 = vmatpush1.msra.mxu0 0.0
    %3165 = vmatprep.subr.mxu0 0.0
    %3166 = vmatpush1.msra.mxu0 0.0
    %3167 = vmatprep.subr.mxu0 0.0
    %3168 = vmatpush1.msra.mxu0 0.0
    %3169 = vmatprep.subr.mxu0 0.0
    %3170 = vmatpush1.msra.mxu0 0.0
    %3171 = vmatprep.subr.mxu0 0.0
    %3172 = vmatpush1.msra.mxu0 0.0
    %3173 = vmatprep.subr.mxu0 0.0
    %3174 = vmatpush1.msra.mxu0 0.0
    %3175 = vmatprep.mubr.f32.mxu0 0.0
    %3176 = vmatmul.mubr.f32.gmra.mrb[0].mxu0 %v2726
    %v3177 = vpop.f32.mrb[0].mxu0
    %v3178 = vadd.f32 0.0, %v3177
    %v3179 = vpop.f32.mrb[0].mxu0
    %v3180 = vadd.f32 0.0, %v3179
    %3181 = vdwg.mxu0
    %v3186 = vrot.slane %v3107, 6
    %v3187 = vrot.slane %v3109, 6
    %v3188 = vrot.slane %v3178, 6
    %v3189 = vrot.slane %v3180, 6
    %v3194 = vadd.f32 %v273, %v3186
    %v3195 = vadd.f32 %v275, %v3187
    %v3196 = vadd.f32 %v350, %v3188
    %v3197 = vadd.f32 %v352, %v3189
    %v3198 = vxor.u32 %v3194, 2147483648
    %v3199 = vxor.u32 %v3195, 2147483648
    %v3200 = vxor.u32 %v3196, 2147483648
    %v3201 = vmul.f32 %v3198, 1.442695
    %v3202 = vpow.pop %v3201
    %v3203 = vmul.f32 %v3199, 1.442695
    %v3204 = vpow.pop %v3203
    %v3205 = vmul.f32 %v3200, 1.442695
    %v3206 = vpow.pop %v3205
    %v3207 = vadd.f32 %v3202, 1.0
    %v3208 = vadd.f32 %v3204, 1.0
    %v3209 = vadd.f32 %v3206, 1.0
    %v3210 = vrcp.pop %v3207
    %v3211 = vmul.f32 1.0, %v3210
    %v3212 = vrcp.pop %v3208
    %v3213 = vmul.f32 1.0, %v3212
    %v3214 = vrcp.pop %v3209
    %v3215 = vmul.f32 1.0, %v3214
    %v3216 = vtanh.pop %v3197
    %v3218 = vrot.slane %v2724, 6
    %v3220 = vmul.f32 %v3213, %v3218
    %v3221 = vmul.f32 %v3211, %v3216
    %v3222 = vadd.f32 %v3220, %v3221
    %v3223 = vtanh.pop %v3222
    %v3224 = vmul.f32 %v3215, %v3223
    %3225 = vmatprep.subr.mxu0 %v483
    %3226 = vmatpush1.msra.mxu0 %v482
    %3227 = vmatprep.subr.mxu0 %v487
    %3228 = vmatpush1.msra.mxu0 %v486
    %3229 = vmatprep.subr.mxu0 %v491
    %3230 = vmatpush1.msra.mxu0 %v490
    %3231 = vmatprep.subr.mxu0 %v495
    %3232 = vmatpush1.msra.mxu0 %v494
    %3233 = vmatprep.subr.mxu0 %v499
    %3234 = vmatpush1.msra.mxu0 %v498
    %3235 = vmatprep.subr.mxu0 %v503
    %3236 = vmatpush1.msra.mxu0 %v502
    %3237 = vmatprep.subr.mxu0 %v507
    %3238 = vmatpush1.msra.mxu0 %v506
    %3239 = vmatprep.subr.mxu0 %v511
    %3240 = vmatpush1.msra.mxu0 %v510
    %3241 = vmatprep.subr.mxu0 %v515
    %3242 = vmatpush1.msra.mxu0 %v514
    %3243 = vmatprep.subr.mxu0 %v519
    %3244 = vmatpush1.msra.mxu0 %v518
    %3245 = vmatprep.subr.mxu0 %v523
    %3246 = vmatpush1.msra.mxu0 %v522
    %3247 = vmatprep.subr.mxu0 %v527
    %3248 = vmatpush1.msra.mxu0 %v526
    %3249 = vmatprep.subr.mxu0 %v531
    %3250 = vmatpush1.msra.mxu0 %v530
    %3251 = vmatprep.subr.mxu0 %v535
    %3252 = vmatpush1.msra.mxu0 %v534
    %3253 = vmatprep.subr.mxu0 %v539
    %3254 = vmatpush1.msra.mxu0 %v538
    %3255 = vmatprep.subr.mxu0 %v543
    %3256 = vmatpush1.msra.mxu0 %v542
    %3257 = vmatprep.subr.mxu0 0.0
    %3258 = vmatpush1.msra.mxu0 0.0
    %3259 = vmatprep.subr.mxu0 0.0
    %3260 = vmatpush1.msra.mxu0 0.0
    %3261 = vmatprep.subr.mxu0 0.0
    %3262 = vmatpush1.msra.mxu0 0.0
    %3263 = vmatprep.subr.mxu0 0.0
    %3264 = vmatpush1.msra.mxu0 0.0
    %3265 = vmatprep.subr.mxu0 0.0
    %3266 = vmatpush1.msra.mxu0 0.0
    %3267 = vmatprep.subr.mxu0 0.0
    %3268 = vmatpush1.msra.mxu0 0.0
    %3269 = vmatprep.subr.mxu0 0.0
    %3270 = vmatpush1.msra.mxu0 0.0
    %3271 = vmatprep.subr.mxu0 0.0
    %3272 = vmatpush1.msra.mxu0 0.0
    %3273 = vmatprep.subr.mxu0 0.0
    %3274 = vmatpush1.msra.mxu0 0.0
    %3275 = vmatprep.subr.mxu0 0.0
    %3276 = vmatpush1.msra.mxu0 0.0
    %3277 = vmatprep.subr.mxu0 0.0
    %3278 = vmatpush1.msra.mxu0 0.0
    %3279 = vmatprep.subr.mxu0 0.0
    %3280 = vmatpush1.msra.mxu0 0.0
    %3281 = vmatprep.subr.mxu0 0.0
    %3282 = vmatpush1.msra.mxu0 0.0
    %3283 = vmatprep.subr.mxu0 0.0
    %3284 = vmatpush1.msra.mxu0 0.0
    %3285 = vmatprep.subr.mxu0 0.0
    %3286 = vmatpush1.msra.mxu0 0.0
    %3287 = vmatprep.subr.mxu0 0.0
    %3288 = vmatpush1.msra.mxu0 0.0
    %3289 = vmatprep.mubr.f32.mxu0 0.0
    %3290 = vmatmul.mubr.f32.gmra.mrb[0].mxu0 %v3038
    %v3291 = vpop.f32.mrb[0].mxu0
    %v3292 = vadd.f32 0.0, %v3291
    %v3293 = vpop.f32.mrb[0].mxu0
    %v3294 = vadd.f32 0.0, %v3293
    %3295 = vdwg.mxu0
    %3296 = vmatprep.subr.mxu0 %v485
    %3297 = vmatpush1.msra.mxu0 %v484
    %3298 = vmatprep.subr.mxu0 %v489
    %3299 = vmatpush1.msra.mxu0 %v488
    %3300 = vmatprep.subr.mxu0 %v493
    %3301 = vmatpush1.msra.mxu0 %v492
    %3302 = vmatprep.subr.mxu0 %v497
    %3303 = vmatpush1.msra.mxu0 %v496
    %3304 = vmatprep.subr.mxu0 %v501
    %3305 = vmatpush1.msra.mxu0 %v500
    %3306 = vmatprep.subr.mxu0 %v505
    %3307 = vmatpush1.msra.mxu0 %v504
    %3308 = vmatprep.subr.mxu0 %v509
    %3309 = vmatpush1.msra.mxu0 %v508
    %3310 = vmatprep.subr.mxu0 %v513
    %3311 = vmatpush1.msra.mxu0 %v512
    %3312 = vmatprep.subr.mxu0 %v517
    %3313 = vmatpush1.msra.mxu0 %v516
    %3314 = vmatprep.subr.mxu0 %v521
    %3315 = vmatpush1.msra.mxu0 %v520
    %3316 = vmatprep.subr.mxu0 %v525
    %3317 = vmatpush1.msra.mxu0 %v524
    %3318 = vmatprep.subr.mxu0 %v529
    %3319 = vmatpush1.msra.mxu0 %v528
    %3320 = vmatprep.subr.mxu0 %v533
    %3321 = vmatpush1.msra.mxu0 %v532
    %3322 = vmatprep.subr.mxu0 %v537
    %3323 = vmatpush1.msra.mxu0 %v536
    %3324 = vmatprep.subr.mxu0 %v541
    %3325 = vmatpush1.msra.mxu0 %v540
    %3326 = vmatprep.subr.mxu0 %v545
    %3327 = vmatpush1.msra.mxu0 %v544
    %3328 = vmatprep.subr.mxu0 0.0
    %3329 = vmatpush1.msra.mxu0 0.0
    %3330 = vmatprep.subr.mxu0 0.0
    %3331 = vmatpush1.msra.mxu0 0.0
    %3332 = vmatprep.subr.mxu0 0.0
    %3333 = vmatpush1.msra.mxu0 0.0
    %3334 = vmatprep.subr.mxu0 0.0
    %3335 = vmatpush1.msra.mxu0 0.0
    %3336 = vmatprep.subr.mxu0 0.0
    %3337 = vmatpush1.msra.mxu0 0.0
    %3338 = vmatprep.subr.mxu0 0.0
    %3339 = vmatpush1.msra.mxu0 0.0
    %3340 = vmatprep.subr.mxu0 0.0
    %3341 = vmatpush1.msra.mxu0 0.0
    %3342 = vmatprep.subr.mxu0 0.0
    %3343 = vmatpush1.msra.mxu0 0.0
    %3344 = vmatprep.subr.mxu0 0.0
    %3345 = vmatpush1.msra.mxu0 0.0
    %3346 = vmatprep.subr.mxu0 0.0
    %3347 = vmatpush1.msra.mxu0 0.0
    %3348 = vmatprep.subr.mxu0 0.0
    %3349 = vmatpush1.msra.mxu0 0.0
    %3350 = vmatprep.subr.mxu0 0.0
    %3351 = vmatpush1.msra.mxu0 0.0
    %3352 = vmatprep.subr.mxu0 0.0
    %3353 = vmatpush1.msra.mxu0 0.0
    %3354 = vmatprep.subr.mxu0 0.0
    %3355 = vmatpush1.msra.mxu0 0.0
    %3356 = vmatprep.subr.mxu0 0.0
    %3357 = vmatpush1.msra.mxu0 0.0
    %3358 = vmatprep.subr.mxu0 0.0
    %3359 = vmatpush1.msra.mxu0 0.0
    %3360 = vmatprep.mubr.f32.mxu0 0.0
    %3361 = vmatmul.mubr.f32.gmra.mrb[0].mxu0 %v3038
    %v3362 = vpop.f32.mrb[0].mxu0
    %v3363 = vadd.f32 0.0, %v3362
    %v3364 = vpop.f32.mrb[0].mxu0
    %v3365 = vadd.f32 0.0, %v3364
    %3366 = vdwg.mxu0
    %v3368 = vrot.slane %v3224, 2
    %3370 = vmatprep.subr.mxu0 %v419
    %3371 = vmatpush1.msra.mxu0 %v418
    %3372 = vmatprep.subr.mxu0 %v423
    %3373 = vmatpush1.msra.mxu0 %v422
    %3374 = vmatprep.subr.mxu0 %v427
    %3375 = vmatpush1.msra.mxu0 %v426
    %3376 = vmatprep.subr.mxu0 %v431
    %3377 = vmatpush1.msra.mxu0 %v430
    %3378 = vmatprep.subr.mxu0 %v435
    %3379 = vmatpush1.msra.mxu0 %v434
    %3380 = vmatprep.subr.mxu0 %v439
    %3381 = vmatpush1.msra.mxu0 %v438
    %3382 = vmatprep.subr.mxu0 %v443
    %3383 = vmatpush1.msra.mxu0 %v442
    %3384 = vmatprep.subr.mxu0 %v447
    %3385 = vmatpush1.msra.mxu0 %v446
    %3386 = vmatprep.subr.mxu0 %v451
    %3387 = vmatpush1.msra.mxu0 %v450
    %3388 = vmatprep.subr.mxu0 %v455
    %3389 = vmatpush1.msra.mxu0 %v454
    %3390 = vmatprep.subr.mxu0 %v459
    %3391 = vmatpush1.msra.mxu0 %v458
    %3392 = vmatprep.subr.mxu0 %v463
    %3393 = vmatpush1.msra.mxu0 %v462
    %3394 = vmatprep.subr.mxu0 %v467
    %3395 = vmatpush1.msra.mxu0 %v466
    %3396 = vmatprep.subr.mxu0 %v471
    %3397 = vmatpush1.msra.mxu0 %v470
    %3398 = vmatprep.subr.mxu0 %v475
    %3399 = vmatpush1.msra.mxu0 %v474
    %3400 = vmatprep.subr.mxu0 %v479
    %3401 = vmatpush1.msra.mxu0 %v478
    %3402 = vmatprep.subr.mxu0 0.0
    %3403 = vmatpush1.msra.mxu0 0.0
    %3404 = vmatprep.subr.mxu0 0.0
    %3405 = vmatpush1.msra.mxu0 0.0
    %3406 = vmatprep.subr.mxu0 0.0
    %3407 = vmatpush1.msra.mxu0 0.0
    %3408 = vmatprep.subr.mxu0 0.0
    %3409 = vmatpush1.msra.mxu0 0.0
    %3410 = vmatprep.subr.mxu0 0.0
    %3411 = vmatpush1.msra.mxu0 0.0
    %3412 = vmatprep.subr.mxu0 0.0
    %3413 = vmatpush1.msra.mxu0 0.0
    %3414 = vmatprep.subr.mxu0 0.0
    %3415 = vmatpush1.msra.mxu0 0.0
    %3416 = vmatprep.subr.mxu0 0.0
    %3417 = vmatpush1.msra.mxu0 0.0
    %3418 = vmatprep.subr.mxu0 0.0
    %3419 = vmatpush1.msra.mxu0 0.0
    %3420 = vmatprep.subr.mxu0 0.0
    %3421 = vmatpush1.msra.mxu0 0.0
    %3422 = vmatprep.subr.mxu0 0.0
    %3423 = vmatpush1.msra.mxu0 0.0
    %3424 = vmatprep.subr.mxu0 0.0
    %3425 = vmatpush1.msra.mxu0 0.0
    %3426 = vmatprep.subr.mxu0 0.0
    %3427 = vmatpush1.msra.mxu0 0.0
    %3428 = vmatprep.subr.mxu0 0.0
    %3429 = vmatpush1.msra.mxu0 0.0
    %3430 = vmatprep.subr.mxu0 0.0
    %3431 = vmatpush1.msra.mxu0 0.0
    %3432 = vmatprep.subr.mxu0 0.0
    %3433 = vmatpush1.msra.mxu0 0.0
    %3434 = vmatprep.mubr.f32.mxu0 0.0
    %3435 = vmatmul.mubr.f32.gmra.mrb[0].mxu0 %v3368
    %v3436 = vpop.f32.mrb[0].mxu0
    %v3437 = vadd.f32 %v3292, %v3436
    %v3438 = vpop.f32.mrb[0].mxu0
    %v3439 = vadd.f32 %v3294, %v3438
    %3440 = vdwg.mxu0
    %3441 = vmatprep.subr.mxu0 %v421
    %3442 = vmatpush1.msra.mxu0 %v420
    %3443 = vmatprep.subr.mxu0 %v425
    %3444 = vmatpush1.msra.mxu0 %v424
    %3445 = vmatprep.subr.mxu0 %v429
    %3446 = vmatpush1.msra.mxu0 %v428
    %3447 = vmatprep.subr.mxu0 %v433
    %3448 = vmatpush1.msra.mxu0 %v432
    %3449 = vmatprep.subr.mxu0 %v437
    %3450 = vmatpush1.msra.mxu0 %v436
    %3451 = vmatprep.subr.mxu0 %v441
    %3452 = vmatpush1.msra.mxu0 %v440
    %3453 = vmatprep.subr.mxu0 %v445
    %3454 = vmatpush1.msra.mxu0 %v444
    %3455 = vmatprep.subr.mxu0 %v449
    %3456 = vmatpush1.msra.mxu0 %v448
    %3457 = vmatprep.subr.mxu0 %v453
    %3458 = vmatpush1.msra.mxu0 %v452
    %3459 = vmatprep.subr.mxu0 %v457
    %3460 = vmatpush1.msra.mxu0 %v456
    %3461 = vmatprep.subr.mxu0 %v461
    %3462 = vmatpush1.msra.mxu0 %v460
    %3463 = vmatprep.subr.mxu0 %v465
    %3464 = vmatpush1.msra.mxu0 %v464
    %3465 = vmatprep.subr.mxu0 %v469
    %3466 = vmatpush1.msra.mxu0 %v468
    %3467 = vmatprep.subr.mxu0 %v473
    %3468 = vmatpush1.msra.mxu0 %v472
    %3469 = vmatprep.subr.mxu0 %v477
    %3470 = vmatpush1.msra.mxu0 %v476
    %3471 = vmatprep.subr.mxu0 %v481
    %3472 = vmatpush1.msra.mxu0 %v480
    %3473 = vmatprep.subr.mxu0 0.0
    %3474 = vmatpush1.msra.mxu0 0.0
    %3475 = vmatprep.subr.mxu0 0.0
    %3476 = vmatpush1.msra.mxu0 0.0
    %3477 = vmatprep.subr.mxu0 0.0
    %3478 = vmatpush1.msra.mxu0 0.0
    %3479 = vmatprep.subr.mxu0 0.0
    %3480 = vmatpush1.msra.mxu0 0.0
    %3481 = vmatprep.subr.mxu0 0.0
    %3482 = vmatpush1.msra.mxu0 0.0
    %3483 = vmatprep.subr.mxu0 0.0
    %3484 = vmatpush1.msra.mxu0 0.0
    %3485 = vmatprep.subr.mxu0 0.0
    %3486 = vmatpush1.msra.mxu0 0.0
    %3487 = vmatprep.subr.mxu0 0.0
    %3488 = vmatpush1.msra.mxu0 0.0
    %3489 = vmatprep.subr.mxu0 0.0
    %3490 = vmatpush1.msra.mxu0 0.0
    %3491 = vmatprep.subr.mxu0 0.0
    %3492 = vmatpush1.msra.mxu0 0.0
    %3493 = vmatprep.subr.mxu0 0.0
    %3494 = vmatpush1.msra.mxu0 0.0
    %3495 = vmatprep.subr.mxu0 0.0
    %3496 = vmatpush1.msra.mxu0 0.0
    %3497 = vmatprep.subr.mxu0 0.0
    %3498 = vmatpush1.msra.mxu0 0.0
    %3499 = vmatprep.subr.mxu0 0.0
    %3500 = vmatpush1.msra.mxu0 0.0
    %3501 = vmatprep.subr.mxu0 0.0
    %3502 = vmatpush1.msra.mxu0 0.0
    %3503 = vmatprep.subr.mxu0 0.0
    %3504 = vmatpush1.msra.mxu0 0.0
    %3505 = vmatprep.mubr.f32.mxu0 0.0
    %3506 = vmatmul.mubr.f32.gmra.mrb[0].mxu0 %v3368
    %v3507 = vpop.f32.mrb[0].mxu0
    %v3508 = vadd.f32 %v3363, %v3507
    %v3509 = vpop.f32.mrb[0].mxu0
    %v3510 = vadd.f32 %v3365, %v3509
    %3511 = vdwg.mxu0
    %v3512 = vadd.f32 %v3437, %v1005
    %v3513 = vadd.f32 %v3439, %v1009
    %v3514 = vadd.f32 %v3508, %v1013
    %v3515 = vadd.f32 %v3510, %v1017
    %v3516 = vxor.u32 %v3512, 2147483648
    %v3517 = vxor.u32 %v3513, 2147483648
    %v3518 = vxor.u32 %v3514, 2147483648
    %v3519 = vmul.f32 %v3516, 1.442695
    %v3520 = vpow.pop %v3519
    %v3521 = vmul.f32 %v3517, 1.442695
    %v3522 = vpow.pop %v3521
    %v3523 = vmul.f32 %v3518, 1.442695
    %v3524 = vpow.pop %v3523
    %v3525 = vadd.f32 %v3520, 1.0
    %v3526 = vadd.f32 %v3522, 1.0
    %v3527 = vadd.f32 %v3524, 1.0
    %v3528 = vrcp.pop %v3525
    %v3529 = vmul.f32 1.0, %v3528
    %v3530 = vrcp.pop %v3526
    %v3531 = vmul.f32 1.0, %v3530
    %v3532 = vrcp.pop %v3527
    %v3533 = vmul.f32 1.0, %v3532
    %v3534 = vtanh.pop %v3515
    %v3535 = vmul.f32 %v3531, %v3036
    %v3536 = vmul.f32 %v3529, %v3534
    %v3537 = vadd.f32 %v3535, %v3536
    %v3538 = vtanh.pop %v3537
    %v3539 = vmul.f32 %v3533, %v3538
    %3540 = vst [vmem:[#allocation2 + $0xa] sm:$0x3] %v3539
    %3541 = vmatprep.subr.mxu0 %v355
    %3542 = vmatpush1.msra.mxu0 %v354
    %3543 = vmatprep.subr.mxu0 %v359
    %3544 = vmatpush1.msra.mxu0 %v358
    %3545 = vmatprep.subr.mxu0 %v363
    %3546 = vmatpush1.msra.mxu0 %v362
    %3547 = vmatprep.subr.mxu0 %v367
    %3548 = vmatpush1.msra.mxu0 %v366
    %3549 = vmatprep.subr.mxu0 %v371
    %3550 = vmatpush1.msra.mxu0 %v370
    %3551 = vmatprep.subr.mxu0 %v375
    %3552 = vmatpush1.msra.mxu0 %v374
    %3553 = vmatprep.subr.mxu0 %v379
    %3554 = vmatpush1.msra.mxu0 %v378
    %3555 = vmatprep.subr.mxu0 %v383
    %3556 = vmatpush1.msra.mxu0 %v382
    %3557 = vmatprep.subr.mxu0 %v387
    %3558 = vmatpush1.msra.mxu0 %v386
    %3559 = vmatprep.subr.mxu0 %v391
    %3560 = vmatpush1.msra.mxu0 %v390
    %3561 = vmatprep.subr.mxu0 %v395
    %3562 = vmatpush1.msra.mxu0 %v394
    %3563 = vmatprep.subr.mxu0 %v399
    %3564 = vmatpush1.msra.mxu0 %v398
    %3565 = vmatprep.subr.mxu0 %v403
    %3566 = vmatpush1.msra.mxu0 %v402
    %3567 = vmatprep.subr.mxu0 %v407
    %3568 = vmatpush1.msra.mxu0 %v406
    %3569 = vmatprep.subr.mxu0 %v411
    %3570 = vmatpush1.msra.mxu0 %v410
    %3571 = vmatprep.subr.mxu0 %v415
    %3572 = vmatpush1.msra.mxu0 %v414
    %3573 = vmatprep.subr.mxu0 0.0
    %3574 = vmatpush1.msra.mxu0 0.0
    %3575 = vmatprep.subr.mxu0 0.0
    %3576 = vmatpush1.msra.mxu0 0.0
    %3577 = vmatprep.subr.mxu0 0.0
    %3578 = vmatpush1.msra.mxu0 0.0
    %3579 = vmatprep.subr.mxu0 0.0
    %3580 = vmatpush1.msra.mxu0 0.0
    %3581 = vmatprep.subr.mxu0 0.0
    %3582 = vmatpush1.msra.mxu0 0.0
    %3583 = vmatprep.subr.mxu0 0.0
    %3584 = vmatpush1.msra.mxu0 0.0
    %3585 = vmatprep.subr.mxu0 0.0
    %3586 = vmatpush1.msra.mxu0 0.0
    %3587 = vmatprep.subr.mxu0 0.0
    %3588 = vmatpush1.msra.mxu0 0.0
    %3589 = vmatprep.subr.mxu0 0.0
    %3590 = vmatpush1.msra.mxu0 0.0
    %3591 = vmatprep.subr.mxu0 0.0
    %3592 = vmatpush1.msra.mxu0 0.0
    %3593 = vmatprep.subr.mxu0 0.0
    %3594 = vmatpush1.msra.mxu0 0.0
    %3595 = vmatprep.subr.mxu0 0.0
    %3596 = vmatpush1.msra.mxu0 0.0
    %3597 = vmatprep.subr.mxu0 0.0
    %3598 = vmatpush1.msra.mxu0 0.0
    %3599 = vmatprep.subr.mxu0 0.0
    %3600 = vmatpush1.msra.mxu0 0.0
    %3601 = vmatprep.subr.mxu0 0.0
    %3602 = vmatpush1.msra.mxu0 0.0
    %3603 = vmatprep.subr.mxu0 0.0
    %3604 = vmatpush1.msra.mxu0 0.0
    %3605 = vmatprep.mubr.f32.mxu0 0.0
    %3606 = vmatmul.mubr.f32.gmra.mrb[0].mxu0 %v3368
    %v3607 = vpop.f32.mrb[0].mxu0
    %v3608 = vadd.f32 0.0, %v3607
    %v3609 = vpop.f32.mrb[0].mxu0
    %v3610 = vadd.f32 0.0, %v3609
    %3611 = vdwg.mxu0
    %3612 = vmatprep.subr.mxu0 %v357
    %3613 = vmatpush1.msra.mxu0 %v356
    %3614 = vmatprep.subr.mxu0 %v361
    %3615 = vmatpush1.msra.mxu0 %v360
    %3616 = vmatprep.subr.mxu0 %v365
    %3617 = vmatpush1.msra.mxu0 %v364
    %3618 = vmatprep.subr.mxu0 %v369
    %3619 = vmatpush1.msra.mxu0 %v368
    %3620 = vmatprep.subr.mxu0 %v373
    %3621 = vmatpush1.msra.mxu0 %v372
    %3622 = vmatprep.subr.mxu0 %v377
    %3623 = vmatpush1.msra.mxu0 %v376
    %3624 = vmatprep.subr.mxu0 %v381
    %3625 = vmatpush1.msra.mxu0 %v380
    %3626 = vmatprep.subr.mxu0 %v385
    %3627 = vmatpush1.msra.mxu0 %v384
    %3628 = vmatprep.subr.mxu0 %v389
    %3629 = vmatpush1.msra.mxu0 %v388
    %3630 = vmatprep.subr.mxu0 %v393
    %3631 = vmatpush1.msra.mxu0 %v392
    %3632 = vmatprep.subr.mxu0 %v397
    %3633 = vmatpush1.msra.mxu0 %v396
    %3634 = vmatprep.subr.mxu0 %v401
    %3635 = vmatpush1.msra.mxu0 %v400
    %3636 = vmatprep.subr.mxu0 %v405
    %3637 = vmatpush1.msra.mxu0 %v404
    %3638 = vmatprep.subr.mxu0 %v409
    %3639 = vmatpush1.msra.mxu0 %v408
    %3640 = vmatprep.subr.mxu0 %v413
    %3641 = vmatpush1.msra.mxu0 %v412
    %3642 = vmatprep.subr.mxu0 %v417
    %3643 = vmatpush1.msra.mxu0 %v416
    %3644 = vmatprep.subr.mxu0 0.0
    %3645 = vmatpush1.msra.mxu0 0.0
    %3646 = vmatprep.subr.mxu0 0.0
    %3647 = vmatpush1.msra.mxu0 0.0
    %3648 = vmatprep.subr.mxu0 0.0
    %3649 = vmatpush1.msra.mxu0 0.0
    %3650 = vmatprep.subr.mxu0 0.0
    %3651 = vmatpush1.msra.mxu0 0.0
    %3652 = vmatprep.subr.mxu0 0.0
    %3653 = vmatpush1.msra.mxu0 0.0
    %3654 = vmatprep.subr.mxu0 0.0
    %3655 = vmatpush1.msra.mxu0 0.0
    %3656 = vmatprep.subr.mxu0 0.0
    %3657 = vmatpush1.msra.mxu0 0.0
    %3658 = vmatprep.subr.mxu0 0.0
    %3659 = vmatpush1.msra.mxu0 0.0
    %3660 = vmatprep.subr.mxu0 0.0
    %3661 = vmatpush1.msra.mxu0 0.0
    %3662 = vmatprep.subr.mxu0 0.0
    %3663 = vmatpush1.msra.mxu0 0.0
    %3664 = vmatprep.subr.mxu0 0.0
    %3665 = vmatpush1.msra.mxu0 0.0
    %3666 = vmatprep.subr.mxu0 0.0
    %3667 = vmatpush1.msra.mxu0 0.0
    %3668 = vmatprep.subr.mxu0 0.0
    %3669 = vmatpush1.msra.mxu0 0.0
    %3670 = vmatprep.subr.mxu0 0.0
    %3671 = vmatpush1.msra.mxu0 0.0
    %3672 = vmatprep.subr.mxu0 0.0
    %3673 = vmatpush1.msra.mxu0 0.0
    %3674 = vmatprep.subr.mxu0 0.0
    %3675 = vmatpush1.msra.mxu0 0.0
    %3676 = vmatprep.mubr.f32.mxu0 0.0
    %3677 = vmatmul.mubr.f32.gmra.mrb[0].mxu0 %v3368
    %v3678 = vpop.f32.mrb[0].mxu0
    %v3679 = vadd.f32 0.0, %v3678
    %v3680 = vpop.f32.mrb[0].mxu0
    %v3681 = vadd.f32 0.0, %v3680
    %3682 = vdwg.mxu0
    %v3687 = vrot.slane %v3608, 4
    %v3688 = vrot.slane %v3610, 4
    %v3689 = vrot.slane %v3679, 4
    %v3690 = vrot.slane %v3681, 4
    %v3695 = vadd.f32 %v273, %v3687
    %v3696 = vadd.f32 %v275, %v3688
    %v3697 = vadd.f32 %v350, %v3689
    %v3698 = vadd.f32 %v352, %v3690
    %v3699 = vxor.u32 %v3695, 2147483648
    %v3700 = vxor.u32 %v3696, 2147483648
    %v3701 = vxor.u32 %v3697, 2147483648
    %v3702 = vmul.f32 %v3699, 1.442695
    %v3703 = vpow.pop %v3702
    %v3704 = vmul.f32 %v3700, 1.442695
    %v3705 = vpow.pop %v3704
    %v3706 = vmul.f32 %v3701, 1.442695
    %v3707 = vpow.pop %v3706
    %v3708 = vadd.f32 %v3703, 1.0
    %v3709 = vadd.f32 %v3705, 1.0
    %v3710 = vadd.f32 %v3707, 1.0
    %v3711 = vrcp.pop %v3708
    %v3712 = vmul.f32 1.0, %v3711
    %v3713 = vrcp.pop %v3709
    %v3714 = vmul.f32 1.0, %v3713
    %v3715 = vrcp.pop %v3710
    %v3716 = vmul.f32 1.0, %v3715
    %v3717 = vtanh.pop %v3698
    %v3719 = vrot.slane %v3222, 6
    %v3721 = vmul.f32 %v3714, %v3719
    %v3722 = vmul.f32 %v3712, %v3717
    %v3723 = vadd.f32 %v3721, %v3722
    %v3724 = vtanh.pop %v3723
    %v3725 = vmul.f32 %v3716, %v3724
    %3726 = vmatprep.subr.mxu0 %v483
    %3727 = vmatpush1.msra.mxu0 %v482
    %3728 = vmatprep.subr.mxu0 %v487
    %3729 = vmatpush1.msra.mxu0 %v486
    %3730 = vmatprep.subr.mxu0 %v491
    %3731 = vmatpush1.msra.mxu0 %v490
    %3732 = vmatprep.subr.mxu0 %v495
    %3733 = vmatpush1.msra.mxu0 %v494
    %3734 = vmatprep.subr.mxu0 %v499
    %3735 = vmatpush1.msra.mxu0 %v498
    %3736 = vmatprep.subr.mxu0 %v503
    %3737 = vmatpush1.msra.mxu0 %v502
    %3738 = vmatprep.subr.mxu0 %v507
    %3739 = vmatpush1.msra.mxu0 %v506
    %3740 = vmatprep.subr.mxu0 %v511
    %3741 = vmatpush1.msra.mxu0 %v510
    %3742 = vmatprep.subr.mxu0 %v515
    %3743 = vmatpush1.msra.mxu0 %v514
    %3744 = vmatprep.subr.mxu0 %v519
    %3745 = vmatpush1.msra.mxu0 %v518
    %3746 = vmatprep.subr.mxu0 %v523
    %3747 = vmatpush1.msra.mxu0 %v522
    %3748 = vmatprep.subr.mxu0 %v527
    %3749 = vmatpush1.msra.mxu0 %v526
    %3750 = vmatprep.subr.mxu0 %v531
    %3751 = vmatpush1.msra.mxu0 %v530
    %3752 = vmatprep.subr.mxu0 %v535
    %3753 = vmatpush1.msra.mxu0 %v534
    %3754 = vmatprep.subr.mxu0 %v539
    %3755 = vmatpush1.msra.mxu0 %v538
    %3756 = vmatprep.subr.mxu0 %v543
    %3757 = vmatpush1.msra.mxu0 %v542
    %3758 = vmatprep.subr.mxu0 0.0
    %3759 = vmatpush1.msra.mxu0 0.0
    %3760 = vmatprep.subr.mxu0 0.0
    %3761 = vmatpush1.msra.mxu0 0.0
    %3762 = vmatprep.subr.mxu0 0.0
    %3763 = vmatpush1.msra.mxu0 0.0
    %3764 = vmatprep.subr.mxu0 0.0
    %3765 = vmatpush1.msra.mxu0 0.0
    %3766 = vmatprep.subr.mxu0 0.0
    %3767 = vmatpush1.msra.mxu0 0.0
    %3768 = vmatprep.subr.mxu0 0.0
    %3769 = vmatpush1.msra.mxu0 0.0
    %3770 = vmatprep.subr.mxu0 0.0
    %3771 = vmatpush1.msra.mxu0 0.0
    %3772 = vmatprep.subr.mxu0 0.0
    %3773 = vmatpush1.msra.mxu0 0.0
    %3774 = vmatprep.subr.mxu0 0.0
    %3775 = vmatpush1.msra.mxu0 0.0
    %3776 = vmatprep.subr.mxu0 0.0
    %3777 = vmatpush1.msra.mxu0 0.0
    %3778 = vmatprep.subr.mxu0 0.0
    %3779 = vmatpush1.msra.mxu0 0.0
    %3780 = vmatprep.subr.mxu0 0.0
    %3781 = vmatpush1.msra.mxu0 0.0
    %3782 = vmatprep.subr.mxu0 0.0
    %3783 = vmatpush1.msra.mxu0 0.0
    %3784 = vmatprep.subr.mxu0 0.0
    %3785 = vmatpush1.msra.mxu0 0.0
    %3786 = vmatprep.subr.mxu0 0.0
    %3787 = vmatpush1.msra.mxu0 0.0
    %3788 = vmatprep.subr.mxu0 0.0
    %3789 = vmatpush1.msra.mxu0 0.0
    %3790 = vmatprep.mubr.f32.mxu0 0.0
    %3791 = vmatmul.mubr.f32.gmra.mrb[0].mxu0 %v3539
    %v3792 = vpop.f32.mrb[0].mxu0
    %v3793 = vadd.f32 0.0, %v3792
    %v3794 = vpop.f32.mrb[0].mxu0
    %v3795 = vadd.f32 0.0, %v3794
    %3796 = vdwg.mxu0
    %3797 = vmatprep.subr.mxu0 %v485
    %3798 = vmatpush1.msra.mxu0 %v484
    %3799 = vmatprep.subr.mxu0 %v489
    %3800 = vmatpush1.msra.mxu0 %v488
    %3801 = vmatprep.subr.mxu0 %v493
    %3802 = vmatpush1.msra.mxu0 %v492
    %3803 = vmatprep.subr.mxu0 %v497
    %3804 = vmatpush1.msra.mxu0 %v496
    %3805 = vmatprep.subr.mxu0 %v501
    %3806 = vmatpush1.msra.mxu0 %v500
    %3807 = vmatprep.subr.mxu0 %v505
    %3808 = vmatpush1.msra.mxu0 %v504
    %3809 = vmatprep.subr.mxu0 %v509
    %3810 = vmatpush1.msra.mxu0 %v508
    %3811 = vmatprep.subr.mxu0 %v513
    %3812 = vmatpush1.msra.mxu0 %v512
    %3813 = vmatprep.subr.mxu0 %v517
    %3814 = vmatpush1.msra.mxu0 %v516
    %3815 = vmatprep.subr.mxu0 %v521
    %3816 = vmatpush1.msra.mxu0 %v520
    %3817 = vmatprep.subr.mxu0 %v525
    %3818 = vmatpush1.msra.mxu0 %v524
    %3819 = vmatprep.subr.mxu0 %v529
    %3820 = vmatpush1.msra.mxu0 %v528
    %3821 = vmatprep.subr.mxu0 %v533
    %3822 = vmatpush1.msra.mxu0 %v532
    %3823 = vmatprep.subr.mxu0 %v537
    %3824 = vmatpush1.msra.mxu0 %v536
    %3825 = vmatprep.subr.mxu0 %v541
    %3826 = vmatpush1.msra.mxu0 %v540
    %3827 = vmatprep.subr.mxu0 %v545
    %3828 = vmatpush1.msra.mxu0 %v544
    %3829 = vmatprep.subr.mxu0 0.0
    %3830 = vmatpush1.msra.mxu0 0.0
    %3831 = vmatprep.subr.mxu0 0.0
    %3832 = vmatpush1.msra.mxu0 0.0
    %3833 = vmatprep.subr.mxu0 0.0
    %3834 = vmatpush1.msra.mxu0 0.0
    %3835 = vmatprep.subr.mxu0 0.0
    %3836 = vmatpush1.msra.mxu0 0.0
    %3837 = vmatprep.subr.mxu0 0.0
    %3838 = vmatpush1.msra.mxu0 0.0
    %3839 = vmatprep.subr.mxu0 0.0
    %3840 = vmatpush1.msra.mxu0 0.0
    %3841 = vmatprep.subr.mxu0 0.0
    %3842 = vmatpush1.msra.mxu0 0.0
    %3843 = vmatprep.subr.mxu0 0.0
    %3844 = vmatpush1.msra.mxu0 0.0
    %3845 = vmatprep.subr.mxu0 0.0
    %3846 = vmatpush1.msra.mxu0 0.0
    %3847 = vmatprep.subr.mxu0 0.0
    %3848 = vmatpush1.msra.mxu0 0.0
    %3849 = vmatprep.subr.mxu0 0.0
    %3850 = vmatpush1.msra.mxu0 0.0
    %3851 = vmatprep.subr.mxu0 0.0
    %3852 = vmatpush1.msra.mxu0 0.0
    %3853 = vmatprep.subr.mxu0 0.0
    %3854 = vmatpush1.msra.mxu0 0.0
    %3855 = vmatprep.subr.mxu0 0.0
    %3856 = vmatpush1.msra.mxu0 0.0
    %3857 = vmatprep.subr.mxu0 0.0
    %3858 = vmatpush1.msra.mxu0 0.0
    %3859 = vmatprep.subr.mxu0 0.0
    %3860 = vmatpush1.msra.mxu0 0.0
    %3861 = vmatprep.mubr.f32.mxu0 0.0
    %3862 = vmatmul.mubr.f32.gmra.mrb[0].mxu0 %v3539
    %v3863 = vpop.f32.mrb[0].mxu0
    %v3864 = vadd.f32 0.0, %v3863
    %v3865 = vpop.f32.mrb[0].mxu0
    %v3866 = vadd.f32 0.0, %v3865
    %3867 = vdwg.mxu0
    %v3869 = vrot.slane %v3725, 4
    %3871 = vmatprep.subr.mxu0 %v419
    %3872 = vmatpush1.msra.mxu0 %v418
    %3873 = vmatprep.subr.mxu0 %v423
    %3874 = vmatpush1.msra.mxu0 %v422
    %3875 = vmatprep.subr.mxu0 %v427
    %3876 = vmatpush1.msra.mxu0 %v426
    %3877 = vmatprep.subr.mxu0 %v431
    %3878 = vmatpush1.msra.mxu0 %v430
    %3879 = vmatprep.subr.mxu0 %v435
    %3880 = vmatpush1.msra.mxu0 %v434
    %3881 = vmatprep.subr.mxu0 %v439
    %3882 = vmatpush1.msra.mxu0 %v438
    %3883 = vmatprep.subr.mxu0 %v443
    %3884 = vmatpush1.msra.mxu0 %v442
    %3885 = vmatprep.subr.mxu0 %v447
    %3886 = vmatpush1.msra.mxu0 %v446
    %3887 = vmatprep.subr.mxu0 %v451
    %3888 = vmatpush1.msra.mxu0 %v450
    %3889 = vmatprep.subr.mxu0 %v455
    %3890 = vmatpush1.msra.mxu0 %v454
    %3891 = vmatprep.subr.mxu0 %v459
    %3892 = vmatpush1.msra.mxu0 %v458
    %3893 = vmatprep.subr.mxu0 %v463
    %3894 = vmatpush1.msra.mxu0 %v462
    %3895 = vmatprep.subr.mxu0 %v467
    %3896 = vmatpush1.msra.mxu0 %v466
    %3897 = vmatprep.subr.mxu0 %v471
    %3898 = vmatpush1.msra.mxu0 %v470
    %3899 = vmatprep.subr.mxu0 %v475
    %3900 = vmatpush1.msra.mxu0 %v474
    %3901 = vmatprep.subr.mxu0 %v479
    %3902 = vmatpush1.msra.mxu0 %v478
    %3903 = vmatprep.subr.mxu0 0.0
    %3904 = vmatpush1.msra.mxu0 0.0
    %3905 = vmatprep.subr.mxu0 0.0
    %3906 = vmatpush1.msra.mxu0 0.0
    %3907 = vmatprep.subr.mxu0 0.0
    %3908 = vmatpush1.msra.mxu0 0.0
    %3909 = vmatprep.subr.mxu0 0.0
    %3910 = vmatpush1.msra.mxu0 0.0
    %3911 = vmatprep.subr.mxu0 0.0
    %3912 = vmatpush1.msra.mxu0 0.0
    %3913 = vmatprep.subr.mxu0 0.0
    %3914 = vmatpush1.msra.mxu0 0.0
    %3915 = vmatprep.subr.mxu0 0.0
    %3916 = vmatpush1.msra.mxu0 0.0
    %3917 = vmatprep.subr.mxu0 0.0
    %3918 = vmatpush1.msra.mxu0 0.0
    %3919 = vmatprep.subr.mxu0 0.0
    %3920 = vmatpush1.msra.mxu0 0.0
    %3921 = vmatprep.subr.mxu0 0.0
    %3922 = vmatpush1.msra.mxu0 0.0
    %3923 = vmatprep.subr.mxu0 0.0
    %3924 = vmatpush1.msra.mxu0 0.0
    %3925 = vmatprep.subr.mxu0 0.0
    %3926 = vmatpush1.msra.mxu0 0.0
    %3927 = vmatprep.subr.mxu0 0.0
    %3928 = vmatpush1.msra.mxu0 0.0
    %3929 = vmatprep.subr.mxu0 0.0
    %3930 = vmatpush1.msra.mxu0 0.0
    %3931 = vmatprep.subr.mxu0 0.0
    %3932 = vmatpush1.msra.mxu0 0.0
    %3933 = vmatprep.subr.mxu0 0.0
    %3934 = vmatpush1.msra.mxu0 0.0
    %3935 = vmatprep.mubr.f32.mxu0 0.0
    %3936 = vmatmul.mubr.f32.gmra.mrb[0].mxu0 %v3869
    %v3937 = vpop.f32.mrb[0].mxu0
    %v3938 = vadd.f32 %v3793, %v3937
    %v3939 = vpop.f32.mrb[0].mxu0
    %v3940 = vadd.f32 %v3795, %v3939
    %3941 = vdwg.mxu0
    %3942 = vmatprep.subr.mxu0 %v421
    %3943 = vmatpush1.msra.mxu0 %v420
    %3944 = vmatprep.subr.mxu0 %v425
    %3945 = vmatpush1.msra.mxu0 %v424
    %3946 = vmatprep.subr.mxu0 %v429
    %3947 = vmatpush1.msra.mxu0 %v428
    %3948 = vmatprep.subr.mxu0 %v433
    %3949 = vmatpush1.msra.mxu0 %v432
    %3950 = vmatprep.subr.mxu0 %v437
    %3951 = vmatpush1.msra.mxu0 %v436
    %3952 = vmatprep.subr.mxu0 %v441
    %3953 = vmatpush1.msra.mxu0 %v440
    %3954 = vmatprep.subr.mxu0 %v445
    %3955 = vmatpush1.msra.mxu0 %v444
    %3956 = vmatprep.subr.mxu0 %v449
    %3957 = vmatpush1.msra.mxu0 %v448
    %3958 = vmatprep.subr.mxu0 %v453
    %3959 = vmatpush1.msra.mxu0 %v452
    %3960 = vmatprep.subr.mxu0 %v457
    %3961 = vmatpush1.msra.mxu0 %v456
    %3962 = vmatprep.subr.mxu0 %v461
    %3963 = vmatpush1.msra.mxu0 %v460
    %3964 = vmatprep.subr.mxu0 %v465
    %3965 = vmatpush1.msra.mxu0 %v464
    %3966 = vmatprep.subr.mxu0 %v469
    %3967 = vmatpush1.msra.mxu0 %v468
    %3968 = vmatprep.subr.mxu0 %v473
    %3969 = vmatpush1.msra.mxu0 %v472
    %3970 = vmatprep.subr.mxu0 %v477
    %3971 = vmatpush1.msra.mxu0 %v476
    %3972 = vmatprep.subr.mxu0 %v481
    %3973 = vmatpush1.msra.mxu0 %v480
    %3974 = vmatprep.subr.mxu0 0.0
    %3975 = vmatpush1.msra.mxu0 0.0
    %3976 = vmatprep.subr.mxu0 0.0
    %3977 = vmatpush1.msra.mxu0 0.0
    %3978 = vmatprep.subr.mxu0 0.0
    %3979 = vmatpush1.msra.mxu0 0.0
    %3980 = vmatprep.subr.mxu0 0.0
    %3981 = vmatpush1.msra.mxu0 0.0
    %3982 = vmatprep.subr.mxu0 0.0
    %3983 = vmatpush1.msra.mxu0 0.0
    %3984 = vmatprep.subr.mxu0 0.0
    %3985 = vmatpush1.msra.mxu0 0.0
    %3986 = vmatprep.subr.mxu0 0.0
    %3987 = vmatpush1.msra.mxu0 0.0
    %3988 = vmatprep.subr.mxu0 0.0
    %3989 = vmatpush1.msra.mxu0 0.0
    %3990 = vmatprep.subr.mxu0 0.0
    %3991 = vmatpush1.msra.mxu0 0.0
    %3992 = vmatprep.subr.mxu0 0.0
    %3993 = vmatpush1.msra.mxu0 0.0
    %3994 = vmatprep.subr.mxu0 0.0
    %3995 = vmatpush1.msra.mxu0 0.0
    %3996 = vmatprep.subr.mxu0 0.0
    %3997 = vmatpush1.msra.mxu0 0.0
    %3998 = vmatprep.subr.mxu0 0.0
    %3999 = vmatpush1.msra.mxu0 0.0
    %4000 = vmatprep.subr.mxu0 0.0
    %4001 = vmatpush1.msra.mxu0 0.0
    %4002 = vmatprep.subr.mxu0 0.0
    %4003 = vmatpush1.msra.mxu0 0.0
    %4004 = vmatprep.subr.mxu0 0.0
    %4005 = vmatpush1.msra.mxu0 0.0
    %4006 = vmatprep.mubr.f32.mxu0 0.0
    %4007 = vmatmul.mubr.f32.gmra.mrb[0].mxu0 %v3869
    %v4008 = vpop.f32.mrb[0].mxu0
    %v4009 = vadd.f32 %v3864, %v4008
    %v4010 = vpop.f32.mrb[0].mxu0
    %v4011 = vadd.f32 %v3866, %v4010
    %4012 = vdwg.mxu0
    %v4013 = vadd.f32 %v3938, %v1005
    %v4014 = vadd.f32 %v3940, %v1009
    %v4015 = vadd.f32 %v4009, %v1013
    %v4016 = vadd.f32 %v4011, %v1017
    %v4017 = vxor.u32 %v4013, 2147483648
    %v4018 = vxor.u32 %v4014, 2147483648
    %v4019 = vxor.u32 %v4015, 2147483648
    %v4020 = vmul.f32 %v4017, 1.442695
    %v4021 = vpow.pop %v4020
    %v4022 = vmul.f32 %v4018, 1.442695
    %v4023 = vpow.pop %v4022
    %v4024 = vmul.f32 %v4019, 1.442695
    %v4025 = vpow.pop %v4024
    %v4026 = vadd.f32 %v4021, 1.0
    %v4027 = vadd.f32 %v4023, 1.0
    %v4028 = vadd.f32 %v4025, 1.0
    %v4029 = vrcp.pop %v4026
    %v4030 = vmul.f32 1.0, %v4029
    %v4031 = vrcp.pop %v4027
    %v4032 = vmul.f32 1.0, %v4031
    %v4033 = vrcp.pop %v4028
    %v4034 = vmul.f32 1.0, %v4033
    %v4035 = vtanh.pop %v4016
    %v4036 = vmul.f32 %v4032, %v3537
    %v4037 = vmul.f32 %v4030, %v4035
    %v4038 = vadd.f32 %v4036, %v4037
    %v4039 = vtanh.pop %v4038
    %v4040 = vmul.f32 %v4034, %v4039
    %4041 = vst [vmem:[#allocation2 + $0xc] sm:$0x3] %v4040
    %4042 = vmatprep.subr.mxu0 %v355
    %4043 = vmatpush1.msra.mxu0 %v354
    %4044 = vmatprep.subr.mxu0 %v359
    %4045 = vmatpush1.msra.mxu0 %v358
    %4046 = vmatprep.subr.mxu0 %v363
    %4047 = vmatpush1.msra.mxu0 %v362
    %4048 = vmatprep.subr.mxu0 %v367
    %4049 = vmatpush1.msra.mxu0 %v366
    %4050 = vmatprep.subr.mxu0 %v371
    %4051 = vmatpush1.msra.mxu0 %v370
    %4052 = vmatprep.subr.mxu0 %v375
    %4053 = vmatpush1.msra.mxu0 %v374
    %4054 = vmatprep.subr.mxu0 %v379
    %4055 = vmatpush1.msra.mxu0 %v378
    %4056 = vmatprep.subr.mxu0 %v383
    %4057 = vmatpush1.msra.mxu0 %v382
    %4058 = vmatprep.subr.mxu0 %v387
    %4059 = vmatpush1.msra.mxu0 %v386
    %4060 = vmatprep.subr.mxu0 %v391
    %4061 = vmatpush1.msra.mxu0 %v390
    %4062 = vmatprep.subr.mxu0 %v395
    %4063 = vmatpush1.msra.mxu0 %v394
    %4064 = vmatprep.subr.mxu0 %v399
    %4065 = vmatpush1.msra.mxu0 %v398
    %4066 = vmatprep.subr.mxu0 %v403
    %4067 = vmatpush1.msra.mxu0 %v402
    %4068 = vmatprep.subr.mxu0 %v407
    %4069 = vmatpush1.msra.mxu0 %v406
    %4070 = vmatprep.subr.mxu0 %v411
    %4071 = vmatpush1.msra.mxu0 %v410
    %4072 = vmatprep.subr.mxu0 %v415
    %4073 = vmatpush1.msra.mxu0 %v414
    %4074 = vmatprep.subr.mxu0 0.0
    %4075 = vmatpush1.msra.mxu0 0.0
    %4076 = vmatprep.subr.mxu0 0.0
    %4077 = vmatpush1.msra.mxu0 0.0
    %4078 = vmatprep.subr.mxu0 0.0
    %4079 = vmatpush1.msra.mxu0 0.0
    %4080 = vmatprep.subr.mxu0 0.0
    %4081 = vmatpush1.msra.mxu0 0.0
    %4082 = vmatprep.subr.mxu0 0.0
    %4083 = vmatpush1.msra.mxu0 0.0
    %4084 = vmatprep.subr.mxu0 0.0
    %4085 = vmatpush1.msra.mxu0 0.0
    %4086 = vmatprep.subr.mxu0 0.0
    %4087 = vmatpush1.msra.mxu0 0.0
    %4088 = vmatprep.subr.mxu0 0.0
    %4089 = vmatpush1.msra.mxu0 0.0
    %4090 = vmatprep.subr.mxu0 0.0
    %4091 = vmatpush1.msra.mxu0 0.0
    %4092 = vmatprep.subr.mxu0 0.0
    %4093 = vmatpush1.msra.mxu0 0.0
    %4094 = vmatprep.subr.mxu0 0.0
    %4095 = vmatpush1.msra.mxu0 0.0
    %4096 = vmatprep.subr.mxu0 0.0
    %4097 = vmatpush1.msra.mxu0 0.0
    %4098 = vmatprep.subr.mxu0 0.0
    %4099 = vmatpush1.msra.mxu0 0.0
    %4100 = vmatprep.subr.mxu0 0.0
    %4101 = vmatpush1.msra.mxu0 0.0
    %4102 = vmatprep.subr.mxu0 0.0
    %4103 = vmatpush1.msra.mxu0 0.0
    %4104 = vmatprep.subr.mxu0 0.0
    %4105 = vmatpush1.msra.mxu0 0.0
    %4106 = vmatprep.mubr.f32.mxu0 0.0
    %4107 = vmatmul.mubr.f32.gmra.mrb[0].mxu0 %v3869
    %v4108 = vpop.f32.mrb[0].mxu0
    %v4109 = vadd.f32 0.0, %v4108
    %v4110 = vpop.f32.mrb[0].mxu0
    %v4111 = vadd.f32 0.0, %v4110
    %4112 = vdwg.mxu0
    %4113 = vmatprep.subr.mxu0 %v357
    %4114 = vmatpush1.msra.mxu0 %v356
    %4115 = vmatprep.subr.mxu0 %v361
    %4116 = vmatpush1.msra.mxu0 %v360
    %4117 = vmatprep.subr.mxu0 %v365
    %4118 = vmatpush1.msra.mxu0 %v364
    %4119 = vmatprep.subr.mxu0 %v369
    %4120 = vmatpush1.msra.mxu0 %v368
    %4121 = vmatprep.subr.mxu0 %v373
    %4122 = vmatpush1.msra.mxu0 %v372
    %4123 = vmatprep.subr.mxu0 %v377
    %4124 = vmatpush1.msra.mxu0 %v376
    %4125 = vmatprep.subr.mxu0 %v381
    %4126 = vmatpush1.msra.mxu0 %v380
    %4127 = vmatprep.subr.mxu0 %v385
    %4128 = vmatpush1.msra.mxu0 %v384
    %4129 = vmatprep.subr.mxu0 %v389
    %4130 = vmatpush1.msra.mxu0 %v388
    %4131 = vmatprep.subr.mxu0 %v393
    %4132 = vmatpush1.msra.mxu0 %v392
    %4133 = vmatprep.subr.mxu0 %v397
    %4134 = vmatpush1.msra.mxu0 %v396
    %4135 = vmatprep.subr.mxu0 %v401
    %4136 = vmatpush1.msra.mxu0 %v400
    %4137 = vmatprep.subr.mxu0 %v405
    %4138 = vmatpush1.msra.mxu0 %v404
    %4139 = vmatprep.subr.mxu0 %v409
    %4140 = vmatpush1.msra.mxu0 %v408
    %4141 = vmatprep.subr.mxu0 %v413
    %4142 = vmatpush1.msra.mxu0 %v412
    %4143 = vmatprep.subr.mxu0 %v417
    %4144 = vmatpush1.msra.mxu0 %v416
    %4145 = vmatprep.subr.mxu0 0.0
    %4146 = vmatpush1.msra.mxu0 0.0
    %4147 = vmatprep.subr.mxu0 0.0
    %4148 = vmatpush1.msra.mxu0 0.0
    %4149 = vmatprep.subr.mxu0 0.0
    %4150 = vmatpush1.msra.mxu0 0.0
    %4151 = vmatprep.subr.mxu0 0.0
    %4152 = vmatpush1.msra.mxu0 0.0
    %4153 = vmatprep.subr.mxu0 0.0
    %4154 = vmatpush1.msra.mxu0 0.0
    %4155 = vmatprep.subr.mxu0 0.0
    %4156 = vmatpush1.msra.mxu0 0.0
    %4157 = vmatprep.subr.mxu0 0.0
    %4158 = vmatpush1.msra.mxu0 0.0
    %4159 = vmatprep.subr.mxu0 0.0
    %4160 = vmatpush1.msra.mxu0 0.0
    %4161 = vmatprep.subr.mxu0 0.0
    %4162 = vmatpush1.msra.mxu0 0.0
    %4163 = vmatprep.subr.mxu0 0.0
    %4164 = vmatpush1.msra.mxu0 0.0
    %4165 = vmatprep.subr.mxu0 0.0
    %4166 = vmatpush1.msra.mxu0 0.0
    %4167 = vmatprep.subr.mxu0 0.0
    %4168 = vmatpush1.msra.mxu0 0.0
    %4169 = vmatprep.subr.mxu0 0.0
    %4170 = vmatpush1.msra.mxu0 0.0
    %4171 = vmatprep.subr.mxu0 0.0
    %4172 = vmatpush1.msra.mxu0 0.0
    %4173 = vmatprep.subr.mxu0 0.0
    %4174 = vmatpush1.msra.mxu0 0.0
    %4175 = vmatprep.subr.mxu0 0.0
    %4176 = vmatpush1.msra.mxu0 0.0
    %4177 = vmatprep.mubr.f32.mxu0 0.0
    %4178 = vmatmul.mubr.f32.gmra.mrb[0].mxu0 %v3869
    %v4179 = vpop.f32.mrb[0].mxu0
    %v4180 = vadd.f32 0.0, %v4179
    %v4181 = vpop.f32.mrb[0].mxu0
    %v4182 = vadd.f32 0.0, %v4181
    %4183 = vdwg.mxu0
    %v4188 = vrot.slane %v4109, 2
    %v4189 = vrot.slane %v4111, 2
    %v4190 = vrot.slane %v4180, 2
    %v4191 = vrot.slane %v4182, 2
    %v4196 = vadd.f32 %v273, %v4188
    %v4197 = vadd.f32 %v275, %v4189
    %v4198 = vadd.f32 %v350, %v4190
    %v4199 = vadd.f32 %v352, %v4191
    %v4200 = vxor.u32 %v4196, 2147483648
    %v4201 = vxor.u32 %v4197, 2147483648
    %v4202 = vxor.u32 %v4198, 2147483648
    %v4203 = vmul.f32 %v4200, 1.442695
    %v4204 = vpow.pop %v4203
    %v4205 = vmul.f32 %v4201, 1.442695
    %v4206 = vpow.pop %v4205
    %v4207 = vmul.f32 %v4202, 1.442695
    %v4208 = vpow.pop %v4207
    %v4209 = vadd.f32 %v4204, 1.0
    %v4210 = vadd.f32 %v4206, 1.0
    %v4211 = vadd.f32 %v4208, 1.0
    %v4212 = vrcp.pop %v4209
    %v4213 = vmul.f32 1.0, %v4212
    %v4214 = vrcp.pop %v4210
    %v4215 = vmul.f32 1.0, %v4214
    %v4216 = vrcp.pop %v4211
    %v4217 = vmul.f32 1.0, %v4216
    %v4218 = vtanh.pop %v4199
    %v4220 = vrot.slane %v3723, 6
    %v4222 = vmul.f32 %v4215, %v4220
    %v4223 = vmul.f32 %v4213, %v4218
    %v4224 = vadd.f32 %v4222, %v4223
    %v4225 = vtanh.pop %v4224
    %v4226 = vmul.f32 %v4217, %v4225
    %4227 = vmatprep.subr.mxu0 %v483
    %4228 = vmatpush1.msra.mxu0 %v482
    %4229 = vmatprep.subr.mxu0 %v487
    %4230 = vmatpush1.msra.mxu0 %v486
    %4231 = vmatprep.subr.mxu0 %v491
    %4232 = vmatpush1.msra.mxu0 %v490
    %4233 = vmatprep.subr.mxu0 %v495
    %4234 = vmatpush1.msra.mxu0 %v494
    %4235 = vmatprep.subr.mxu0 %v499
    %4236 = vmatpush1.msra.mxu0 %v498
    %4237 = vmatprep.subr.mxu0 %v503
    %4238 = vmatpush1.msra.mxu0 %v502
    %4239 = vmatprep.subr.mxu0 %v507
    %4240 = vmatpush1.msra.mxu0 %v506
    %4241 = vmatprep.subr.mxu0 %v511
    %4242 = vmatpush1.msra.mxu0 %v510
    %4243 = vmatprep.subr.mxu0 %v515
    %4244 = vmatpush1.msra.mxu0 %v514
    %4245 = vmatprep.subr.mxu0 %v519
    %4246 = vmatpush1.msra.mxu0 %v518
    %4247 = vmatprep.subr.mxu0 %v523
    %4248 = vmatpush1.msra.mxu0 %v522
    %4249 = vmatprep.subr.mxu0 %v527
    %4250 = vmatpush1.msra.mxu0 %v526
    %4251 = vmatprep.subr.mxu0 %v531
    %4252 = vmatpush1.msra.mxu0 %v530
    %4253 = vmatprep.subr.mxu0 %v535
    %4254 = vmatpush1.msra.mxu0 %v534
    %4255 = vmatprep.subr.mxu0 %v539
    %4256 = vmatpush1.msra.mxu0 %v538
    %4257 = vmatprep.subr.mxu0 %v543
    %4258 = vmatpush1.msra.mxu0 %v542
    %4259 = vmatprep.subr.mxu0 0.0
    %4260 = vmatpush1.msra.mxu0 0.0
    %4261 = vmatprep.subr.mxu0 0.0
    %4262 = vmatpush1.msra.mxu0 0.0
    %4263 = vmatprep.subr.mxu0 0.0
    %4264 = vmatpush1.msra.mxu0 0.0
    %4265 = vmatprep.subr.mxu0 0.0
    %4266 = vmatpush1.msra.mxu0 0.0
    %4267 = vmatprep.subr.mxu0 0.0
    %4268 = vmatpush1.msra.mxu0 0.0
    %4269 = vmatprep.subr.mxu0 0.0
    %4270 = vmatpush1.msra.mxu0 0.0
    %4271 = vmatprep.subr.mxu0 0.0
    %4272 = vmatpush1.msra.mxu0 0.0
    %4273 = vmatprep.subr.mxu0 0.0
    %4274 = vmatpush1.msra.mxu0 0.0
    %4275 = vmatprep.subr.mxu0 0.0
    %4276 = vmatpush1.msra.mxu0 0.0
    %4277 = vmatprep.subr.mxu0 0.0
    %4278 = vmatpush1.msra.mxu0 0.0
    %4279 = vmatprep.subr.mxu0 0.0
    %4280 = vmatpush1.msra.mxu0 0.0
    %4281 = vmatprep.subr.mxu0 0.0
    %4282 = vmatpush1.msra.mxu0 0.0
    %4283 = vmatprep.subr.mxu0 0.0
    %4284 = vmatpush1.msra.mxu0 0.0
    %4285 = vmatprep.subr.mxu0 0.0
    %4286 = vmatpush1.msra.mxu0 0.0
    %4287 = vmatprep.subr.mxu0 0.0
    %4288 = vmatpush1.msra.mxu0 0.0
    %4289 = vmatprep.subr.mxu0 0.0
    %4290 = vmatpush1.msra.mxu0 0.0
    %4291 = vmatprep.mubr.f32.mxu0 0.0
    %4292 = vmatmul.mubr.f32.gmra.mrb[0].mxu0 %v4040
    %v4293 = vpop.f32.mrb[0].mxu0
    %v4294 = vadd.f32 0.0, %v4293
    %v4295 = vpop.f32.mrb[0].mxu0
    %v4296 = vadd.f32 0.0, %v4295
    %4297 = vdwg.mxu0
    %4298 = vmatprep.subr.mxu0 %v485
    %4299 = vmatpush1.msra.mxu0 %v484
    %4300 = vmatprep.subr.mxu0 %v489
    %4301 = vmatpush1.msra.mxu0 %v488
    %4302 = vmatprep.subr.mxu0 %v493
    %4303 = vmatpush1.msra.mxu0 %v492
    %4304 = vmatprep.subr.mxu0 %v497
    %4305 = vmatpush1.msra.mxu0 %v496
    %4306 = vmatprep.subr.mxu0 %v501
    %4307 = vmatpush1.msra.mxu0 %v500
    %4308 = vmatprep.subr.mxu0 %v505
    %4309 = vmatpush1.msra.mxu0 %v504
    %4310 = vmatprep.subr.mxu0 %v509
    %4311 = vmatpush1.msra.mxu0 %v508
    %4312 = vmatprep.subr.mxu0 %v513
    %4313 = vmatpush1.msra.mxu0 %v512
    %4314 = vmatprep.subr.mxu0 %v517
    %4315 = vmatpush1.msra.mxu0 %v516
    %4316 = vmatprep.subr.mxu0 %v521
    %4317 = vmatpush1.msra.mxu0 %v520
    %4318 = vmatprep.subr.mxu0 %v525
    %4319 = vmatpush1.msra.mxu0 %v524
    %4320 = vmatprep.subr.mxu0 %v529
    %4321 = vmatpush1.msra.mxu0 %v528
    %4322 = vmatprep.subr.mxu0 %v533
    %4323 = vmatpush1.msra.mxu0 %v532
    %4324 = vmatprep.subr.mxu0 %v537
    %4325 = vmatpush1.msra.mxu0 %v536
    %4326 = vmatprep.subr.mxu0 %v541
    %4327 = vmatpush1.msra.mxu0 %v540
    %4328 = vmatprep.subr.mxu0 %v545
    %4329 = vmatpush1.msra.mxu0 %v544
    %4330 = vmatprep.subr.mxu0 0.0
    %4331 = vmatpush1.msra.mxu0 0.0
    %4332 = vmatprep.subr.mxu0 0.0
    %4333 = vmatpush1.msra.mxu0 0.0
    %4334 = vmatprep.subr.mxu0 0.0
    %4335 = vmatpush1.msra.mxu0 0.0
    %4336 = vmatprep.subr.mxu0 0.0
    %4337 = vmatpush1.msra.mxu0 0.0
    %4338 = vmatprep.subr.mxu0 0.0
    %4339 = vmatpush1.msra.mxu0 0.0
    %4340 = vmatprep.subr.mxu0 0.0
    %4341 = vmatpush1.msra.mxu0 0.0
    %4342 = vmatprep.subr.mxu0 0.0
    %4343 = vmatpush1.msra.mxu0 0.0
    %4344 = vmatprep.subr.mxu0 0.0
    %4345 = vmatpush1.msra.mxu0 0.0
    %4346 = vmatprep.subr.mxu0 0.0
    %4347 = vmatpush1.msra.mxu0 0.0
    %4348 = vmatprep.subr.mxu0 0.0
    %4349 = vmatpush1.msra.mxu0 0.0
    %4350 = vmatprep.subr.mxu0 0.0
    %4351 = vmatpush1.msra.mxu0 0.0
    %4352 = vmatprep.subr.mxu0 0.0
    %4353 = vmatpush1.msra.mxu0 0.0
    %4354 = vmatprep.subr.mxu0 0.0
    %4355 = vmatpush1.msra.mxu0 0.0
    %4356 = vmatprep.subr.mxu0 0.0
    %4357 = vmatpush1.msra.mxu0 0.0
    %4358 = vmatprep.subr.mxu0 0.0
    %4359 = vmatpush1.msra.mxu0 0.0
    %4360 = vmatprep.subr.mxu0 0.0
    %4361 = vmatpush1.msra.mxu0 0.0
    %4362 = vmatprep.mubr.f32.mxu0 0.0
    %4363 = vmatmul.mubr.f32.gmra.mrb[0].mxu0 %v4040
    %v4364 = vpop.f32.mrb[0].mxu0
    %v4365 = vadd.f32 0.0, %v4364
    %v4366 = vpop.f32.mrb[0].mxu0
    %v4367 = vadd.f32 0.0, %v4366
    %4368 = vdwg.mxu0
    %v4370 = vrot.slane %v4226, 6
    %4372 = vmatprep.subr.mxu0 %v419
    %4373 = vmatpush1.msra.mxu0 %v418
    %4374 = vmatprep.subr.mxu0 %v423
    %4375 = vmatpush1.msra.mxu0 %v422
    %4376 = vmatprep.subr.mxu0 %v427
    %4377 = vmatpush1.msra.mxu0 %v426
    %4378 = vmatprep.subr.mxu0 %v431
    %4379 = vmatpush1.msra.mxu0 %v430
    %4380 = vmatprep.subr.mxu0 %v435
    %4381 = vmatpush1.msra.mxu0 %v434
    %4382 = vmatprep.subr.mxu0 %v439
    %4383 = vmatpush1.msra.mxu0 %v438
    %4384 = vmatprep.subr.mxu0 %v443
    %4385 = vmatpush1.msra.mxu0 %v442
    %4386 = vmatprep.subr.mxu0 %v447
    %4387 = vmatpush1.msra.mxu0 %v446
    %4388 = vmatprep.subr.mxu0 %v451
    %4389 = vmatpush1.msra.mxu0 %v450
    %4390 = vmatprep.subr.mxu0 %v455
    %4391 = vmatpush1.msra.mxu0 %v454
    %4392 = vmatprep.subr.mxu0 %v459
    %4393 = vmatpush1.msra.mxu0 %v458
    %4394 = vmatprep.subr.mxu0 %v463
    %4395 = vmatpush1.msra.mxu0 %v462
    %4396 = vmatprep.subr.mxu0 %v467
    %4397 = vmatpush1.msra.mxu0 %v466
    %4398 = vmatprep.subr.mxu0 %v471
    %4399 = vmatpush1.msra.mxu0 %v470
    %4400 = vmatprep.subr.mxu0 %v475
    %4401 = vmatpush1.msra.mxu0 %v474
    %4402 = vmatprep.subr.mxu0 %v479
    %4403 = vmatpush1.msra.mxu0 %v478
    %4404 = vmatprep.subr.mxu0 0.0
    %4405 = vmatpush1.msra.mxu0 0.0
    %4406 = vmatprep.subr.mxu0 0.0
    %4407 = vmatpush1.msra.mxu0 0.0
    %4408 = vmatprep.subr.mxu0 0.0
    %4409 = vmatpush1.msra.mxu0 0.0
    %4410 = vmatprep.subr.mxu0 0.0
    %4411 = vmatpush1.msra.mxu0 0.0
    %4412 = vmatprep.subr.mxu0 0.0
    %4413 = vmatpush1.msra.mxu0 0.0
    %4414 = vmatprep.subr.mxu0 0.0
    %4415 = vmatpush1.msra.mxu0 0.0
    %4416 = vmatprep.subr.mxu0 0.0
    %4417 = vmatpush1.msra.mxu0 0.0
    %4418 = vmatprep.subr.mxu0 0.0
    %4419 = vmatpush1.msra.mxu0 0.0
    %4420 = vmatprep.subr.mxu0 0.0
    %4421 = vmatpush1.msra.mxu0 0.0
    %4422 = vmatprep.subr.mxu0 0.0
    %4423 = vmatpush1.msra.mxu0 0.0
    %4424 = vmatprep.subr.mxu0 0.0
    %4425 = vmatpush1.msra.mxu0 0.0
    %4426 = vmatprep.subr.mxu0 0.0
    %4427 = vmatpush1.msra.mxu0 0.0
    %4428 = vmatprep.subr.mxu0 0.0
    %4429 = vmatpush1.msra.mxu0 0.0
    %4430 = vmatprep.subr.mxu0 0.0
    %4431 = vmatpush1.msra.mxu0 0.0
    %4432 = vmatprep.subr.mxu0 0.0
    %4433 = vmatpush1.msra.mxu0 0.0
    %4434 = vmatprep.subr.mxu0 0.0
    %4435 = vmatpush1.msra.mxu0 0.0
    %4436 = vmatprep.mubr.f32.mxu0 0.0
    %4437 = vmatmul.mubr.f32.gmra.mrb[0].mxu0 %v4370
    %v4438 = vpop.f32.mrb[0].mxu0
    %v4439 = vadd.f32 %v4294, %v4438
    %v4440 = vpop.f32.mrb[0].mxu0
    %v4441 = vadd.f32 %v4296, %v4440
    %4442 = vdwg.mxu0
    %4443 = vmatprep.subr.mxu0 %v421
    %4444 = vmatpush1.msra.mxu0 %v420
    %4445 = vmatprep.subr.mxu0 %v425
    %4446 = vmatpush1.msra.mxu0 %v424
    %4447 = vmatprep.subr.mxu0 %v429
    %4448 = vmatpush1.msra.mxu0 %v428
    %4449 = vmatprep.subr.mxu0 %v433
    %4450 = vmatpush1.msra.mxu0 %v432
    %4451 = vmatprep.subr.mxu0 %v437
    %4452 = vmatpush1.msra.mxu0 %v436
    %4453 = vmatprep.subr.mxu0 %v441
    %4454 = vmatpush1.msra.mxu0 %v440
    %4455 = vmatprep.subr.mxu0 %v445
    %4456 = vmatpush1.msra.mxu0 %v444
    %4457 = vmatprep.subr.mxu0 %v449
    %4458 = vmatpush1.msra.mxu0 %v448
    %4459 = vmatprep.subr.mxu0 %v453
    %4460 = vmatpush1.msra.mxu0 %v452
    %4461 = vmatprep.subr.mxu0 %v457
    %4462 = vmatpush1.msra.mxu0 %v456
    %4463 = vmatprep.subr.mxu0 %v461
    %4464 = vmatpush1.msra.mxu0 %v460
    %4465 = vmatprep.subr.mxu0 %v465
    %4466 = vmatpush1.msra.mxu0 %v464
    %4467 = vmatprep.subr.mxu0 %v469
    %4468 = vmatpush1.msra.mxu0 %v468
    %4469 = vmatprep.subr.mxu0 %v473
    %4470 = vmatpush1.msra.mxu0 %v472
    %4471 = vmatprep.subr.mxu0 %v477
    %4472 = vmatpush1.msra.mxu0 %v476
    %4473 = vmatprep.subr.mxu0 %v481
    %4474 = vmatpush1.msra.mxu0 %v480
    %4475 = vmatprep.subr.mxu0 0.0
    %4476 = vmatpush1.msra.mxu0 0.0
    %4477 = vmatprep.subr.mxu0 0.0
    %4478 = vmatpush1.msra.mxu0 0.0
    %4479 = vmatprep.subr.mxu0 0.0
    %4480 = vmatpush1.msra.mxu0 0.0
    %4481 = vmatprep.subr.mxu0 0.0
    %4482 = vmatpush1.msra.mxu0 0.0
    %4483 = vmatprep.subr.mxu0 0.0
    %4484 = vmatpush1.msra.mxu0 0.0
    %4485 = vmatprep.subr.mxu0 0.0
    %4486 = vmatpush1.msra.mxu0 0.0
    %4487 = vmatprep.subr.mxu0 0.0
    %4488 = vmatpush1.msra.mxu0 0.0
    %4489 = vmatprep.subr.mxu0 0.0
    %4490 = vmatpush1.msra.mxu0 0.0
    %4491 = vmatprep.subr.mxu0 0.0
    %4492 = vmatpush1.msra.mxu0 0.0
    %4493 = vmatprep.subr.mxu0 0.0
    %4494 = vmatpush1.msra.mxu0 0.0
    %4495 = vmatprep.subr.mxu0 0.0
    %4496 = vmatpush1.msra.mxu0 0.0
    %4497 = vmatprep.subr.mxu0 0.0
    %4498 = vmatpush1.msra.mxu0 0.0
    %4499 = vmatprep.subr.mxu0 0.0
    %4500 = vmatpush1.msra.mxu0 0.0
    %4501 = vmatprep.subr.mxu0 0.0
    %4502 = vmatpush1.msra.mxu0 0.0
    %4503 = vmatprep.subr.mxu0 0.0
    %4504 = vmatpush1.msra.mxu0 0.0
    %4505 = vmatprep.subr.mxu0 0.0
    %4506 = vmatpush1.msra.mxu0 0.0
    %4507 = vmatprep.mubr.f32.mxu0 0.0
    %4508 = vmatmul.mubr.f32.gmra.mrb[0].mxu0 %v4370
    %v4509 = vpop.f32.mrb[0].mxu0
    %v4510 = vadd.f32 %v4365, %v4509
    %v4511 = vpop.f32.mrb[0].mxu0
    %v4512 = vadd.f32 %v4367, %v4511
    %4513 = vdwg.mxu0
    %v4514 = vadd.f32 %v4439, %v1005
    %v4515 = vadd.f32 %v4441, %v1009
    %v4516 = vadd.f32 %v4510, %v1013
    %v4517 = vadd.f32 %v4512, %v1017
    %v4518 = vxor.u32 %v4514, 2147483648
    %v4519 = vxor.u32 %v4515, 2147483648
    %v4520 = vxor.u32 %v4516, 2147483648
    %v4521 = vmul.f32 %v4518, 1.442695
    %v4522 = vpow.pop %v4521
    %v4523 = vmul.f32 %v4519, 1.442695
    %v4524 = vpow.pop %v4523
    %v4525 = vmul.f32 %v4520, 1.442695
    %v4526 = vpow.pop %v4525
    %v4527 = vadd.f32 %v4522, 1.0
    %v4528 = vadd.f32 %v4524, 1.0
    %v4529 = vadd.f32 %v4526, 1.0
    %v4530 = vrcp.pop %v4527
    %v4531 = vmul.f32 1.0, %v4530
    %v4532 = vrcp.pop %v4528
    %v4533 = vmul.f32 1.0, %v4532
    %v4534 = vrcp.pop %v4529
    %v4535 = vmul.f32 1.0, %v4534
    %v4536 = vtanh.pop %v4517
    %v4537 = vmul.f32 %v4533, %v4038
    %v4538 = vmul.f32 %v4531, %v4536
    %v4539 = vadd.f32 %v4537, %v4538
    %v4540 = vtanh.pop %v4539
    %v4541 = vmul.f32 %v4535, %v4540
    %4542 = vst [vmem:[#allocation2 + $0xe] sm:$0x3] %v4541
    %v4543 = vld [vmem:[#allocation2] sm:$0xff]
    %v4544 = vld [vmem:[#allocation2 + $0x8] sm:$0xff]
    %v4545 = vld [vmem:[%s7] sm:$0xff]
    %v4546 = vld [vmem:[%s7 + $0x8] sm:$0xff]
    %v4547 = vld [vmem:[%s7 + $0x10] sm:$0xff]
    %v4548 = vld [vmem:[%s7 + $0x18] sm:$0xff]
    %v4549 = vld [vmem:[%s7 + $0x20] sm:$0xff]
    %v4550 = vld [vmem:[%s7 + $0x28] sm:$0xff]
    %v4551 = vld [vmem:[%s7 + $0x30] sm:$0xff]
    %v4552 = vld [vmem:[%s7 + $0x38] sm:$0xff]
    %v4553 = vld [vmem:[%s7 + $0x40] sm:$0xff]
    %v4554 = vld [vmem:[%s7 + $0x48] sm:$0xff]
    %v4555 = vld [vmem:[%s7 + $0x50] sm:$0xff]
    %v4556 = vld [vmem:[%s7 + $0x58] sm:$0xff]
    %v4557 = vld [vmem:[%s7 + $0x60] sm:$0xff]
    %v4558 = vld [vmem:[%s7 + $0x68] sm:$0xff]
    %v4559 = vld [vmem:[%s7 + $0x70] sm:$0xff]
    %v4560 = vld [vmem:[%s7 + $0x78] sm:$0xff]
    %v4561 = vld [vmem:[%s8] sm:$0x1]
    %v4563 = vlaneseq
    %v4564 = vshrl.u32 %v4563, 7
    %v4565 = vsub.s32 0, %v4564
    %v4566 = vrot.slane %v4561, %v4565
    %4568 = vmatprep.subr.mxu0 0.0
    %4569 = vmatpush1.msra.mxu0 %v4545
    %4570 = vmatprep.subr.mxu0 0.0
    %4571 = vmatpush1.msra.mxu0 %v4546
    %4572 = vmatprep.subr.mxu0 0.0
    %4573 = vmatpush1.msra.mxu0 %v4547
    %4574 = vmatprep.subr.mxu0 0.0
    %4575 = vmatpush1.msra.mxu0 %v4548
    %4576 = vmatprep.subr.mxu0 0.0
    %4577 = vmatpush1.msra.mxu0 %v4549
    %4578 = vmatprep.subr.mxu0 0.0
    %4579 = vmatpush1.msra.mxu0 %v4550
    %4580 = vmatprep.subr.mxu0 0.0
    %4581 = vmatpush1.msra.mxu0 %v4551
    %4582 = vmatprep.subr.mxu0 0.0
    %4583 = vmatpush1.msra.mxu0 %v4552
    %4584 = vmatprep.subr.mxu0 0.0
    %4585 = vmatpush1.msra.mxu0 %v4553
    %4586 = vmatprep.subr.mxu0 0.0
    %4587 = vmatpush1.msra.mxu0 %v4554
    %4588 = vmatprep.subr.mxu0 0.0
    %4589 = vmatpush1.msra.mxu0 %v4555
    %4590 = vmatprep.subr.mxu0 0.0
    %4591 = vmatpush1.msra.mxu0 %v4556
    %4592 = vmatprep.subr.mxu0 0.0
    %4593 = vmatpush1.msra.mxu0 %v4557
    %4594 = vmatprep.subr.mxu0 0.0
    %4595 = vmatpush1.msra.mxu0 %v4558
    %4596 = vmatprep.subr.mxu0 0.0
    %4597 = vmatpush1.msra.mxu0 %v4559
    %4598 = vmatprep.subr.mxu0 0.0
    %4599 = vmatpush1.msra.mxu0 %v4560
    %4600 = vmatprep.subr.mxu0 0.0
    %4601 = vmatpush1.msra.mxu0 0.0
    %4602 = vmatprep.subr.mxu0 0.0
    %4603 = vmatpush1.msra.mxu0 0.0
    %4604 = vmatprep.subr.mxu0 0.0
    %4605 = vmatpush1.msra.mxu0 0.0
    %4606 = vmatprep.subr.mxu0 0.0
    %4607 = vmatpush1.msra.mxu0 0.0
    %4608 = vmatprep.subr.mxu0 0.0
    %4609 = vmatpush1.msra.mxu0 0.0
    %4610 = vmatprep.subr.mxu0 0.0
    %4611 = vmatpush1.msra.mxu0 0.0
    %4612 = vmatprep.subr.mxu0 0.0
    %4613 = vmatpush1.msra.mxu0 0.0
    %4614 = vmatprep.subr.mxu0 0.0
    %4615 = vmatpush1.msra.mxu0 0.0
    %4616 = vmatprep.subr.mxu0 0.0
    %4617 = vmatpush1.msra.mxu0 0.0
    %4618 = vmatprep.subr.mxu0 0.0
    %4619 = vmatpush1.msra.mxu0 0.0
    %4620 = vmatprep.subr.mxu0 0.0
    %4621 = vmatpush1.msra.mxu0 0.0
    %4622 = vmatprep.subr.mxu0 0.0
    %4623 = vmatpush1.msra.mxu0 0.0
    %4624 = vmatprep.subr.mxu0 0.0
    %4625 = vmatpush1.msra.mxu0 0.0
    %4626 = vmatprep.subr.mxu0 0.0
    %4627 = vmatpush1.msra.mxu0 0.0
    %4628 = vmatprep.subr.mxu0 0.0
    %4629 = vmatpush1.msra.mxu0 0.0
    %4630 = vmatprep.subr.mxu0 0.0
    %4631 = vmatpush1.msra.mxu0 0.0
    %4632 = vmatprep.mubr.f32.mxu0 0.0
    %4633 = vmatmul.mubr.f32.gmra.mrb[0].mxu0 %v4543
    %v4634 = vpop.f32.mrb[0].mxu0
    %v4635 = vadd.f32 %v4566, %v4634
    %v4636 = vpop.f32.mrb[0].mxu0
    %4637 = vmatprep.mubr.f32.mxu0 0.0
    %4638 = vmatmul.mubr.f32.gmra.mrb[0].mxu0 %v4544
    %v4639 = vpop.f32.mrb[0].mxu0
    %v4640 = vadd.f32 %v4566, %v4639
    %v4641 = vpop.f32.mrb[0].mxu0
    %4642 = vdwg.mxu0
    %v4643 = vtanh.pop %v4635
    %v4644 = vtanh.pop %v4640
    %v4645 = vld [vmem:[%s9] sm:$0xff]
    %v4646 = vld [vmem:[%s9 + $0x8] sm:$0xff]
    %v4647 = vld [vmem:[%s9 + $0x10] sm:$0xff]
    %v4648 = vld [vmem:[%s9 + $0x18] sm:$0xff]
    %v4649 = vld [vmem:[%s9 + $0x20] sm:$0xff]
    %v4650 = vld [vmem:[%s9 + $0x28] sm:$0xff]
    %v4651 = vld [vmem:[%s9 + $0x30] sm:$0xff]
    %v4652 = vld [vmem:[%s9 + $0x38] sm:$0xff]
    %v4653 = vld [vmem:[#allocation3] sm:$0x1]
    %v4655 = vlaneseq
    %v4656 = vshrl.u32 %v4655, 7
    %v4657 = vsub.s32 0, %v4656
    %v4658 = vrot.slane %v4653, %v4657
    %vm4660 = vcmask 523264
    %v4662 = vsel %vm4660, %v4643, 0
    %v4665 = vsel %vm4660, %v4644, 0
    %4667 = vmatprep.subr.mxu0 0.0
    %4668 = vmatpush1.msra.mxu0 %v4645
    %4669 = vmatprep.subr.mxu0 0.0
    %4670 = vmatpush1.msra.mxu0 %v4646
    %4671 = vmatprep.subr.mxu0 0.0
    %4672 = vmatpush1.msra.mxu0 %v4647
    %4673 = vmatprep.subr.mxu0 0.0
    %4674 = vmatpush1.msra.mxu0 %v4648
    %4675 = vmatprep.subr.mxu0 0.0
    %4676 = vmatpush1.msra.mxu0 %v4649
    %4677 = vmatprep.subr.mxu0 0.0
    %4678 = vmatpush1.msra.mxu0 %v4650
    %4679 = vmatprep.subr.mxu0 0.0
    %4680 = vmatpush1.msra.mxu0 %v4651
    %4681 = vmatprep.subr.mxu0 0.0
    %4682 = vmatpush1.msra.mxu0 %v4652
    %4683 = vmatprep.subr.mxu0 0.0
    %4684 = vmatpush1.msra.mxu0 0.0
    %4685 = vmatprep.subr.mxu0 0.0
    %4686 = vmatpush1.msra.mxu0 0.0
    %4687 = vmatprep.subr.mxu0 0.0
    %4688 = vmatpush1.msra.mxu0 0.0
    %4689 = vmatprep.subr.mxu0 0.0
    %4690 = vmatpush1.msra.mxu0 0.0
    %4691 = vmatprep.subr.mxu0 0.0
    %4692 = vmatpush1.msra.mxu0 0.0
    %4693 = vmatprep.subr.mxu0 0.0
    %4694 = vmatpush1.msra.mxu0 0.0
    %4695 = vmatprep.subr.mxu0 0.0
    %4696 = vmatpush1.msra.mxu0 0.0
    %4697 = vmatprep.subr.mxu0 0.0
    %4698 = vmatpush1.msra.mxu0 0.0
    %4699 = vmatprep.subr.mxu0 0.0
    %4700 = vmatpush1.msra.mxu0 0.0
    %4701 = vmatprep.subr.mxu0 0.0
    %4702 = vmatpush1.msra.mxu0 0.0
    %4703 = vmatprep.subr.mxu0 0.0
    %4704 = vmatpush1.msra.mxu0 0.0
    %4705 = vmatprep.subr.mxu0 0.0
    %4706 = vmatpush1.msra.mxu0 0.0
    %4707 = vmatprep.subr.mxu0 0.0
    %4708 = vmatpush1.msra.mxu0 0.0
    %4709 = vmatprep.subr.mxu0 0.0
    %4710 = vmatpush1.msra.mxu0 0.0
    %4711 = vmatprep.subr.mxu0 0.0
    %4712 = vmatpush1.msra.mxu0 0.0
    %4713 = vmatprep.subr.mxu0 0.0
    %4714 = vmatpush1.msra.mxu0 0.0
    %4715 = vmatprep.subr.mxu0 0.0
    %4716 = vmatpush1.msra.mxu0 0.0
    %4717 = vmatprep.subr.mxu0 0.0
    %4718 = vmatpush1.msra.mxu0 0.0
    %4719 = vmatprep.subr.mxu0 0.0
    %4720 = vmatpush1.msra.mxu0 0.0
    %4721 = vmatprep.subr.mxu0 0.0
    %4722 = vmatpush1.msra.mxu0 0.0
    %4723 = vmatprep.subr.mxu0 0.0
    %4724 = vmatpush1.msra.mxu0 0.0
    %4725 = vmatprep.subr.mxu0 0.0
    %4726 = vmatpush1.msra.mxu0 0.0
    %4727 = vmatprep.subr.mxu0 0.0
    %4728 = vmatpush1.msra.mxu0 0.0
    %4729 = vmatprep.subr.mxu0 0.0
    %4730 = vmatpush1.msra.mxu0 0.0
    %4731 = vmatprep.mubr.f32.mxu0 0.0
    %4732 = vmatmul.mubr.f32.gmra.mrb[0].mxu0 %v4662
    %v4733 = vpop.f32.mrb[0].mxu0
    %v4734 = vadd.f32 %v4658, %v4733
    %v4735 = vpop.f32.mrb[0].mxu0
    %4736 = vmatprep.mubr.f32.mxu0 0.0
    %4737 = vmatmul.mubr.f32.gmra.mrb[0].mxu0 %v4665
    %v4738 = vpop.f32.mrb[0].mxu0
    %v4739 = vadd.f32 %v4658, %v4738
    %v4740 = vpop.f32.mrb[0].mxu0
    %4741 = vdwg.mxu0
    %v4743 = vrot.slane %v4734, 2
    %v4745 = vmax.f32 %v4734, %v4743
    %v4746 = vrot.slane %v4734, 4
    %v4748 = vmax.f32 %v4745, %v4746
    %v4749 = vrot.slane %v4734, 6
    %v4751 = vmax.f32 %v4748, %v4749
    %v4752 = vmax.f32 %v4751, %v4739
    %v4754 = vrot.slane %v4739, 2
    %v4756 = vmax.f32 %v4752, %v4754
    %v4757 = vrot.slane %v4739, 4
    %v4759 = vmax.f32 %v4756, %v4757
    %v4760 = vrot.slane %v4739, 6
    %v4762 = vmax.f32 %v4759, %v4760
    %v4763 = vsub.f32 %v4734, %v4762
    %v4764 = vmul.f32 %v4763, 1.442695
    %v4765 = vpow.pop %v4764
    %v4767 = vrot.slane %v4762, 6
    %v4769 = vsub.f32 %v4734, %v4767
    %v4770 = vmul.f32 %v4769, 1.442695
    %v4771 = vpow.pop %v4770
    %v4772 = vrot.slane %v4762, 4
    %v4774 = vsub.f32 %v4734, %v4772
    %v4775 = vmul.f32 %v4774, 1.442695
    %v4776 = vpow.pop %v4775
    %v4777 = vrot.slane %v4762, 2
    %v4779 = vsub.f32 %v4734, %v4777
    %v4780 = vmul.f32 %v4779, 1.442695
    %v4781 = vpow.pop %v4780
    %v4782 = vsub.f32 %v4739, %v4762
    %v4783 = vmul.f32 %v4782, 1.442695
    %v4784 = vpow.pop %v4783
    %v4785 = vsub.f32 %v4739, %v4767
    %v4786 = vmul.f32 %v4785, 1.442695
    %v4787 = vpow.pop %v4786
    %v4788 = vsub.f32 %v4739, %v4772
    %v4789 = vmul.f32 %v4788, 1.442695
    %v4790 = vpow.pop %v4789
    %v4791 = vsub.f32 %v4739, %v4777
    %v4792 = vmul.f32 %v4791, 1.442695
    %v4793 = vpow.pop %v4792
    %v4795 = vrot.slane %v4771, 2
    %v4797 = vadd.f32 %v4765, %v4795
    %v4799 = vrot.slane %v4776, 4
    %v4801 = vadd.f32 %v4797, %v4799
    %v4803 = vrot.slane %v4781, 6
    %v4805 = vadd.f32 %v4801, %v4803
    %v4806 = vadd.f32 %v4805, %v4784
    %v4808 = vrot.slane %v4787, 2
    %v4810 = vadd.f32 %v4806, %v4808
    %v4812 = vrot.slane %v4790, 4
    %v4814 = vadd.f32 %v4810, %v4812
    %v4816 = vrot.slane %v4793, 6
    %v4818 = vadd.f32 %v4814, %v4816
    %v4819 = vrcp.pop %v4818
    %4821 = vset.pattern.permute.xlu0 0
    %4822 = vperm.xlu0 %4821, %v4765
    %v4823 = vpop.permute.xlu0 %4822
    %v4825 = vmul.f32 %v4823, %v4543
    %4826 = vset.pattern.permute.xlu0 0
    %4827 = vperm.xlu0 %4826, %v4771
    %v4828 = vpop.permute.xlu0 %4827
    %v4830 = vmul.f32 %v4828, %v4543
    %v4832 = vrot.slane %v4830, 2
    %v4834 = vadd.f32 %v4825, %v4832
    %4835 = vset.pattern.permute.xlu0 0
    %4836 = vperm.xlu0 %4835, %v4776
    %v4837 = vpop.permute.xlu0 %4836
    %v4839 = vmul.f32 %v4837, %v4543
    %v4841 = vrot.slane %v4839, 4
    %v4843 = vadd.f32 %v4834, %v4841
    %4844 = vset.pattern.permute.xlu0 0
    %4845 = vperm.xlu0 %4844, %v4781
    %v4846 = vpop.permute.xlu0 %4845
    %v4848 = vmul.f32 %v4846, %v4543
    %v4850 = vrot.slane %v4848, 6
    %v4852 = vadd.f32 %v4843, %v4850
    %4854 = vset.pattern.permute.xlu0 0
    %4855 = vperm.xlu0 %4854, %v4784
    %v4856 = vpop.permute.xlu0 %4855
    %v4858 = vmul.f32 %v4856, %v4544
    %v4859 = vadd.f32 %v4852, %v4858
    %4860 = vset.pattern.permute.xlu0 0
    %4861 = vperm.xlu0 %4860, %v4787
    %v4862 = vpop.permute.xlu0 %4861
    %v4864 = vmul.f32 %v4862, %v4544
    %v4866 = vrot.slane %v4864, 2
    %v4868 = vadd.f32 %v4859, %v4866
    %4869 = vset.pattern.permute.xlu0 0
    %4870 = vperm.xlu0 %4869, %v4790
    %v4871 = vpop.permute.xlu0 %4870
    %v4873 = vmul.f32 %v4871, %v4544
    %v4875 = vrot.slane %v4873, 4
    %v4877 = vadd.f32 %v4868, %v4875
    %4878 = vset.pattern.permute.xlu0 0
    %4879 = vperm.xlu0 %4878, %v4793
    %v4880 = vpop.permute.xlu0 %4879
    %v4882 = vmul.f32 %v4880, %v4544
    %v4884 = vrot.slane %v4882, 6
    %v4886 = vadd.f32 %v4877, %v4884
    %4888 = vset.pattern.permute.xlu0 0
    %4889 = vperm.xlu0 %4888, %v4819
    %v4890 = vpop.permute.xlu0 %4889
    %v4892 = vmul.f32 %v4886, %v4890
    %v4893 = vld [vmem:[%s11] sm:$0xff]
    %v4894 = vld [vmem:[%s11 + $0x8] sm:$0xff]
    %v4895 = vld [vmem:[%s11 + $0x10] sm:$0xff]
    %v4896 = vld [vmem:[%s11 + $0x18] sm:$0xff]
    %v4897 = vld [vmem:[%s11 + $0x20] sm:$0xff]
    %v4898 = vld [vmem:[%s11 + $0x28] sm:$0xff]
    %v4899 = vld [vmem:[%s11 + $0x30] sm:$0xff]
    %v4900 = vld [vmem:[%s11 + $0x38] sm:$0xff]
    %v4901 = vld [vmem:[%s11 + $0x40] sm:$0xff]
    %v4902 = vld [vmem:[%s11 + $0x48] sm:$0xff]
    %v4903 = vld [vmem:[%s11 + $0x50] sm:$0xff]
    %v4904 = vld [vmem:[%s11 + $0x58] sm:$0xff]
    %v4905 = vld [vmem:[%s11 + $0x60] sm:$0xff]
    %v4906 = vld [vmem:[%s11 + $0x68] sm:$0xff]
    %v4907 = vld [vmem:[%s11 + $0x70] sm:$0xff]
    %v4908 = vld [vmem:[%s11 + $0x78] sm:$0xff]
    %v4909 = vld [vmem:[%s12] sm:$0x1]
    %v4911 = vlaneseq
    %v4912 = vshrl.u32 %v4911, 7
    %v4913 = vsub.s32 0, %v4912
    %v4914 = vrot.slane %v4909, %v4913
    %4916 = vmatprep.subr.mxu0 0.0
    %4917 = vmatpush1.msra.mxu0 %v4893
    %4918 = vmatprep.subr.mxu0 0.0
    %4919 = vmatpush1.msra.mxu0 %v4894
    %4920 = vmatprep.subr.mxu0 0.0
    %4921 = vmatpush1.msra.mxu0 %v4895
    %4922 = vmatprep.subr.mxu0 0.0
    %4923 = vmatpush1.msra.mxu0 %v4896
    %4924 = vmatprep.subr.mxu0 0.0
    %4925 = vmatpush1.msra.mxu0 %v4897
    %4926 = vmatprep.subr.mxu0 0.0
    %4927 = vmatpush1.msra.mxu0 %v4898
    %4928 = vmatprep.subr.mxu0 0.0
    %4929 = vmatpush1.msra.mxu0 %v4899
    %4930 = vmatprep.subr.mxu0 0.0
    %4931 = vmatpush1.msra.mxu0 %v4900
    %4932 = vmatprep.subr.mxu0 0.0
    %4933 = vmatpush1.msra.mxu0 %v4901
    %4934 = vmatprep.subr.mxu0 0.0
    %4935 = vmatpush1.msra.mxu0 %v4902
    %4936 = vmatprep.subr.mxu0 0.0
    %4937 = vmatpush1.msra.mxu0 %v4903
    %4938 = vmatprep.subr.mxu0 0.0
    %4939 = vmatpush1.msra.mxu0 %v4904
    %4940 = vmatprep.subr.mxu0 0.0
    %4941 = vmatpush1.msra.mxu0 %v4905
    %4942 = vmatprep.subr.mxu0 0.0
    %4943 = vmatpush1.msra.mxu0 %v4906
    %4944 = vmatprep.subr.mxu0 0.0
    %4945 = vmatpush1.msra.mxu0 %v4907
    %4946 = vmatprep.subr.mxu0 0.0
    %4947 = vmatpush1.msra.mxu0 %v4908
    %4948 = vmatprep.subr.mxu0 0.0
    %4949 = vmatpush1.msra.mxu0 0.0
    %4950 = vmatprep.subr.mxu0 0.0
    %4951 = vmatpush1.msra.mxu0 0.0
    %4952 = vmatprep.subr.mxu0 0.0
    %4953 = vmatpush1.msra.mxu0 0.0
    %4954 = vmatprep.subr.mxu0 0.0
    %4955 = vmatpush1.msra.mxu0 0.0
    %4956 = vmatprep.subr.mxu0 0.0
    %4957 = vmatpush1.msra.mxu0 0.0
    %4958 = vmatprep.subr.mxu0 0.0
    %4959 = vmatpush1.msra.mxu0 0.0
    %4960 = vmatprep.subr.mxu0 0.0
    %4961 = vmatpush1.msra.mxu0 0.0
    %4962 = vmatprep.subr.mxu0 0.0
    %4963 = vmatpush1.msra.mxu0 0.0
    %4964 = vmatprep.subr.mxu0 0.0
    %4965 = vmatpush1.msra.mxu0 0.0
    %4966 = vmatprep.subr.mxu0 0.0
    %4967 = vmatpush1.msra.mxu0 0.0
    %4968 = vmatprep.subr.mxu0 0.0
    %4969 = vmatpush1.msra.mxu0 0.0
    %4970 = vmatprep.subr.mxu0 0.0
    %4971 = vmatpush1.msra.mxu0 0.0
    %4972 = vmatprep.subr.mxu0 0.0
    %4973 = vmatpush1.msra.mxu0 0.0
    %4974 = vmatprep.subr.mxu0 0.0
    %4975 = vmatpush1.msra.mxu0 0.0
    %4976 = vmatprep.subr.mxu0 0.0
    %4977 = vmatpush1.msra.mxu0 0.0
    %4978 = vmatprep.subr.mxu0 0.0
    %4979 = vmatpush1.msra.mxu0 0.0
    %4980 = vmatprep.mubr.f32.mxu0 0.0
    %4981 = vmatmul.mubr.f32.gmra.mrb[0].mxu0 %v4892
    %v4982 = vpop.f32.mrb[0].mxu0
    %v4983 = vadd.f32 %v4914, %v4982
    %v4984 = vpop.f32.mrb[0].mxu0
    %4985 = vdwg.mxu0
    %v4986 = vmax.f32 %v4983, 0.0
    %v4987 = vld [vmem:[%s13] sm:$0xff]
    %v4988 = vld [vmem:[%s13 + $0x8] sm:$0xff]
    %v4989 = vld [vmem:[%s13 + $0x10] sm:$0xff]
    %v4990 = vld [vmem:[%s13 + $0x18] sm:$0xff]
    %v4991 = vld [vmem:[%s13 + $0x20] sm:$0xff]
    %v4992 = vld [vmem:[%s13 + $0x28] sm:$0xff]
    %v4993 = vld [vmem:[%s13 + $0x30] sm:$0xff]
    %v4994 = vld [vmem:[%s13 + $0x38] sm:$0xff]
    %v4995 = vld [vmem:[#allocation4] sm:$0x1]
    %v4997 = vlaneseq
    %v4998 = vshrl.u32 %v4997, 7
    %v4999 = vsub.s32 0, %v4998
    %v5000 = vrot.slane %v4995, %v4999
    %v5003 = vsel %vm4660, %v4986, 0
    %5005 = vmatprep.subr.mxu0 0.0
    %5006 = vmatpush1.msra.mxu0 %v4987
    %5007 = vmatprep.subr.mxu0 0.0
    %5008 = vmatpush1.msra.mxu0 %v4988
    %5009 = vmatprep.subr.mxu0 0.0
    %5010 = vmatpush1.msra.mxu0 %v4989
    %5011 = vmatprep.subr.mxu0 0.0
    %5012 = vmatpush1.msra.mxu0 %v4990
    %5013 = vmatprep.subr.mxu0 0.0
    %5014 = vmatpush1.msra.mxu0 %v4991
    %5015 = vmatprep.subr.mxu0 0.0
    %5016 = vmatpush1.msra.mxu0 %v4992
    %5017 = vmatprep.subr.mxu0 0.0
    %5018 = vmatpush1.msra.mxu0 %v4993
    %5019 = vmatprep.subr.mxu0 0.0
    %5020 = vmatpush1.msra.mxu0 %v4994
    %5021 = vmatprep.subr.mxu0 0.0
    %5022 = vmatpush1.msra.mxu0 0.0
    %5023 = vmatprep.subr.mxu0 0.0
    %5024 = vmatpush1.msra.mxu0 0.0
    %5025 = vmatprep.subr.mxu0 0.0
    %5026 = vmatpush1.msra.mxu0 0.0
    %5027 = vmatprep.subr.mxu0 0.0
    %5028 = vmatpush1.msra.mxu0 0.0
    %5029 = vmatprep.subr.mxu0 0.0
    %5030 = vmatpush1.msra.mxu0 0.0
    %5031 = vmatprep.subr.mxu0 0.0
    %5032 = vmatpush1.msra.mxu0 0.0
    %5033 = vmatprep.subr.mxu0 0.0
    %5034 = vmatpush1.msra.mxu0 0.0
    %5035 = vmatprep.subr.mxu0 0.0
    %5036 = vmatpush1.msra.mxu0 0.0
    %5037 = vmatprep.subr.mxu0 0.0
    %5038 = vmatpush1.msra.mxu0 0.0
    %5039 = vmatprep.subr.mxu0 0.0
    %5040 = vmatpush1.msra.mxu0 0.0
    %5041 = vmatprep.subr.mxu0 0.0
    %5042 = vmatpush1.msra.mxu0 0.0
    %5043 = vmatprep.subr.mxu0 0.0
    %5044 = vmatpush1.msra.mxu0 0.0
    %5045 = vmatprep.subr.mxu0 0.0
    %5046 = vmatpush1.msra.mxu0 0.0
    %5047 = vmatprep.subr.mxu0 0.0
    %5048 = vmatpush1.msra.mxu0 0.0
    %5049 = vmatprep.subr.mxu0 0.0
    %5050 = vmatpush1.msra.mxu0 0.0
    %5051 = vmatprep.subr.mxu0 0.0
    %5052 = vmatpush1.msra.mxu0 0.0
    %5053 = vmatprep.subr.mxu0 0.0
    %5054 = vmatpush1.msra.mxu0 0.0
    %5055 = vmatprep.subr.mxu0 0.0
    %5056 = vmatpush1.msra.mxu0 0.0
    %5057 = vmatprep.subr.mxu0 0.0
    %5058 = vmatpush1.msra.mxu0 0.0
    %5059 = vmatprep.subr.mxu0 0.0
    %5060 = vmatpush1.msra.mxu0 0.0
    %5061 = vmatprep.subr.mxu0 0.0
    %5062 = vmatpush1.msra.mxu0 0.0
    %5063 = vmatprep.subr.mxu0 0.0
    %5064 = vmatpush1.msra.mxu0 0.0
    %5065 = vmatprep.subr.mxu0 0.0
    %5066 = vmatpush1.msra.mxu0 0.0
    %5067 = vmatprep.subr.mxu0 0.0
    %5068 = vmatpush1.msra.mxu0 0.0
    %5069 = vmatprep.mubr.f32.mxu0 0.0
    %5070 = vmatmul.mubr.f32.gmra.mrb[0].mxu0 %v5003
    %v5071 = vpop.f32.mrb[0].mxu0
    %v5072 = vadd.f32 %v5000, %v5071
    %v5073 = vpop.f32.mrb[0].mxu0
    %5074 = vdwg.mxu0
    %v5075 = vld [vmem:[%s15] sm:$0xff]
    %v5076 = vld [vmem:[%s15 + $0x8] sm:$0xff]
    %v5077 = vld [vmem:[%s15 + $0x10] sm:$0xff]
    %v5078 = vld [vmem:[%s15 + $0x18] sm:$0xff]
    %v5079 = vld [vmem:[%s15 + $0x20] sm:$0xff]
    %v5080 = vld [vmem:[%s15 + $0x28] sm:$0xff]
    %v5081 = vld [vmem:[%s15 + $0x30] sm:$0xff]
    %v5082 = vld [vmem:[%s15 + $0x38] sm:$0xff]
    %v5083 = vld [vmem:[%s15 + $0x40] sm:$0xff]
    %v5084 = vld [vmem:[%s15 + $0x48] sm:$0xff]
    %v5085 = vld [vmem:[%s15 + $0x50] sm:$0xff]
    %v5086 = vld [vmem:[%s15 + $0x58] sm:$0xff]
    %v5087 = vld [vmem:[%s15 + $0x60] sm:$0xff]
    %v5088 = vld [vmem:[%s15 + $0x68] sm:$0xff]
    %v5089 = vld [vmem:[%s15 + $0x70] sm:$0xff]
    %v5090 = vld [vmem:[%s15 + $0x78] sm:$0xff]
    %v5091 = vld [vmem:[#allocation5] sm:$0x1]
    %v5093 = vlaneseq
    %v5094 = vshrl.u32 %v5093, 7
    %v5095 = vsub.s32 0, %v5094
    %v5096 = vrot.slane %v5091, %v5095
    %5098 = vmatprep.subr.mxu0 0.0
    %5099 = vmatpush1.msra.mxu0 %v5075
    %5100 = vmatprep.subr.mxu0 0.0
    %5101 = vmatpush1.msra.mxu0 %v5076
    %5102 = vmatprep.subr.mxu0 0.0
    %5103 = vmatpush1.msra.mxu0 %v5077
    %5104 = vmatprep.subr.mxu0 0.0
    %5105 = vmatpush1.msra.mxu0 %v5078
    %5106 = vmatprep.subr.mxu0 0.0
    %5107 = vmatpush1.msra.mxu0 %v5079
    %5108 = vmatprep.subr.mxu0 0.0
    %5109 = vmatpush1.msra.mxu0 %v5080
    %5110 = vmatprep.subr.mxu0 0.0
    %5111 = vmatpush1.msra.mxu0 %v5081
    %5112 = vmatprep.subr.mxu0 0.0
    %5113 = vmatpush1.msra.mxu0 %v5082
    %5114 = vmatprep.subr.mxu0 0.0
    %5115 = vmatpush1.msra.mxu0 %v5083
    %5116 = vmatprep.subr.mxu0 0.0
    %5117 = vmatpush1.msra.mxu0 %v5084
    %5118 = vmatprep.subr.mxu0 0.0
    %5119 = vmatpush1.msra.mxu0 %v5085
    %5120 = vmatprep.subr.mxu0 0.0
    %5121 = vmatpush1.msra.mxu0 %v5086
    %5122 = vmatprep.subr.mxu0 0.0
    %5123 = vmatpush1.msra.mxu0 %v5087
    %5124 = vmatprep.subr.mxu0 0.0
    %5125 = vmatpush1.msra.mxu0 %v5088
    %5126 = vmatprep.subr.mxu0 0.0
    %5127 = vmatpush1.msra.mxu0 %v5089
    %5128 = vmatprep.subr.mxu0 0.0
    %5129 = vmatpush1.msra.mxu0 %v5090
    %5130 = vmatprep.subr.mxu0 0.0
    %5131 = vmatpush1.msra.mxu0 0.0
    %5132 = vmatprep.subr.mxu0 0.0
    %5133 = vmatpush1.msra.mxu0 0.0
    %5134 = vmatprep.subr.mxu0 0.0
    %5135 = vmatpush1.msra.mxu0 0.0
    %5136 = vmatprep.subr.mxu0 0.0
    %5137 = vmatpush1.msra.mxu0 0.0
    %5138 = vmatprep.subr.mxu0 0.0
    %5139 = vmatpush1.msra.mxu0 0.0
    %5140 = vmatprep.subr.mxu0 0.0
    %5141 = vmatpush1.msra.mxu0 0.0
    %5142 = vmatprep.subr.mxu0 0.0
    %5143 = vmatpush1.msra.mxu0 0.0
    %5144 = vmatprep.subr.mxu0 0.0
    %5145 = vmatpush1.msra.mxu0 0.0
    %5146 = vmatprep.subr.mxu0 0.0
    %5147 = vmatpush1.msra.mxu0 0.0
    %5148 = vmatprep.subr.mxu0 0.0
    %5149 = vmatpush1.msra.mxu0 0.0
    %5150 = vmatprep.subr.mxu0 0.0
    %5151 = vmatpush1.msra.mxu0 0.0
    %5152 = vmatprep.subr.mxu0 0.0
    %5153 = vmatpush1.msra.mxu0 0.0
    %5154 = vmatprep.subr.mxu0 0.0
    %5155 = vmatpush1.msra.mxu0 0.0
    %5156 = vmatprep.subr.mxu0 0.0
    %5157 = vmatpush1.msra.mxu0 0.0
    %5158 = vmatprep.subr.mxu0 0.0
    %5159 = vmatpush1.msra.mxu0 0.0
    %5160 = vmatprep.subr.mxu0 0.0
    %5161 = vmatpush1.msra.mxu0 0.0
    %5162 = vmatprep.mubr.f32.mxu0 0.0
    %5163 = vmatmul.mubr.f32.gmra.mrb[0].mxu0 %v4892
    %v5164 = vpop.f32.mrb[0].mxu0
    %v5165 = vadd.f32 %v5096, %v5164
    %v5166 = vpop.f32.mrb[0].mxu0
    %5167 = vdwg.mxu0
    %v5168 = vmul.f32 %v5165, 1.442695
    %v5169 = vpow.pop %v5168
    %v5170 = vld [vmem:[%s17] sm:$0x3]
    %5172 = vset.pattern.permute.xlu0 0
    %5173 = vperm.xlu0 %5172, %v5072
    %v5174 = vpop.permute.xlu0 %5173
    %v5176 = vlaneseq
    %v5177 = vshrl.u32 %v5176, 7
    %v5178 = vsub.s32 0, %v5177
    %v5179 = vrot.slane %v5170, %v5178
    %v5180 = vmul.f32 %v5174, %v5179
    %5182 = vset.pattern.permute.xlu0 0
    %5183 = vperm.xlu0 %5182, %v5169
    %v5184 = vpop.permute.xlu0 %5183
    %v5186 = vlaneseq
    %v5187 = vshrl.u32 %v5186, 7
    %v5188 = vsub.s32 1, %v5187
    %v5189 = vrot.slane %v5170, %v5188
    %v5190 = vmul.f32 %v5184, %v5189
    %v5191 = vadd.f32 %v5180, %v5190
    %v5192 = vld [vmem:[%s18] sm:$0x1]
    %v5194 = vlaneseq
    %v5195 = vshrl.u32 %v5194, 7
    %v5196 = vsub.s32 0, %v5195
    %v5197 = vrot.slane %v5192, %v5196
    %v5199 = vadd.f32 %v5191, %v5197
    %v5200 = vmax.f32 %v5199, 0.0
    %v5201 = vld [vmem:[%s19] sm:$0xff]
    %v5202 = vld [vmem:[%s19 + $0x8] sm:$0xff]
    %v5203 = vld [vmem:[#allocation6] sm:$0x1]
    %v5205 = vlaneseq
    %v5206 = vshrl.u32 %v5205, 7
    %v5207 = vsub.s32 0, %v5206
    %v5208 = vrot.slane %v5203, %v5207
    %vm5210 = vcmask 130048
    %v5212 = vsel %vm5210, %v5200, 0
    %5214 = vmatprep.subr.mxu0 0.0
    %5215 = vmatpush1.msra.mxu0 %v5201
    %5216 = vmatprep.subr.mxu0 0.0
    %5217 = vmatpush1.msra.mxu0 %v5202
    %5218 = vmatprep.subr.mxu0 0.0
    %5219 = vmatpush1.msra.mxu0 0.0
    %5220 = vmatprep.subr.mxu0 0.0
    %5221 = vmatpush1.msra.mxu0 0.0
    %5222 = vmatprep.subr.mxu0 0.0
    %5223 = vmatpush1.msra.mxu0 0.0
    %5224 = vmatprep.subr.mxu0 0.0
    %5225 = vmatpush1.msra.mxu0 0.0
    %5226 = vmatprep.subr.mxu0 0.0
    %5227 = vmatpush1.msra.mxu0 0.0
    %5228 = vmatprep.subr.mxu0 0.0
    %5229 = vmatpush1.msra.mxu0 0.0
    %5230 = vmatprep.subr.mxu0 0.0
    %5231 = vmatpush1.msra.mxu0 0.0
    %5232 = vmatprep.subr.mxu0 0.0
    %5233 = vmatpush1.msra.mxu0 0.0
    %5234 = vmatprep.subr.mxu0 0.0
    %5235 = vmatpush1.msra.mxu0 0.0
    %5236 = vmatprep.subr.mxu0 0.0
    %5237 = vmatpush1.msra.mxu0 0.0
    %5238 = vmatprep.subr.mxu0 0.0
    %5239 = vmatpush1.msra.mxu0 0.0
    %5240 = vmatprep.subr.mxu0 0.0
    %5241 = vmatpush1.msra.mxu0 0.0
    %5242 = vmatprep.subr.mxu0 0.0
    %5243 = vmatpush1.msra.mxu0 0.0
    %5244 = vmatprep.subr.mxu0 0.0
    %5245 = vmatpush1.msra.mxu0 0.0
    %5246 = vmatprep.subr.mxu0 0.0
    %5247 = vmatpush1.msra.mxu0 0.0
    %5248 = vmatprep.subr.mxu0 0.0
    %5249 = vmatpush1.msra.mxu0 0.0
    %5250 = vmatprep.subr.mxu0 0.0
    %5251 = vmatpush1.msra.mxu0 0.0
    %5252 = vmatprep.subr.mxu0 0.0
    %5253 = vmatpush1.msra.mxu0 0.0
    %5254 = vmatprep.subr.mxu0 0.0
    %5255 = vmatpush1.msra.mxu0 0.0
    %5256 = vmatprep.subr.mxu0 0.0
    %5257 = vmatpush1.msra.mxu0 0.0
    %5258 = vmatprep.subr.mxu0 0.0
    %5259 = vmatpush1.msra.mxu0 0.0
    %5260 = vmatprep.subr.mxu0 0.0
    %5261 = vmatpush1.msra.mxu0 0.0
    %5262 = vmatprep.subr.mxu0 0.0
    %5263 = vmatpush1.msra.mxu0 0.0
    %5264 = vmatprep.subr.mxu0 0.0
    %5265 = vmatpush1.msra.mxu0 0.0
    %5266 = vmatprep.subr.mxu0 0.0
    %5267 = vmatpush1.msra.mxu0 0.0
    %5268 = vmatprep.subr.mxu0 0.0
    %5269 = vmatpush1.msra.mxu0 0.0
    %5270 = vmatprep.subr.mxu0 0.0
    %5271 = vmatpush1.msra.mxu0 0.0
    %5272 = vmatprep.subr.mxu0 0.0
    %5273 = vmatpush1.msra.mxu0 0.0
    %5274 = vmatprep.subr.mxu0 0.0
    %5275 = vmatpush1.msra.mxu0 0.0
    %5276 = vmatprep.subr.mxu0 0.0
    %5277 = vmatpush1.msra.mxu0 0.0
    %5278 = vmatprep.mubr.f32.mxu0 0.0
    %5279 = vmatmul.mubr.f32.gmra.mrb[0].mxu0 %v5212
    %v5280 = vpop.f32.mrb[0].mxu0
    %v5281 = vadd.f32 %v5208, %v5280
    %v5282 = vpop.f32.mrb[0].mxu0
    %5283 = vdwg.mxu0
    %vm5284 = vcmask 1024
    %5285 = vst.msk [vmem:[%s21] sm:$0x3] %vm5284, %v5281
    // Predicated region
    $region106: #{tpu_custom_call.1} parent=1 // pred_check
      _
    $region107: #{tpu_custom_call.1} parent=1 // pred_check_branch
      %5287 = sbr.rel (0) target = $region109
    $region108: #{tpu_custom_call.1} parent=1 // pred_region
      _
    $region109: #{tpu_custom_call.1} parent=1 // pred_fallthru
      _
    // Predicated region
    $region110: #{tpu_custom_call.1} parent=1 // pred_check
      _
    $region111: #{tpu_custom_call.1} parent=1 // pred_check_branch
      %5289 = sbr.rel (0) target = $region113
    $region112: #{tpu_custom_call.1} parent=1 // pred_region
      _
    $region113: #{tpu_custom_call.1} parent=1 // pred_fallthru
      _
    %5290 = vsyncpa [#allocation8], 1
    %5291 = vsyncpa [#allocation10], 1
    %5292 = vsyncpa [#allocation13], 1

</llo_original>
